<compile_context>
chip_gen: v7x
topology: tpu7x:2x2x1
jax: 0.10.0
libtpu: 0.0.40
codegen_flags: <defaults>
</compile_context>

<pallas_src>
import numpy as np
import jax
import jax.numpy as jnp
from jax import lax
from jax.experimental import pallas as pl
from jax.experimental.pallas import tpu as pltpu


# Static network dimensions (LeNet on 32x32x3 input).
H0, W0, C0 = 32, 32, 3          # input
K = 5                           # conv kernel size
H1, W1, C1 = 28, 28, 6          # conv1 output
H1P, W1P = 14, 14               # after pool1
H2, W2, C2 = 10, 10, 16         # conv2 output
H2P, W2P = 5, 5                 # after pool2
N_FC1, N_FC2, N_FC3 = 120, 84, 10

LANES = 128                     # lane-padded feature width of every activation
NCONV = 2 * LANES               # Toeplitz N (width-pool parity halves at 0/128)
RPI2 = 16                       # rows per image in the pool1 / conv2 scratches
TB = 4                          # images per grid step (raise for throughput)

_WKEYS = ("w1", "b1", "w2", "b2", "wf1", "bf1", "wf2", "bf2", "wf3", "bf3")


# ----------------------------------------------------------------------------
# Fused kernel: conv1+ReLU+pool, conv2+ReLU+pool, FC1-3 for a block of TB images.
# Row layouts: x/c1 use 32 rows per image, a1/c2 use 16 rows per image; valid
# per-image rows are 0..27 / 0..13 / 0..9 / 0..4 respectively (the banded conv
# structure guarantees padded/garbage rows never feed a valid output row).
# ----------------------------------------------------------------------------
def _net_kernel(x_ref, w1_ref, b1_ref, w2_ref, b2_ref,
                wf1_ref, bf1_ref, wf2_ref, bf2_ref, wf3_ref, bf3_ref,
                o_ref, c1_ref, a1_ref, c2_ref):
    f32, bf16 = jnp.float32, jnp.bfloat16
    r1 = x_ref.shape[0]                       # TB * 32
    r2 = a1_ref.shape[0]                      # TB * 16
    tb = o_ref.shape[1]                       # TB
    m1 = r1 - (K - 1)                         # conv1 batched M
    m2 = r2 - (K - 1)                         # conv2 batched M

    # ---- conv1 + bias + ReLU: 5 banded matmuls, M = TB*32-4, K = 128, N = 256
    acc = jnp.dot(x_ref[pl.ds(0, m1), :], w1_ref[0], preferred_element_type=f32)
    for kh in range(1, K):
        acc += jnp.dot(x_ref[pl.ds(kh, m1), :], w1_ref[kh],
                       preferred_element_type=f32)
    y = jnp.maximum(acc + b1_ref[...], 0.0)
    # width pool: max of the two lane-aligned parity halves
    c1_ref[pl.ds(0, m1), :] = jnp.maximum(y[:, :LANES], y[:, LANES:])
    c1_ref[pl.ds(m1, K - 1), :] = jnp.zeros((K - 1, LANES), f32)   # pad rows
    # height pool: max of even / odd rows via sublane-strided ref loads
    a1_ref[...] = jnp.maximum(c1_ref[pl.ds(0, r2, stride=2), :],
                              c1_ref[pl.ds(1, r2, stride=2), :]).astype(bf16)

    # ---- conv2 + bias + ReLU + width pool: M = TB*16-4, K = 128, N = 256 ----
    acc = jnp.dot(a1_ref[pl.ds(0, m2), :], w2_ref[0], preferred_element_type=f32)
    for kh in range(1, K):
        acc += jnp.dot(a1_ref[pl.ds(kh, m2), :], w2_ref[kh],
                       preferred_element_type=f32)
    y = jnp.maximum(acc + b2_ref[...], 0.0)
    c2_ref[pl.ds(0, m2), :] = jnp.maximum(y[:, :LANES], y[:, LANES:])
    c2_ref[pl.ds(m2, K - 1), :] = jnp.zeros((K - 1, LANES), f32)

    # ---- height pool 2 fused with FC1: each pooled row h is one FC1 band ----
    accf = None
    for h in range(H2P):
        band = jnp.maximum(c2_ref[pl.ds(2 * h, tb, stride=RPI2), :],
                           c2_ref[pl.ds(2 * h + 1, tb, stride=RPI2), :])
        prod = jnp.dot(band.astype(bf16), wf1_ref[h], preferred_element_type=f32)
        accf = prod if accf is None else accf + prod
    z = jnp.maximum(accf + bf1_ref[...], 0.0)                        # (TB, 120)
    z = jnp.maximum(jnp.dot(z.astype(bf16), wf2_ref[...],
                            preferred_element_type=f32) + bf2_ref[...], 0.0)
    z = jnp.dot(z.astype(bf16), wf3_ref[...],
                preferred_element_type=f32) + bf3_ref[...]           # (TB, 128)
    o_ref[0] = z


def _const_spec(shape):
    """Whole-array block, constant index -> stays VMEM-resident across steps."""
    zeros = (0,) * len(shape)
    return pl.BlockSpec(shape, lambda i: zeros)


def net_forward(x_nchw, kp, tb=TB):
    B = x_nchw.shape[0]
    bp = ((B + tb - 1) // tb) * tb
    # NCHW -> NHWC -> (B, 32, 96); pad lanes to 128 and batch to a multiple of
    # TB; flatten batch into the sublane/M dimension.  XLA glue only.
    x = jnp.transpose(x_nchw, (0, 2, 3, 1)).reshape(B, H0, W0 * C0)
    x = jnp.pad(x, ((0, bp - B), (0, 0), (0, LANES - W0 * C0)))
    x = x.reshape(bp * H0, LANES).astype(jnp.bfloat16)

    out = pl.pallas_call(
        _net_kernel,
        out_shape=jax.ShapeDtypeStruct((bp // tb, tb, LANES), jnp.float32),
        grid=(bp // tb,),
        in_specs=[pl.BlockSpec((tb * H0, LANES), lambda i: (i, 0))]
                 + [_const_spec(kp[k].shape) for k in _WKEYS],
        out_specs=pl.BlockSpec((1, tb, LANES), lambda i: (i, 0, 0)),
        scratch_shapes=[
            pltpu.VMEM((tb * H0, LANES), jnp.float32),     # conv1 out (pre h-pool)
            pltpu.VMEM((tb * RPI2, LANES), jnp.bfloat16),  # pool1 out / conv2 in
            pltpu.VMEM((tb * RPI2, LANES), jnp.float32),   # conv2 out (pre h-pool)
        ],
        compiler_params=pltpu.CompilerParams(
            dimension_semantics=("parallel",)),
    )(x, *[kp[k] for k in _WKEYS])
    return out.reshape(bp, LANES)[:B, :N_FC3]


# ----------------------------------------------------------------------------
# One-time host-side weight packing (outside jit).
# ----------------------------------------------------------------------------
def _toeplitz_conv_weights(w, b, w_in, in_rows):
    """Lower a KxK 'VALID' conv to K banded matrices mapping (w*C_in) lane
    columns -> (width-parity half, pooled-w, C_out) columns padded to NCONV."""
    w = np.asarray(w, np.float32)
    bvec = np.asarray(b, np.float32)
    c_out, c_in, kk, _ = w.shape
    w_out = w_in - kk + 1
    wp = w_out // 2
    T = np.zeros((kk, in_rows, NCONV), np.float32)
    brow = np.zeros((1, NCONV), np.float32)
    for kh in range(kk):
        for kw in range(kk):
            wkk = w[:, :, kh, kw].T                         # (C_in, C_out)
            for ow in range(w_out):
                parity, owp = ow % 2, ow // 2
                r0 = (ow + kw) * c_in
                c0 = parity * LANES + owp * c_out
                T[kh, r0:r0 + c_in, c0:c0 + c_out] = wkk
    for parity in range(2):
        for owp in range(wp):
            c0 = parity * LANES + owp * c_out
            brow[0, c0:c0 + c_out] = bvec
    return jnp.asarray(T, jnp.bfloat16), jnp.asarray(brow)


def prepare_kernel_params(p):
    kp = {}
    kp["w1"], kp["b1"] = _toeplitz_conv_weights(p["conv1_w"], p["conv1_b"],
                                                w_in=W0, in_rows=LANES)
    kp["w2"], kp["b2"] = _toeplitz_conv_weights(p["conv2_w"], p["conv2_b"],
                                                w_in=H1P, in_rows=LANES)
    # fc1 columns are torch order c*25 + h*5 + w; repack to [h, w*16 + c, n].
    fc1 = np.asarray(p["fc1_w"], np.float32).reshape(N_FC1, C2, H2P, W2P)
    wf1 = np.zeros((H2P, LANES, N_FC1), np.float32)
    wf1[:, :W2P * C2, :] = fc1.transpose(2, 3, 1, 0).reshape(H2P, W2P * C2, N_FC1)
    kp["wf1"] = jnp.asarray(wf1, jnp.bfloat16)
    kp["bf1"] = jnp.asarray(np.asarray(p["fc1_b"], np.float32)[None, :])
    kp["wf2"] = jnp.asarray(np.asarray(p["fc2_w"], np.float32).T, jnp.bfloat16)
    kp["bf2"] = jnp.asarray(np.asarray(p["fc2_b"], np.float32)[None, :])
    # fc3 padded to 128 lane-dense output columns.
    wf3 = np.zeros((N_FC2, LANES), np.float32)
    wf3[:, :N_FC3] = np.asarray(p["fc3_w"], np.float32).T
    kp["wf3"] = jnp.asarray(wf3, jnp.bfloat16)
    bf3 = np.zeros((1, LANES), np.float32)
    bf3[0, :N_FC3] = np.asarray(p["fc3_b"], np.float32)
    kp["bf3"] = jnp.asarray(bf3)
    return kp


# ----------------------------------------------------------------------------
# Parameter init (torch-style U(-1/sqrt(fan_in), +1/sqrt(fan_in))).
# ----------------------------------------------------------------------------
def init_params(key):
    def uniform(k, shape, fan_in):
        bound = 1.0 / jnp.sqrt(jnp.float32(fan_in))
        return jax.random.uniform(k, shape, jnp.float32, -bound, bound)

    ks = jax.random.split(key, 10)
    p = {}
    p["conv1_w"] = uniform(ks[0], (6, 3, 5, 5), 3 * 5 * 5)
    p["conv1_b"] = uniform(ks[1], (6,), 3 * 5 * 5)
    p["conv2_w"] = uniform(ks[2], (16, 6, 5, 5), 6 * 5 * 5)
    p["conv2_b"] = uniform(ks[3], (16,), 6 * 5 * 5)
    p["fc1_w"] = uniform(ks[4], (120, 400), 400)
    p["fc1_b"] = uniform(ks[5], (120,), 400)
    p["fc2_w"] = uniform(ks[6], (84, 120), 120)
    p["fc2_b"] = uniform(ks[7], (84,), 120)
    p["fc3_w"] = uniform(ks[8], (10, 84), 84)
    p["fc3_b"] = uniform(ks[9], (10,), 84)
    return p


# ----------------------------------------------------------------------------
# Pure-JAX reference for correctness check.
# ----------------------------------------------------------------------------
def net_forward_ref(x, p):
    B = x.shape[0]
    dn = ("NCHW", "OIHW", "NCHW")

    def conv(z, w, b):
        z = lax.conv_general_dilated(z, w, (1, 1), "VALID", dimension_numbers=dn)
        return jnp.maximum(z + b[None, :, None, None], 0.0)

    def pool(z):
        return lax.reduce_window(z, -jnp.inf, lax.max, (1, 1, 2, 2),
                                 (1, 1, 2, 2), "VALID")

    z = pool(conv(x, p["conv1_w"], p["conv1_b"]))
    z = pool(conv(z, p["conv2_w"], p["conv2_b"]))
    z = z.reshape(B, -1)
    z = jnp.maximum(z @ p["fc1_w"].T + p["fc1_b"], 0.0)
    z = jnp.maximum(z @ p["fc2_w"].T + p["fc2_b"], 0.0)
    z = z @ p["fc3_w"].T + p["fc3_b"]
    return z


if __name__ == "__main__":
    key = jax.random.PRNGKey(0)
    k_x, k_p = jax.random.split(key)
    x = jax.random.normal(k_x, (8, 3, 32, 32), dtype=jnp.float32)  # grid of 2 steps
    params = init_params(k_p)
    kparams = prepare_kernel_params(params)            # packed once, host-side

    fwd = jax.jit(net_forward)
    out = jax.block_until_ready(fwd(x, kparams))

    ref = jax.block_until_ready(net_forward_ref(x, params))
    assert out.shape == (8, N_FC3), out.shape
    # bf16 MXU operands (f32 accumulate) -> ~1e-3 worst-case deviation vs f32 ref.
    assert jnp.allclose(out, ref, rtol=1e-2, atol=1e-2), \
        float(jnp.max(jnp.abs(out - ref)))

    print("KERNEL_OK")
</pallas_src>

<mosaic_0001>
module attributes {stable_mosaic.version = 11 : i64} {
  func.func @_net_kernel(%arg0: i32, %arg1: memref<128x128xbf16, #tpu.memory_space<vmem>>, %arg2: memref<5x128x256xbf16, #tpu.memory_space<vmem>>, %arg3: memref<1x256xf32, #tpu.memory_space<vmem>>, %arg4: memref<5x128x256xbf16, #tpu.memory_space<vmem>>, %arg5: memref<1x256xf32, #tpu.memory_space<vmem>>, %arg6: memref<5x128x120xbf16, #tpu.memory_space<vmem>>, %arg7: memref<1x120xf32, #tpu.memory_space<vmem>>, %arg8: memref<120x84xbf16, #tpu.memory_space<vmem>>, %arg9: memref<1x84xf32, #tpu.memory_space<vmem>>, %arg10: memref<84x128xbf16, #tpu.memory_space<vmem>>, %arg11: memref<1x128xf32, #tpu.memory_space<vmem>>, %arg12: memref<1x4x128xf32, #tpu.memory_space<vmem>>, %arg13: memref<128x128xf32, #tpu.memory_space<vmem>>, %arg14: memref<64x128xbf16, #tpu.memory_space<vmem>>, %arg15: memref<64x128xf32, #tpu.memory_space<vmem>>) attributes {dimension_semantics = [#tpu.dimension_semantics<parallel>], iteration_bounds = array<i64: 2>, scalar_prefetch = 0 : i64, scratch_operands = 3 : i64, tpu.core_type = #tpu.core_type<tc>, window_params = [{transform_indices = @transform_0, window_bounds = array<i64: 128, 128>}, {pipeline_mode = #tpu.pipeline_mode<synchronous>, transform_indices = @transform_1, window_bounds = array<i64: 5, 128, 256>}, {pipeline_mode = #tpu.pipeline_mode<synchronous>, transform_indices = @transform_2, window_bounds = array<i64: 1, 256>}, {pipeline_mode = #tpu.pipeline_mode<synchronous>, transform_indices = @transform_3, window_bounds = array<i64: 5, 128, 256>}, {pipeline_mode = #tpu.pipeline_mode<synchronous>, transform_indices = @transform_4, window_bounds = array<i64: 1, 256>}, {pipeline_mode = #tpu.pipeline_mode<synchronous>, transform_indices = @transform_5, window_bounds = array<i64: 5, 128, 120>}, {pipeline_mode = #tpu.pipeline_mode<synchronous>, transform_indices = @transform_6, window_bounds = array<i64: 1, 120>}, {pipeline_mode = #tpu.pipeline_mode<synchronous>, transform_indices = @transform_7, window_bounds = array<i64: 120, 84>}, {pipeline_mode = #tpu.pipeline_mode<synchronous>, transform_indices = @transform_8, window_bounds = array<i64: 1, 84>}, {pipeline_mode = #tpu.pipeline_mode<synchronous>, transform_indices = @transform_9, window_bounds = array<i64: 84, 128>}, {pipeline_mode = #tpu.pipeline_mode<synchronous>, transform_indices = @transform_10, window_bounds = array<i64: 1, 128>}, {transform_indices = @transform_11, window_bounds = array<i64: 1, 4, 128>}]} {
    %c0 = arith.constant 0 : index
    %c0_0 = arith.constant 0 : index
    %0 = vector.load %arg1[%c0, %c0_0] : memref<128x128xbf16, #tpu.memory_space<vmem>>, vector<124x128xbf16>
    %c0_1 = arith.constant 0 : index
    %c0_2 = arith.constant 0 : index
    %c0_3 = arith.constant 0 : index
    %1 = vector.load %arg2[%c0_1, %c0_2, %c0_3] : memref<5x128x256xbf16, #tpu.memory_space<vmem>>, vector<1x128x256xbf16>
    %2 = vector.shape_cast %1 : vector<1x128x256xbf16> to vector<128x256xbf16>
    %cst = arith.constant dense<0.000000e+00> : vector<124x256xf32>
    %3 = tpu.matmul %0, %2, %cst {dimension_numbers = #tpu.dot_dimension_numbers<[1], [0], [0], [1], [0, 0, 1, 1], [], []>} : vector<124x128xbf16>, vector<128x256xbf16>, vector<124x256xf32> -> vector<124x256xf32>
    %c1 = arith.constant 1 : index
    %c0_4 = arith.constant 0 : index
    %4 = vector.load %arg1[%c1, %c0_4] : memref<128x128xbf16, #tpu.memory_space<vmem>>, vector<124x128xbf16>
    %c1_5 = arith.constant 1 : index
    %c0_6 = arith.constant 0 : index
    %c0_7 = arith.constant 0 : index
    %5 = vector.load %arg2[%c1_5, %c0_6, %c0_7] : memref<5x128x256xbf16, #tpu.memory_space<vmem>>, vector<1x128x256xbf16>
    %6 = vector.shape_cast %5 : vector<1x128x256xbf16> to vector<128x256xbf16>
    %cst_8 = arith.constant dense<0.000000e+00> : vector<124x256xf32>
    %7 = tpu.matmul %4, %6, %cst_8 {dimension_numbers = #tpu.dot_dimension_numbers<[1], [0], [0], [1], [0, 0, 1, 1], [], []>} : vector<124x128xbf16>, vector<128x256xbf16>, vector<124x256xf32> -> vector<124x256xf32>
    %8 = arith.addf %3, %7 : vector<124x256xf32>
    %c2 = arith.constant 2 : index
    %c0_9 = arith.constant 0 : index
    %9 = vector.load %arg1[%c2, %c0_9] : memref<128x128xbf16, #tpu.memory_space<vmem>>, vector<124x128xbf16>
    %c2_10 = arith.constant 2 : index
    %c0_11 = arith.constant 0 : index
    %c0_12 = arith.constant 0 : index
    %10 = vector.load %arg2[%c2_10, %c0_11, %c0_12] : memref<5x128x256xbf16, #tpu.memory_space<vmem>>, vector<1x128x256xbf16>
    %11 = vector.shape_cast %10 : vector<1x128x256xbf16> to vector<128x256xbf16>
    %cst_13 = arith.constant dense<0.000000e+00> : vector<124x256xf32>
    %12 = tpu.matmul %9, %11, %cst_13 {dimension_numbers = #tpu.dot_dimension_numbers<[1], [0], [0], [1], [0, 0, 1, 1], [], []>} : vector<124x128xbf16>, vector<128x256xbf16>, vector<124x256xf32> -> vector<124x256xf32>
    %13 = arith.addf %8, %12 : vector<124x256xf32>
    %c3 = arith.constant 3 : index
    %c0_14 = arith.constant 0 : index
    %14 = vector.load %arg1[%c3, %c0_14] : memref<128x128xbf16, #tpu.memory_space<vmem>>, vector<124x128xbf16>
    %c3_15 = arith.constant 3 : index
    %c0_16 = arith.constant 0 : index
    %c0_17 = arith.constant 0 : index
    %15 = vector.load %arg2[%c3_15, %c0_16, %c0_17] : memref<5x128x256xbf16, #tpu.memory_space<vmem>>, vector<1x128x256xbf16>
    %16 = vector.shape_cast %15 : vector<1x128x256xbf16> to vector<128x256xbf16>
    %cst_18 = arith.constant dense<0.000000e+00> : vector<124x256xf32>
    %17 = tpu.matmul %14, %16, %cst_18 {dimension_numbers = #tpu.dot_dimension_numbers<[1], [0], [0], [1], [0, 0, 1, 1], [], []>} : vector<124x128xbf16>, vector<128x256xbf16>, vector<124x256xf32> -> vector<124x256xf32>
    %18 = arith.addf %13, %17 : vector<124x256xf32>
    %c4 = arith.constant 4 : index
    %c0_19 = arith.constant 0 : index
    %19 = vector.load %arg1[%c4, %c0_19] : memref<128x128xbf16, #tpu.memory_space<vmem>>, vector<124x128xbf16>
    %c4_20 = arith.constant 4 : index
    %c0_21 = arith.constant 0 : index
    %c0_22 = arith.constant 0 : index
    %20 = vector.load %arg2[%c4_20, %c0_21, %c0_22] : memref<5x128x256xbf16, #tpu.memory_space<vmem>>, vector<1x128x256xbf16>
    %21 = vector.shape_cast %20 : vector<1x128x256xbf16> to vector<128x256xbf16>
    %cst_23 = arith.constant dense<0.000000e+00> : vector<124x256xf32>
    %22 = tpu.matmul %19, %21, %cst_23 {dimension_numbers = #tpu.dot_dimension_numbers<[1], [0], [0], [1], [0, 0, 1, 1], [], []>} : vector<124x128xbf16>, vector<128x256xbf16>, vector<124x256xf32> -> vector<124x256xf32>
    %23 = arith.addf %18, %22 : vector<124x256xf32>
    %c0_24 = arith.constant 0 : index
    %c0_25 = arith.constant 0 : index
    %24 = vector.load %arg3[%c0_24, %c0_25] : memref<1x256xf32, #tpu.memory_space<vmem>>, vector<1x256xf32>
    %25 = vector.broadcast %24 : vector<1x256xf32> to vector<124x256xf32>
    %26 = arith.addf %23, %25 : vector<124x256xf32>
    %cst_26 = arith.constant 0.000000e+00 : f32
    %27 = vector.broadcast %cst_26 : f32 to vector<124x256xf32>
    %28 = arith.maximumf %26, %27 : vector<124x256xf32>
    %29 = vector.extract_strided_slice %28 {offsets = [0, 0], sizes = [124, 128], strides = [1, 1]} : vector<124x256xf32> to vector<124x128xf32>
    %30 = vector.extract_strided_slice %28 {offsets = [0, 128], sizes = [124, 128], strides = [1, 1]} : vector<124x256xf32> to vector<124x128xf32>
    %31 = arith.maximumf %29, %30 : vector<124x128xf32>
    %c0_27 = arith.constant 0 : index
    %c0_28 = arith.constant 0 : index
    %32 = vector.load %arg13[%c0_27, %c0_28] : memref<128x128xf32, #tpu.memory_space<vmem>>, vector<124x128xf32>
    tpu.vector_store %arg13[%c0_27, %c0_28], %31 {strides = array<i32>} : memref<128x128xf32, #tpu.memory_space<vmem>>, vector<124x128xf32>,
    %cst_29 = arith.constant 0.000000e+00 : f32
    %33 = vector.broadcast %cst_29 : f32 to vector<4x128xf32>
    %c124 = arith.constant 124 : index
    %c0_30 = arith.constant 0 : index
    %34 = vector.load %arg13[%c124, %c0_30] : memref<128x128xf32, #tpu.memory_space<vmem>>, vector<4x128xf32>
    tpu.vector_store %arg13[%c124, %c0_30], %33 {strides = array<i32>} : memref<128x128xf32, #tpu.memory_space<vmem>>, vector<4x128xf32>,
    %c0_31 = arith.constant 0 : index
    %c0_32 = arith.constant 0 : index
    %35 = tpu.strided_load %arg13[%c0_31, %c0_32] {strides = array<i32: 2, 1>} : memref<128x128xf32, #tpu.memory_space<vmem>>, vector<64x128xf32>
    %c1_33 = arith.constant 1 : index
    %c0_34 = arith.constant 0 : index
    %36 = tpu.strided_load %arg13[%c1_33, %c0_34] {strides = array<i32: 2, 1>} : memref<128x128xf32, #tpu.memory_space<vmem>>, vector<64x128xf32>
    %37 = arith.maximumf %35, %36 : vector<64x128xf32>
    %38 = arith.truncf %37 : vector<64x128xf32> to vector<64x128xbf16>
    %c0_35 = arith.constant 0 : index
    %c0_36 = arith.constant 0 : index
    %39 = vector.load %arg14[%c0_35, %c0_36] : memref<64x128xbf16, #tpu.memory_space<vmem>>, vector<64x128xbf16>
    tpu.vector_store %arg14[%c0_35, %c0_36], %38 {strides = array<i32>} : memref<64x128xbf16, #tpu.memory_space<vmem>>, vector<64x128xbf16>,
    %c0_37 = arith.constant 0 : index
    %c0_38 = arith.constant 0 : index
    %40 = vector.load %arg14[%c0_37, %c0_38] : memref<64x128xbf16, #tpu.memory_space<vmem>>, vector<60x128xbf16>
    %c0_39 = arith.constant 0 : index
    %c0_40 = arith.constant 0 : index
    %c0_41 = arith.constant 0 : index
    %41 = vector.load %arg4[%c0_39, %c0_40, %c0_41] : memref<5x128x256xbf16, #tpu.memory_space<vmem>>, vector<1x128x256xbf16>
    %42 = vector.shape_cast %41 : vector<1x128x256xbf16> to vector<128x256xbf16>
    %cst_42 = arith.constant dense<0.000000e+00> : vector<60x256xf32>
    %43 = tpu.matmul %40, %42, %cst_42 {dimension_numbers = #tpu.dot_dimension_numbers<[1], [0], [0], [1], [0, 0, 1, 1], [], []>} : vector<60x128xbf16>, vector<128x256xbf16>, vector<60x256xf32> -> vector<60x256xf32>
    %c1_43 = arith.constant 1 : index
    %c0_44 = arith.constant 0 : index
    %44 = vector.load %arg14[%c1_43, %c0_44] : memref<64x128xbf16, #tpu.memory_space<vmem>>, vector<60x128xbf16>
    %c1_45 = arith.constant 1 : index
    %c0_46 = arith.constant 0 : index
    %c0_47 = arith.constant 0 : index
    %45 = vector.load %arg4[%c1_45, %c0_46, %c0_47] : memref<5x128x256xbf16, #tpu.memory_space<vmem>>, vector<1x128x256xbf16>
    %46 = vector.shape_cast %45 : vector<1x128x256xbf16> to vector<128x256xbf16>
    %cst_48 = arith.constant dense<0.000000e+00> : vector<60x256xf32>
    %47 = tpu.matmul %44, %46, %cst_48 {dimension_numbers = #tpu.dot_dimension_numbers<[1], [0], [0], [1], [0, 0, 1, 1], [], []>} : vector<60x128xbf16>, vector<128x256xbf16>, vector<60x256xf32> -> vector<60x256xf32>
    %48 = arith.addf %43, %47 : vector<60x256xf32>
    %c2_49 = arith.constant 2 : index
    %c0_50 = arith.constant 0 : index
    %49 = vector.load %arg14[%c2_49, %c0_50] : memref<64x128xbf16, #tpu.memory_space<vmem>>, vector<60x128xbf16>
    %c2_51 = arith.constant 2 : index
    %c0_52 = arith.constant 0 : index
    %c0_53 = arith.constant 0 : index
    %50 = vector.load %arg4[%c2_51, %c0_52, %c0_53] : memref<5x128x256xbf16, #tpu.memory_space<vmem>>, vector<1x128x256xbf16>
    %51 = vector.shape_cast %50 : vector<1x128x256xbf16> to vector<128x256xbf16>
    %cst_54 = arith.constant dense<0.000000e+00> : vector<60x256xf32>
    %52 = tpu.matmul %49, %51, %cst_54 {dimension_numbers = #tpu.dot_dimension_numbers<[1], [0], [0], [1], [0, 0, 1, 1], [], []>} : vector<60x128xbf16>, vector<128x256xbf16>, vector<60x256xf32> -> vector<60x256xf32>
    %53 = arith.addf %48, %52 : vector<60x256xf32>
    %c3_55 = arith.constant 3 : index
    %c0_56 = arith.constant 0 : index
    %54 = vector.load %arg14[%c3_55, %c0_56] : memref<64x128xbf16, #tpu.memory_space<vmem>>, vector<60x128xbf16>
    %c3_57 = arith.constant 3 : index
    %c0_58 = arith.constant 0 : index
    %c0_59 = arith.constant 0 : index
    %55 = vector.load %arg4[%c3_57, %c0_58, %c0_59] : memref<5x128x256xbf16, #tpu.memory_space<vmem>>, vector<1x128x256xbf16>
    %56 = vector.shape_cast %55 : vector<1x128x256xbf16> to vector<128x256xbf16>
    %cst_60 = arith.constant dense<0.000000e+00> : vector<60x256xf32>
    %57 = tpu.matmul %54, %56, %cst_60 {dimension_numbers = #tpu.dot_dimension_numbers<[1], [0], [0], [1], [0, 0, 1, 1], [], []>} : vector<60x128xbf16>, vector<128x256xbf16>, vector<60x256xf32> -> vector<60x256xf32>
    %58 = arith.addf %53, %57 : vector<60x256xf32>
    %c4_61 = arith.constant 4 : index
    %c0_62 = arith.constant 0 : index
    %59 = vector.load %arg14[%c4_61, %c0_62] : memref<64x128xbf16, #tpu.memory_space<vmem>>, vector<60x128xbf16>
    %c4_63 = arith.constant 4 : index
    %c0_64 = arith.constant 0 : index
    %c0_65 = arith.constant 0 : index
    %60 = vector.load %arg4[%c4_63, %c0_64, %c0_65] : memref<5x128x256xbf16, #tpu.memory_space<vmem>>, vector<1x128x256xbf16>
    %61 = vector.shape_cast %60 : vector<1x128x256xbf16> to vector<128x256xbf16>
    %cst_66 = arith.constant dense<0.000000e+00> : vector<60x256xf32>
    %62 = tpu.matmul %59, %61, %cst_66 {dimension_numbers = #tpu.dot_dimension_numbers<[1], [0], [0], [1], [0, 0, 1, 1], [], []>} : vector<60x128xbf16>, vector<128x256xbf16>, vector<60x256xf32> -> vector<60x256xf32>
    %63 = arith.addf %58, %62 : vector<60x256xf32>
    %c0_67 = arith.constant 0 : index
    %c0_68 = arith.constant 0 : index
    %64 = vector.load %arg5[%c0_67, %c0_68] : memref<1x256xf32, #tpu.memory_space<vmem>>, vector<1x256xf32>
    %65 = vector.broadcast %64 : vector<1x256xf32> to vector<60x256xf32>
    %66 = arith.addf %63, %65 : vector<60x256xf32>
    %cst_69 = arith.constant 0.000000e+00 : f32
    %67 = vector.broadcast %cst_69 : f32 to vector<60x256xf32>
    %68 = arith.maximumf %66, %67 : vector<60x256xf32>
    %69 = vector.extract_strided_slice %68 {offsets = [0, 0], sizes = [60, 128], strides = [1, 1]} : vector<60x256xf32> to vector<60x128xf32>
    %70 = vector.extract_strided_slice %68 {offsets = [0, 128], sizes = [60, 128], strides = [1, 1]} : vector<60x256xf32> to vector<60x128xf32>
    %71 = arith.maximumf %69, %70 : vector<60x128xf32>
    %c0_70 = arith.constant 0 : index
    %c0_71 = arith.constant 0 : index
    %72 = vector.load %arg15[%c0_70, %c0_71] : memref<64x128xf32, #tpu.memory_space<vmem>>, vector<60x128xf32>
    tpu.vector_store %arg15[%c0_70, %c0_71], %71 {strides = array<i32>} : memref<64x128xf32, #tpu.memory_space<vmem>>, vector<60x128xf32>,
    %cst_72 = arith.constant 0.000000e+00 : f32
    %73 = vector.broadcast %cst_72 : f32 to vector<4x128xf32>
    %c60 = arith.constant 60 : index
    %c0_73 = arith.constant 0 : index
    %74 = vector.load %arg15[%c60, %c0_73] : memref<64x128xf32, #tpu.memory_space<vmem>>, vector<4x128xf32>
    tpu.vector_store %arg15[%c60, %c0_73], %73 {strides = array<i32>} : memref<64x128xf32, #tpu.memory_space<vmem>>, vector<4x128xf32>,
    %c0_74 = arith.constant 0 : index
    %c0_75 = arith.constant 0 : index
    %75 = tpu.strided_load %arg15[%c0_74, %c0_75] {strides = array<i32: 16, 1>} : memref<64x128xf32, #tpu.memory_space<vmem>>, vector<4x128xf32>
    %c1_76 = arith.constant 1 : index
    %c0_77 = arith.constant 0 : index
    %76 = tpu.strided_load %arg15[%c1_76, %c0_77] {strides = array<i32: 16, 1>} : memref<64x128xf32, #tpu.memory_space<vmem>>, vector<4x128xf32>
    %77 = arith.maximumf %75, %76 : vector<4x128xf32>
    %78 = arith.truncf %77 : vector<4x128xf32> to vector<4x128xbf16>
    %c0_78 = arith.constant 0 : index
    %c0_79 = arith.constant 0 : index
    %c0_80 = arith.constant 0 : index
    %79 = vector.load %arg6[%c0_78, %c0_79, %c0_80] : memref<5x128x120xbf16, #tpu.memory_space<vmem>>, vector<1x128x120xbf16>
    %80 = vector.shape_cast %79 : vector<1x128x120xbf16> to vector<128x120xbf16>
    %cst_81 = arith.constant dense<0.000000e+00> : vector<4x120xf32>
    %81 = tpu.matmul %78, %80, %cst_81 {dimension_numbers = #tpu.dot_dimension_numbers<[1], [0], [0], [1], [0, 0, 1, 1], [], []>} : vector<4x128xbf16>, vector<128x120xbf16>, vector<4x120xf32> -> vector<4x120xf32>
    %c2_82 = arith.constant 2 : index
    %c0_83 = arith.constant 0 : index
    %82 = tpu.strided_load %arg15[%c2_82, %c0_83] {strides = array<i32: 16, 1>} : memref<64x128xf32, #tpu.memory_space<vmem>>, vector<4x128xf32>
    %c3_84 = arith.constant 3 : index
    %c0_85 = arith.constant 0 : index
    %83 = tpu.strided_load %arg15[%c3_84, %c0_85] {strides = array<i32: 16, 1>} : memref<64x128xf32, #tpu.memory_space<vmem>>, vector<4x128xf32>
    %84 = arith.maximumf %82, %83 : vector<4x128xf32>
    %85 = arith.truncf %84 : vector<4x128xf32> to vector<4x128xbf16>
    %c1_86 = arith.constant 1 : index
    %c0_87 = arith.constant 0 : index
    %c0_88 = arith.constant 0 : index
    %86 = vector.load %arg6[%c1_86, %c0_87, %c0_88] : memref<5x128x120xbf16, #tpu.memory_space<vmem>>, vector<1x128x120xbf16>
    %87 = vector.shape_cast %86 : vector<1x128x120xbf16> to vector<128x120xbf16>
    %cst_89 = arith.constant dense<0.000000e+00> : vector<4x120xf32>
    %88 = tpu.matmul %85, %87, %cst_89 {dimension_numbers = #tpu.dot_dimension_numbers<[1], [0], [0], [1], [0, 0, 1, 1], [], []>} : vector<4x128xbf16>, vector<128x120xbf16>, vector<4x120xf32> -> vector<4x120xf32>
    %89 = arith.addf %81, %88 : vector<4x120xf32>
    %c4_90 = arith.constant 4 : index
    %c0_91 = arith.constant 0 : index
    %90 = tpu.strided_load %arg15[%c4_90, %c0_91] {strides = array<i32: 16, 1>} : memref<64x128xf32, #tpu.memory_space<vmem>>, vector<4x128xf32>
    %c5 = arith.constant 5 : index
    %c0_92 = arith.constant 0 : index
    %91 = tpu.strided_load %arg15[%c5, %c0_92] {strides = array<i32: 16, 1>} : memref<64x128xf32, #tpu.memory_space<vmem>>, vector<4x128xf32>
    %92 = arith.maximumf %90, %91 : vector<4x128xf32>
    %93 = arith.truncf %92 : vector<4x128xf32> to vector<4x128xbf16>
    %c2_93 = arith.constant 2 : index
    %c0_94 = arith.constant 0 : index
    %c0_95 = arith.constant 0 : index
    %94 = vector.load %arg6[%c2_93, %c0_94, %c0_95] : memref<5x128x120xbf16, #tpu.memory_space<vmem>>, vector<1x128x120xbf16>
    %95 = vector.shape_cast %94 : vector<1x128x120xbf16> to vector<128x120xbf16>
    %cst_96 = arith.constant dense<0.000000e+00> : vector<4x120xf32>
    %96 = tpu.matmul %93, %95, %cst_96 {dimension_numbers = #tpu.dot_dimension_numbers<[1], [0], [0], [1], [0, 0, 1, 1], [], []>} : vector<4x128xbf16>, vector<128x120xbf16>, vector<4x120xf32> -> vector<4x120xf32>
    %97 = arith.addf %89, %96 : vector<4x120xf32>
    %c6 = arith.constant 6 : index
    %c0_97 = arith.constant 0 : index
    %98 = tpu.strided_load %arg15[%c6, %c0_97] {strides = array<i32: 16, 1>} : memref<64x128xf32, #tpu.memory_space<vmem>>, vector<4x128xf32>
    %c7 = arith.constant 7 : index
    %c0_98 = arith.constant 0 : index
    %99 = tpu.strided_load %arg15[%c7, %c0_98] {strides = array<i32: 16, 1>} : memref<64x128xf32, #tpu.memory_space<vmem>>, vector<4x128xf32>
    %100 = arith.maximumf %98, %99 : vector<4x128xf32>
    %101 = arith.truncf %100 : vector<4x128xf32> to vector<4x128xbf16>
    %c3_99 = arith.constant 3 : index
    %c0_100 = arith.constant 0 : index
    %c0_101 = arith.constant 0 : index
    %102 = vector.load %arg6[%c3_99, %c0_100, %c0_101] : memref<5x128x120xbf16, #tpu.memory_space<vmem>>, vector<1x128x120xbf16>
    %103 = vector.shape_cast %102 : vector<1x128x120xbf16> to vector<128x120xbf16>
    %cst_102 = arith.constant dense<0.000000e+00> : vector<4x120xf32>
    %104 = tpu.matmul %101, %103, %cst_102 {dimension_numbers = #tpu.dot_dimension_numbers<[1], [0], [0], [1], [0, 0, 1, 1], [], []>} : vector<4x128xbf16>, vector<128x120xbf16>, vector<4x120xf32> -> vector<4x120xf32>
    %105 = arith.addf %97, %104 : vector<4x120xf32>
    %c8 = arith.constant 8 : index
    %c0_103 = arith.constant 0 : index
    %106 = tpu.strided_load %arg15[%c8, %c0_103] {strides = array<i32: 16, 1>} : memref<64x128xf32, #tpu.memory_space<vmem>>, vector<4x128xf32>
    %c9 = arith.constant 9 : index
    %c0_104 = arith.constant 0 : index
    %107 = tpu.strided_load %arg15[%c9, %c0_104] {strides = array<i32: 16, 1>} : memref<64x128xf32, #tpu.memory_space<vmem>>, vector<4x128xf32>
    %108 = arith.maximumf %106, %107 : vector<4x128xf32>
    %109 = arith.truncf %108 : vector<4x128xf32> to vector<4x128xbf16>
    %c4_105 = arith.constant 4 : index
    %c0_106 = arith.constant 0 : index
    %c0_107 = arith.constant 0 : index
    %110 = vector.load %arg6[%c4_105, %c0_106, %c0_107] : memref<5x128x120xbf16, #tpu.memory_space<vmem>>, vector<1x128x120xbf16>
    %111 = vector.shape_cast %110 : vector<1x128x120xbf16> to vector<128x120xbf16>
    %cst_108 = arith.constant dense<0.000000e+00> : vector<4x120xf32>
    %112 = tpu.matmul %109, %111, %cst_108 {dimension_numbers = #tpu.dot_dimension_numbers<[1], [0], [0], [1], [0, 0, 1, 1], [], []>} : vector<4x128xbf16>, vector<128x120xbf16>, vector<4x120xf32> -> vector<4x120xf32>
    %113 = arith.addf %105, %112 : vector<4x120xf32>
    %c0_109 = arith.constant 0 : index
    %c0_110 = arith.constant 0 : index
    %114 = vector.load %arg7[%c0_109, %c0_110] : memref<1x120xf32, #tpu.memory_space<vmem>>, vector<1x120xf32>
    %115 = vector.broadcast %114 : vector<1x120xf32> to vector<4x120xf32>
    %116 = arith.addf %113, %115 : vector<4x120xf32>
    %cst_111 = arith.constant 0.000000e+00 : f32
    %117 = vector.broadcast %cst_111 : f32 to vector<4x120xf32>
    %118 = arith.maximumf %116, %117 : vector<4x120xf32>
    %119 = arith.truncf %118 : vector<4x120xf32> to vector<4x120xbf16>
    %c0_112 = arith.constant 0 : index
    %c0_113 = arith.constant 0 : index
    %120 = vector.load %arg8[%c0_112, %c0_113] : memref<120x84xbf16, #tpu.memory_space<vmem>>, vector<120x84xbf16>
    %cst_114 = arith.constant dense<0.000000e+00> : vector<4x84xf32>
    %121 = tpu.matmul %119, %120, %cst_114 {dimension_numbers = #tpu.dot_dimension_numbers<[1], [0], [0], [1], [0, 0, 1, 1], [], []>} : vector<4x120xbf16>, vector<120x84xbf16>, vector<4x84xf32> -> vector<4x84xf32>
    %c0_115 = arith.constant 0 : index
    %c0_116 = arith.constant 0 : index
    %122 = vector.load %arg9[%c0_115, %c0_116] : memref<1x84xf32, #tpu.memory_space<vmem>>, vector<1x84xf32>
    %123 = vector.broadcast %122 : vector<1x84xf32> to vector<4x84xf32>
    %124 = arith.addf %121, %123 : vector<4x84xf32>
    %cst_117 = arith.constant 0.000000e+00 : f32
    %125 = vector.broadcast %cst_117 : f32 to vector<4x84xf32>
    %126 = arith.maximumf %124, %125 : vector<4x84xf32>
    %127 = arith.truncf %126 : vector<4x84xf32> to vector<4x84xbf16>
    %c0_118 = arith.constant 0 : index
    %c0_119 = arith.constant 0 : index
    %128 = vector.load %arg10[%c0_118, %c0_119] : memref<84x128xbf16, #tpu.memory_space<vmem>>, vector<84x128xbf16>
    %cst_120 = arith.constant dense<0.000000e+00> : vector<4x128xf32>
    %129 = tpu.matmul %127, %128, %cst_120 {dimension_numbers = #tpu.dot_dimension_numbers<[1], [0], [0], [1], [0, 0, 1, 1], [], []>} : vector<4x84xbf16>, vector<84x128xbf16>, vector<4x128xf32> -> vector<4x128xf32>
    %c0_121 = arith.constant 0 : index
    %c0_122 = arith.constant 0 : index
    %130 = vector.load %arg11[%c0_121, %c0_122] : memref<1x128xf32, #tpu.memory_space<vmem>>, vector<1x128xf32>
    %131 = vector.broadcast %130 : vector<1x128xf32> to vector<4x128xf32>
    %132 = arith.addf %129, %131 : vector<4x128xf32>
    %c0_123 = arith.constant 0 : index
    %c0_124 = arith.constant 0 : index
    %c0_125 = arith.constant 0 : index
    %133 = vector.load %arg12[%c0_123, %c0_124, %c0_125] : memref<1x4x128xf32, #tpu.memory_space<vmem>>, vector<1x4x128xf32>
    %134 = vector.shape_cast %133 : vector<1x4x128xf32> to vector<4x128xf32>
    %135 = vector.shape_cast %132 : vector<4x128xf32> to vector<1x4x128xf32>
    tpu.vector_store %arg12[%c0_123, %c0_124, %c0_125], %135 {strides = array<i32>} : memref<1x4x128xf32, #tpu.memory_space<vmem>>, vector<1x4x128xf32>,
    return
  }
  func.func @transform_0(%arg0: i32) -> (i32, i32) {
    %c0_i32 = arith.constant 0 : i32
    %c0_i32_0 = arith.constant 0 : i32
    return %arg0, %c0_i32 : i32, i32
  }
  func.func @transform_1(%arg0: i32) -> (i32, i32, i32) {
    %c0_i32 = arith.constant 0 : i32
    %c0_i32_0 = arith.constant 0 : i32
    %c0_i32_1 = arith.constant 0 : i32
    %c0_i32_2 = arith.constant 0 : i32
    return %c0_i32, %c0_i32_0, %c0_i32_1 : i32, i32, i32
  }
  func.func @transform_2(%arg0: i32) -> (i32, i32) {
    %c0_i32 = arith.constant 0 : i32
    %c0_i32_0 = arith.constant 0 : i32
    %c0_i32_1 = arith.constant 0 : i32
    return %c0_i32, %c0_i32_0 : i32, i32
  }
  func.func @transform_3(%arg0: i32) -> (i32, i32, i32) {
    %c0_i32 = arith.constant 0 : i32
    %c0_i32_0 = arith.constant 0 : i32
    %c0_i32_1 = arith.constant 0 : i32
    %c0_i32_2 = arith.constant 0 : i32
    return %c0_i32, %c0_i32_0, %c0_i32_1 : i32, i32, i32
  }
  func.func @transform_4(%arg0: i32) -> (i32, i32) {
    %c0_i32 = arith.constant 0 : i32
    %c0_i32_0 = arith.constant 0 : i32
    %c0_i32_1 = arith.constant 0 : i32
    return %c0_i32, %c0_i32_0 : i32, i32
  }
  func.func @transform_5(%arg0: i32) -> (i32, i32, i32) {
    %c0_i32 = arith.constant 0 : i32
    %c0_i32_0 = arith.constant 0 : i32
    %c0_i32_1 = arith.constant 0 : i32
    %c0_i32_2 = arith.constant 0 : i32
    return %c0_i32, %c0_i32_0, %c0_i32_1 : i32, i32, i32
  }
  func.func @transform_6(%arg0: i32) -> (i32, i32) {
    %c0_i32 = arith.constant 0 : i32
    %c0_i32_0 = arith.constant 0 : i32
    %c0_i32_1 = arith.constant 0 : i32
    return %c0_i32, %c0_i32_0 : i32, i32
  }
  func.func @transform_7(%arg0: i32) -> (i32, i32) {
    %c0_i32 = arith.constant 0 : i32
    %c0_i32_0 = arith.constant 0 : i32
    %c0_i32_1 = arith.constant 0 : i32
    return %c0_i32, %c0_i32_0 : i32, i32
  }
  func.func @transform_8(%arg0: i32) -> (i32, i32) {
    %c0_i32 = arith.constant 0 : i32
    %c0_i32_0 = arith.constant 0 : i32
    %c0_i32_1 = arith.constant 0 : i32
    return %c0_i32, %c0_i32_0 : i32, i32
  }
  func.func @transform_9(%arg0: i32) -> (i32, i32) {
    %c0_i32 = arith.constant 0 : i32
    %c0_i32_0 = arith.constant 0 : i32
    %c0_i32_1 = arith.constant 0 : i32
    return %c0_i32, %c0_i32_0 : i32, i32
  }
  func.func @transform_10(%arg0: i32) -> (i32, i32) {
    %c0_i32 = arith.constant 0 : i32
    %c0_i32_0 = arith.constant 0 : i32
    %c0_i32_1 = arith.constant 0 : i32
    return %c0_i32, %c0_i32_0 : i32, i32
  }
  func.func @transform_11(%arg0: i32) -> (i32, i32, i32) {
    %c0_i32 = arith.constant 0 : i32
    %c0_i32_0 = arith.constant 0 : i32
    %c0_i32_1 = arith.constant 0 : i32
    return %arg0, %c0_i32, %c0_i32_0 : i32, i32, i32
  }
}

</mosaic_0001>

<llo_original>
// kernel: net_forward.1
$region0: #{net_forward.1}
  #allocation0 [shape = 'u32[]', space=smem, size = 0x4, offset = 0x4, fixed_abs, tag = 'smem constant byte address 0x4 - core index']
  #allocation1 [shape = 'u32[144,128]{1,0:T(1,128)}', space=vmem, size = 0x12000, scoped, tag = 'internal scratch']
  #allocation2 [shape = 'f32[128,128]{1,0:T(8,128)}', space=vmem, size = 0x10000, scoped, tag = 'scratch operand']
  #allocation3 [shape = 'bf16[64,128]{1,0:T(16,128)(2,1)}', space=vmem, size = 0x4000, scoped, tag = 'scratch operand']
  #allocation4 [shape = 'f32[64,128]{1,0:T(8,128)}', space=vmem, size = 0x8000, scoped, tag = 'scratch operand']
  %s0 = inlined_call_operand.vmem [shape: bf16[256,128], index: 0, kind: input, shape index: {}]
  %s1 = inlined_call_operand.vmem [shape: bf16[5,128,256], index: 1, kind: input, shape index: {}]
  %s2 = inlined_call_operand.vmem [shape: f32[1,256], index: 2, kind: input, shape index: {}]
  %s3 = inlined_call_operand.vmem [shape: bf16[5,128,256], index: 3, kind: input, shape index: {}]
  %s4 = inlined_call_operand.vmem [shape: f32[1,256], index: 4, kind: input, shape index: {}]
  %s5 = inlined_call_operand.vmem [shape: bf16[5,128,120], index: 5, kind: input, shape index: {}]
  %s6 = inlined_call_operand.vmem [shape: f32[1,120], index: 6, kind: input, shape index: {}]
  %s7 = inlined_call_operand.vmem [shape: bf16[120,84], index: 7, kind: input, shape index: {}]
  %s8 = inlined_call_operand.vmem [shape: f32[1,84], index: 8, kind: input, shape index: {}]
  %s9 = inlined_call_operand.vmem [shape: bf16[84,128], index: 9, kind: input, shape index: {}]
  %s10 = inlined_call_operand.vmem [shape: f32[1,128], index: 10, kind: input, shape index: {}]
  %s11 = inlined_call_operand.hbm [shape: f32[2,4,128], index: 11, kind: output, shape index: {}]
  %s12 = sld [smem:[#allocation0]]
  $region77: #{net_forward.1} parent=0
    _
  %s14 = ssub.s32 1, %s12
  %s15 = scalar_select 0, %s14, %s12
  $region1: #{net_forward.1} parent=0
    #allocation5 [shape = 'u8[4096]{0}', space=vmem, size = 0x1000, scoped, tag = 'output window, operand 0']
    #allocation6 [shape = 's32[2]{0}', space=sflag, size = 0x8, scoped, tag = 'scoped memory for net_forward.1']
    %16 = vsyncpa [#allocation6], 0
    %s17 = scalar_lea.sflag [#allocation6], 1
    %18 = vsyncpa %s17, 0
    loop: start=0, step=1, limit=4
    $region2: #{net_forward.1} parent=1 // loop_pre_header
      _
    $region3: #{net_forward.1} parent=1 // loop_header
      %s20 = sphi 0, %s24
      %p21 = scmp.ge.s32.totalorder %s20, 4
      %s30 = sphi 0, %s32
      %s33 = sphi 0, %s30
      %s34 = sphi 0, %s33
      %s50 = sphi 0, %s34
      %s54 = sphi 0, %s54
      %s56 = sphi 0, %s54
      %s57 = sphi 0, %s56
      %s71 = sphi 0, %s57
      %s75 = sphi 0, %s75
      %s77 = sphi 0, %s75
      %s78 = sphi 0, %s77
      %s92 = sphi 0, %s78
      %s96 = sphi 0, %s96
      %s98 = sphi 0, %s96
      %s99 = sphi 0, %s98
      %s113 = sphi 0, %s99
      %s117 = sphi 0, %s117
      %s119 = sphi 0, %s117
      %s120 = sphi 0, %s119
      %s134 = sphi 0, %s120
      %s138 = sphi 0, %s138
      %s140 = sphi 0, %s138
      %s141 = sphi 0, %s140
      %s155 = sphi 0, %s141
      %s159 = sphi 0, %s159
      %s161 = sphi 0, %s159
      %s162 = sphi 0, %s161
      %s176 = sphi 0, %s162
      %s180 = sphi 0, %s180
      %s182 = sphi 0, %s180
      %s183 = sphi 0, %s182
      %s197 = sphi 0, %s183
      %s201 = sphi 0, %s201
      %s203 = sphi 0, %s201
      %s204 = sphi 0, %s203
      %s218 = sphi 0, %s204
      %s222 = sphi 0, %s222
      %s224 = sphi 0, %s222
      %s225 = sphi 0, %s224
      %s239 = sphi 0, %s225
      %s243 = sphi 0, %s243
      %s245 = sphi 0, %s243
      %s246 = sphi 0, %s245
      %s260 = sphi 0, %s246
      %s266 = sphi 0, %s268
      %s269 = sphi 0, %s266
      %s270 = sphi 0, %s269
      %s286 = sphi 0, %s270
    $region4: #{net_forward.1} parent=1 // loop_header_branch
      %23 = sbr.rel (%p21) target = $region8
    $region5: #{net_forward.1} parent=1 // loop_body
      %s25 = ssub.s32 %s20, 1
      %s26 = ssub.s32 %s20, 2
      %s27 = sadd.s32 %s20, 1
      %s28 = ssub.s32 %s20, %s27
      %p29 = scmp.eq.s32.totalorder %s28, 0
      %s31 = sadd.s32 %s30, 1
      %s32 = scalar_select %p29, %s30, %s31
      %p35 = pneg %p29
      %p36 = scmp.eq.s32.totalorder %s20, 1
      %p37 = por %p35, %p36
      %p38 = scmp.ne.s32.totalorder %s30, %s33
      %p39 = scmp.eq.s32.totalorder %s20, 0
      %p40 = por %p38, %p39
      %p41 = scmp.ne.s32.totalorder %s30, %s33
      %p42 = scmp.eq.s32.totalorder %s25, 1
      %p43 = por %p41, %p42
      %p44 = scmp.ne.s32.totalorder %s33, %s34
      %p45 = scmp.eq.s32.totalorder %s25, 0
      %p46 = por %p44, %p45
      %p47 = scmp.ne.s32.totalorder %s33, %s34
      %p48 = scmp.eq.s32.totalorder %s26, 1
      %p49 = por %p47, %p48
      %p51 = scmp.ne.s32.totalorder %s34, %s50
      %p52 = scmp.eq.s32.totalorder %s26, 0
      %p53 = por %p51, %p52
      %s55 = sadd.s32 %s54, 1
      %p58 = scmp.eq.s32.totalorder %s20, 1
      %p59 = scmp.ne.s32.totalorder %s54, %s56
      %p60 = scmp.eq.s32.totalorder %s20, 0
      %p61 = por %p59, %p60
      %p62 = scmp.ne.s32.totalorder %s54, %s56
      %p63 = scmp.eq.s32.totalorder %s25, 1
      %p64 = por %p62, %p63
      %p65 = scmp.ne.s32.totalorder %s56, %s57
      %p66 = scmp.eq.s32.totalorder %s25, 0
      %p67 = por %p65, %p66
      %p68 = scmp.ne.s32.totalorder %s56, %s57
      %p69 = scmp.eq.s32.totalorder %s26, 1
      %p70 = por %p68, %p69
      %p72 = scmp.ne.s32.totalorder %s57, %s71
      %p73 = scmp.eq.s32.totalorder %s26, 0
      %p74 = por %p72, %p73
      %s76 = sadd.s32 %s75, 1
      %p79 = scmp.eq.s32.totalorder %s20, 1
      %p80 = scmp.ne.s32.totalorder %s75, %s77
      %p81 = scmp.eq.s32.totalorder %s20, 0
      %p82 = por %p80, %p81
      %p83 = scmp.ne.s32.totalorder %s75, %s77
      %p84 = scmp.eq.s32.totalorder %s25, 1
      %p85 = por %p83, %p84
      %p86 = scmp.ne.s32.totalorder %s77, %s78
      %p87 = scmp.eq.s32.totalorder %s25, 0
      %p88 = por %p86, %p87
      %p89 = scmp.ne.s32.totalorder %s77, %s78
      %p90 = scmp.eq.s32.totalorder %s26, 1
      %p91 = por %p89, %p90
      %p93 = scmp.ne.s32.totalorder %s78, %s92
      %p94 = scmp.eq.s32.totalorder %s26, 0
      %p95 = por %p93, %p94
      %s97 = sadd.s32 %s96, 1
      %p100 = scmp.eq.s32.totalorder %s20, 1
      %p101 = scmp.ne.s32.totalorder %s96, %s98
      %p102 = scmp.eq.s32.totalorder %s20, 0
      %p103 = por %p101, %p102
      %p104 = scmp.ne.s32.totalorder %s96, %s98
      %p105 = scmp.eq.s32.totalorder %s25, 1
      %p106 = por %p104, %p105
      %p107 = scmp.ne.s32.totalorder %s98, %s99
      %p108 = scmp.eq.s32.totalorder %s25, 0
      %p109 = por %p107, %p108
      %p110 = scmp.ne.s32.totalorder %s98, %s99
      %p111 = scmp.eq.s32.totalorder %s26, 1
      %p112 = por %p110, %p111
      %p114 = scmp.ne.s32.totalorder %s99, %s113
      %p115 = scmp.eq.s32.totalorder %s26, 0
      %p116 = por %p114, %p115
      %s118 = sadd.s32 %s117, 1
      %p121 = scmp.eq.s32.totalorder %s20, 1
      %p122 = scmp.ne.s32.totalorder %s117, %s119
      %p123 = scmp.eq.s32.totalorder %s20, 0
      %p124 = por %p122, %p123
      %p125 = scmp.ne.s32.totalorder %s117, %s119
      %p126 = scmp.eq.s32.totalorder %s25, 1
      %p127 = por %p125, %p126
      %p128 = scmp.ne.s32.totalorder %s119, %s120
      %p129 = scmp.eq.s32.totalorder %s25, 0
      %p130 = por %p128, %p129
      %p131 = scmp.ne.s32.totalorder %s119, %s120
      %p132 = scmp.eq.s32.totalorder %s26, 1
      %p133 = por %p131, %p132
      %p135 = scmp.ne.s32.totalorder %s120, %s134
      %p136 = scmp.eq.s32.totalorder %s26, 0
      %p137 = por %p135, %p136
      %s139 = sadd.s32 %s138, 1
      %p142 = scmp.eq.s32.totalorder %s20, 1
      %p143 = scmp.ne.s32.totalorder %s138, %s140
      %p144 = scmp.eq.s32.totalorder %s20, 0
      %p145 = por %p143, %p144
      %p146 = scmp.ne.s32.totalorder %s138, %s140
      %p147 = scmp.eq.s32.totalorder %s25, 1
      %p148 = por %p146, %p147
      %p149 = scmp.ne.s32.totalorder %s140, %s141
      %p150 = scmp.eq.s32.totalorder %s25, 0
      %p151 = por %p149, %p150
      %p152 = scmp.ne.s32.totalorder %s140, %s141
      %p153 = scmp.eq.s32.totalorder %s26, 1
      %p154 = por %p152, %p153
      %p156 = scmp.ne.s32.totalorder %s141, %s155
      %p157 = scmp.eq.s32.totalorder %s26, 0
      %p158 = por %p156, %p157
      %s160 = sadd.s32 %s159, 1
      %p163 = scmp.eq.s32.totalorder %s20, 1
      %p164 = scmp.ne.s32.totalorder %s159, %s161
      %p165 = scmp.eq.s32.totalorder %s20, 0
      %p166 = por %p164, %p165
      %p167 = scmp.ne.s32.totalorder %s159, %s161
      %p168 = scmp.eq.s32.totalorder %s25, 1
      %p169 = por %p167, %p168
      %p170 = scmp.ne.s32.totalorder %s161, %s162
      %p171 = scmp.eq.s32.totalorder %s25, 0
      %p172 = por %p170, %p171
      %p173 = scmp.ne.s32.totalorder %s161, %s162
      %p174 = scmp.eq.s32.totalorder %s26, 1
      %p175 = por %p173, %p174
      %p177 = scmp.ne.s32.totalorder %s162, %s176
      %p178 = scmp.eq.s32.totalorder %s26, 0
      %p179 = por %p177, %p178
      %s181 = sadd.s32 %s180, 1
      %p184 = scmp.eq.s32.totalorder %s20, 1
      %p185 = scmp.ne.s32.totalorder %s180, %s182
      %p186 = scmp.eq.s32.totalorder %s20, 0
      %p187 = por %p185, %p186
      %p188 = scmp.ne.s32.totalorder %s180, %s182
      %p189 = scmp.eq.s32.totalorder %s25, 1
      %p190 = por %p188, %p189
      %p191 = scmp.ne.s32.totalorder %s182, %s183
      %p192 = scmp.eq.s32.totalorder %s25, 0
      %p193 = por %p191, %p192
      %p194 = scmp.ne.s32.totalorder %s182, %s183
      %p195 = scmp.eq.s32.totalorder %s26, 1
      %p196 = por %p194, %p195
      %p198 = scmp.ne.s32.totalorder %s183, %s197
      %p199 = scmp.eq.s32.totalorder %s26, 0
      %p200 = por %p198, %p199
      %s202 = sadd.s32 %s201, 1
      %p205 = scmp.eq.s32.totalorder %s20, 1
      %p206 = scmp.ne.s32.totalorder %s201, %s203
      %p207 = scmp.eq.s32.totalorder %s20, 0
      %p208 = por %p206, %p207
      %p209 = scmp.ne.s32.totalorder %s201, %s203
      %p210 = scmp.eq.s32.totalorder %s25, 1
      %p211 = por %p209, %p210
      %p212 = scmp.ne.s32.totalorder %s203, %s204
      %p213 = scmp.eq.s32.totalorder %s25, 0
      %p214 = por %p212, %p213
      %p215 = scmp.ne.s32.totalorder %s203, %s204
      %p216 = scmp.eq.s32.totalorder %s26, 1
      %p217 = por %p215, %p216
      %p219 = scmp.ne.s32.totalorder %s204, %s218
      %p220 = scmp.eq.s32.totalorder %s26, 0
      %p221 = por %p219, %p220
      %s223 = sadd.s32 %s222, 1
      %p226 = scmp.eq.s32.totalorder %s20, 1
      %p227 = scmp.ne.s32.totalorder %s222, %s224
      %p228 = scmp.eq.s32.totalorder %s20, 0
      %p229 = por %p227, %p228
      %p230 = scmp.ne.s32.totalorder %s222, %s224
      %p231 = scmp.eq.s32.totalorder %s25, 1
      %p232 = por %p230, %p231
      %p233 = scmp.ne.s32.totalorder %s224, %s225
      %p234 = scmp.eq.s32.totalorder %s25, 0
      %p235 = por %p233, %p234
      %p236 = scmp.ne.s32.totalorder %s224, %s225
      %p237 = scmp.eq.s32.totalorder %s26, 1
      %p238 = por %p236, %p237
      %p240 = scmp.ne.s32.totalorder %s225, %s239
      %p241 = scmp.eq.s32.totalorder %s26, 0
      %p242 = por %p240, %p241
      %s244 = sadd.s32 %s243, 1
      %p247 = scmp.eq.s32.totalorder %s20, 1
      %p248 = scmp.ne.s32.totalorder %s243, %s245
      %p249 = scmp.eq.s32.totalorder %s20, 0
      %p250 = por %p248, %p249
      %p251 = scmp.ne.s32.totalorder %s243, %s245
      %p252 = scmp.eq.s32.totalorder %s25, 1
      %p253 = por %p251, %p252
      %p254 = scmp.ne.s32.totalorder %s245, %s246
      %p255 = scmp.eq.s32.totalorder %s25, 0
      %p256 = por %p254, %p255
      %p257 = scmp.ne.s32.totalorder %s245, %s246
      %p258 = scmp.eq.s32.totalorder %s26, 1
      %p259 = por %p257, %p258
      %p261 = scmp.ne.s32.totalorder %s246, %s260
      %p262 = scmp.eq.s32.totalorder %s26, 0
      %p263 = por %p261, %p262
      %s264 = ssub.s32 %s20, %s27
      %p265 = scmp.eq.s32.totalorder %s264, 0
      %s267 = sadd.s32 %s266, 1
      %s268 = scalar_select %p265, %s266, %s267
      %p271 = pneg %p265
      %p272 = scmp.eq.s32.totalorder %s20, 1
      %p273 = por %p271, %p272
      %p274 = scmp.ne.s32.totalorder %s266, %s269
      %p275 = scmp.eq.s32.totalorder %s20, 0
      %p276 = por %p274, %p275
      %p277 = scmp.ne.s32.totalorder %s266, %s269
      %p278 = scmp.eq.s32.totalorder %s25, 1
      %p279 = por %p277, %p278
      %p280 = scmp.ne.s32.totalorder %s269, %s270
      %p281 = scmp.eq.s32.totalorder %s25, 0
      %p282 = por %p280, %p281
      %p283 = scmp.ne.s32.totalorder %s269, %s270
      %p284 = scmp.eq.s32.totalorder %s26, 1
      %p285 = por %p283, %p284
      %p287 = scmp.ne.s32.totalorder %s270, %s286
      %p288 = scmp.eq.s32.totalorder %s26, 0
      %p289 = por %p287, %p288
      %p290 = scmp.le.s32.totalorder 1, %s20
      %p291 = scmp.lt.s32.totalorder %s20, 3
      %p292 = pnand %p290, %p291
      %p293 = pneg %p292
      // Predicated region
      $region9: #{net_forward.1} parent=5 // pred_check
        _
      $region10: #{net_forward.1} parent=5 // pred_check_branch
        %295 = sbr.rel (%p292) target = $region12
      $region11: #{net_forward.1} parent=5 // pred_region
        %s296 = ssub.s32 %s20, 1
        // Predicated region
        $region13: #{net_forward.1} parent=11 // pred_check
          %p297 = pneg %p67
        $region14: #{net_forward.1} parent=11 // pred_check_branch
          %299 = sbr.rel (%p297) target = $region16
        $region15: #{net_forward.1} parent=11 // pred_region
          _
        $region16: #{net_forward.1} parent=11 // pred_fallthru
          _
        // Predicated region
        $region17: #{net_forward.1} parent=11 // pred_check
          %p300 = pneg %p88
        $region18: #{net_forward.1} parent=11 // pred_check_branch
          %302 = sbr.rel (%p300) target = $region20
        $region19: #{net_forward.1} parent=11 // pred_region
          _
        $region20: #{net_forward.1} parent=11 // pred_fallthru
          _
        // Predicated region
        $region21: #{net_forward.1} parent=11 // pred_check
          %p303 = pneg %p109
        $region22: #{net_forward.1} parent=11 // pred_check_branch
          %305 = sbr.rel (%p303) target = $region24
        $region23: #{net_forward.1} parent=11 // pred_region
          _
        $region24: #{net_forward.1} parent=11 // pred_fallthru
          _
        // Predicated region
        $region25: #{net_forward.1} parent=11 // pred_check
          %p306 = pneg %p130
        $region26: #{net_forward.1} parent=11 // pred_check_branch
          %308 = sbr.rel (%p306) target = $region28
        $region27: #{net_forward.1} parent=11 // pred_region
          _
        $region28: #{net_forward.1} parent=11 // pred_fallthru
          _
        // Predicated region
        $region29: #{net_forward.1} parent=11 // pred_check
          %p309 = pneg %p151
        $region30: #{net_forward.1} parent=11 // pred_check_branch
          %311 = sbr.rel (%p309) target = $region32
        $region31: #{net_forward.1} parent=11 // pred_region
          _
        $region32: #{net_forward.1} parent=11 // pred_fallthru
          _
        // Predicated region
        $region33: #{net_forward.1} parent=11 // pred_check
          %p312 = pneg %p172
        $region34: #{net_forward.1} parent=11 // pred_check_branch
          %314 = sbr.rel (%p312) target = $region36
        $region35: #{net_forward.1} parent=11 // pred_region
          _
        $region36: #{net_forward.1} parent=11 // pred_fallthru
          _
        // Predicated region
        $region37: #{net_forward.1} parent=11 // pred_check
          %p315 = pneg %p193
        $region38: #{net_forward.1} parent=11 // pred_check_branch
          %317 = sbr.rel (%p315) target = $region40
        $region39: #{net_forward.1} parent=11 // pred_region
          _
        $region40: #{net_forward.1} parent=11 // pred_fallthru
          _
        // Predicated region
        $region41: #{net_forward.1} parent=11 // pred_check
          %p318 = pneg %p214
        $region42: #{net_forward.1} parent=11 // pred_check_branch
          %320 = sbr.rel (%p318) target = $region44
        $region43: #{net_forward.1} parent=11 // pred_region
          _
        $region44: #{net_forward.1} parent=11 // pred_fallthru
          _
        // Predicated region
        $region45: #{net_forward.1} parent=11 // pred_check
          %p321 = pneg %p235
        $region46: #{net_forward.1} parent=11 // pred_check_branch
          %323 = sbr.rel (%p321) target = $region48
        $region47: #{net_forward.1} parent=11 // pred_region
          _
        $region48: #{net_forward.1} parent=11 // pred_fallthru
          _
        // Predicated region
        $region49: #{net_forward.1} parent=11 // pred_check
          %p324 = pneg %p256
        $region50: #{net_forward.1} parent=11 // pred_check_branch
          %326 = sbr.rel (%p324) target = $region52
        $region51: #{net_forward.1} parent=11 // pred_region
          _
        $region52: #{net_forward.1} parent=11 // pred_fallthru
          _
      $region12: #{net_forward.1} parent=5 // pred_fallthru
        _
      %p327 = scmp.lt.s32.totalorder %s20, 2
      // Predicated region
      $region53: #{net_forward.1} parent=5 // pred_check
        %p328 = pneg %p327
      $region54: #{net_forward.1} parent=5 // pred_check_branch
        %330 = sbr.rel (%p328) target = $region56
      $region55: #{net_forward.1} parent=5 // pred_region
        // Predicated region
        $region57: #{net_forward.1} parent=55 // pred_check
          %p331 = pneg %p40
        $region58: #{net_forward.1} parent=55 // pred_check_branch
          %333 = sbr.rel (%p331) target = $region60
        $region59: #{net_forward.1} parent=55 // pred_region
          %s334 = smul.u32 16, %s20
          %p335 = scmp.lt.s32.totalorder %s334, 31
          %s336 = scalar_select %p335, %s334, 31
          %s337 = smul.addr %s336, 4
          %s338 = scalar_lea.vmem %s0, %s337
          %s339 = smul.u32 16, %s20
        $region60: #{net_forward.1} parent=55 // pred_fallthru
          _
      $region56: #{net_forward.1} parent=5 // pred_fallthru
        _
      %p340 = scmp.le.s32.totalorder 1, %s20
      %p341 = scmp.lt.s32.totalorder %s20, 3
      %p342 = pnand %p340, %p341
      %p343 = pneg %p342
      // Predicated region
      $region61: #{net_forward.1} parent=5 // pred_check
        _
      $region62: #{net_forward.1} parent=5 // pred_check_branch
        %345 = sbr.rel (%p342) target = $region64
      $region63: #{net_forward.1} parent=5 // pred_region
        %s346 = ssub.s32 %s20, 1
        %s347 = smul.u32 16, %s25
        %p348 = scmp.lt.s32.totalorder %s347, 31
        %s349 = scalar_select %p348, %s347, 31
        %s350 = smul.addr %s349, 4
        %s351 = scalar_lea.vmem %s0, %s350
        %p352 = pneg %p46
        %p353 = pneg %p43
        %p354 = pneg %p67
        %p355 = pneg %p64
        %p356 = pneg %p88
        %p357 = pneg %p85
        %p358 = pneg %p109
        %p359 = pneg %p106
        %p360 = pneg %p130
        %p361 = pneg %p127
        %p362 = pneg %p151
        %p363 = pneg %p148
        %p364 = pneg %p172
        %p365 = pneg %p169
        %p366 = pneg %p193
        %p367 = pneg %p190
        %p368 = pneg %p214
        %p369 = pneg %p211
        %p370 = pneg %p235
        %p371 = pneg %p232
        %p372 = pneg %p256
        %p373 = pneg %p253
        %p374 = pneg %p282
        %p375 = pneg %p279
        %s376 = sand.u32 %s269, 1
        %s377 = scalar_lea.sflag [#allocation6], %s376
        %s378 = sand.u32 %s269, 1
        %s379 = smul.addr %s378, 4
        %s380 = scalar_lea.vmem [#allocation5], %s379
        %s381 = smul.u32 16, %s25
        %p382 = scmp.lt.s32.totalorder %s381, 31
        %s383 = scalar_select %p382, %s381, 31
        %s384 = smul.addr %s383, 4
        %s385 = scalar_lea.vmem %s0, %s384
        %s386 = smul.u32 16, %s25
        %v388 = vld [vmem:[%s385] sm:$0xf]
        %v389 = vld [vmem:[%s385 + $0x4] sm:$0xf]
        %v390 = vld [vmem:[%s385 + $0x8] sm:$0xf]
        %v391 = vld [vmem:[%s385 + $0xc] sm:$0xf]
        %v392 = vld [vmem:[%s385 + $0x10] sm:$0xf]
        %v393 = vld [vmem:[%s385 + $0x14] sm:$0xf]
        %v394 = vld [vmem:[%s385 + $0x18] sm:$0xf]
        %v395 = vld [vmem:[%s385 + $0x1c] sm:$0xf]
        %v396 = vld [vmem:[%s385 + $0x20] sm:$0xf]
        %v397 = vld [vmem:[%s385 + $0x24] sm:$0xf]
        %v398 = vld [vmem:[%s385 + $0x28] sm:$0xf]
        %v399 = vld [vmem:[%s385 + $0x2c] sm:$0xf]
        %v400 = vld [vmem:[%s385 + $0x30] sm:$0xf]
        %v401 = vld [vmem:[%s385 + $0x34] sm:$0xf]
        %v402 = vld [vmem:[%s385 + $0x38] sm:$0xf]
        %v403 = vld [vmem:[%s385 + $0x3c] sm:$0x3]
        %v404 = vld [vmem:[%s1] sm:$0xff]
        %v405 = vld [vmem:[%s1 + $0x8] sm:$0xff]
        %v406 = vld [vmem:[%s1 + $0x10] sm:$0xff]
        %v407 = vld [vmem:[%s1 + $0x18] sm:$0xff]
        %v408 = vld [vmem:[%s1 + $0x20] sm:$0xff]
        %v409 = vld [vmem:[%s1 + $0x28] sm:$0xff]
        %v410 = vld [vmem:[%s1 + $0x30] sm:$0xff]
        %v411 = vld [vmem:[%s1 + $0x38] sm:$0xff]
        %v412 = vld [vmem:[%s1 + $0x40] sm:$0xff]
        %v413 = vld [vmem:[%s1 + $0x48] sm:$0xff]
        %v414 = vld [vmem:[%s1 + $0x50] sm:$0xff]
        %v415 = vld [vmem:[%s1 + $0x58] sm:$0xff]
        %v416 = vld [vmem:[%s1 + $0x60] sm:$0xff]
        %v417 = vld [vmem:[%s1 + $0x68] sm:$0xff]
        %v418 = vld [vmem:[%s1 + $0x70] sm:$0xff]
        %v419 = vld [vmem:[%s1 + $0x78] sm:$0xff]
        %v420 = vld [vmem:[%s385 + $0x3c] sm:$0x7]
        %s421 = scalar_lea.vmem %s1, 128
        %v422 = vld [vmem:[%s421] sm:$0xff]
        %v423 = vld [vmem:[%s421 + $0x8] sm:$0xff]
        %v424 = vld [vmem:[%s421 + $0x10] sm:$0xff]
        %v425 = vld [vmem:[%s421 + $0x18] sm:$0xff]
        %v426 = vld [vmem:[%s421 + $0x20] sm:$0xff]
        %v427 = vld [vmem:[%s421 + $0x28] sm:$0xff]
        %v428 = vld [vmem:[%s421 + $0x30] sm:$0xff]
        %v429 = vld [vmem:[%s421 + $0x38] sm:$0xff]
        %v430 = vld [vmem:[%s421 + $0x40] sm:$0xff]
        %v431 = vld [vmem:[%s421 + $0x48] sm:$0xff]
        %v432 = vld [vmem:[%s421 + $0x50] sm:$0xff]
        %v433 = vld [vmem:[%s421 + $0x58] sm:$0xff]
        %v434 = vld [vmem:[%s421 + $0x60] sm:$0xff]
        %v435 = vld [vmem:[%s421 + $0x68] sm:$0xff]
        %v436 = vld [vmem:[%s421 + $0x70] sm:$0xff]
        %v437 = vld [vmem:[%s421 + $0x78] sm:$0xff]
        %v454 = vunpack.c.l.b16 %v388
        %v455 = vunpack.c.l.b16 %v389
        %v456 = vunpack.c.l.b16 %v390
        %v457 = vunpack.c.l.b16 %v391
        %v458 = vunpack.c.l.b16 %v392
        %v459 = vunpack.c.l.b16 %v393
        %v460 = vunpack.c.l.b16 %v394
        %v461 = vunpack.c.l.b16 %v395
        %v462 = vunpack.c.l.b16 %v396
        %v463 = vunpack.c.l.b16 %v397
        %v464 = vunpack.c.l.b16 %v398
        %v465 = vunpack.c.l.b16 %v399
        %v466 = vunpack.c.l.b16 %v400
        %v467 = vunpack.c.l.b16 %v401
        %v468 = vunpack.c.l.b16 %v402
        %v469 = vunpack.c.l.b16 %v420
        %v470 = vpack.c.b16 %v455, %v454
        %v471 = vpack.c.b16 %v457, %v456
        %v472 = vpack.c.b16 %v459, %v458
        %v473 = vpack.c.b16 %v461, %v460
        %v474 = vpack.c.b16 %v463, %v462
        %v475 = vpack.c.b16 %v465, %v464
        %v476 = vpack.c.b16 %v467, %v466
        %v477 = vpack.c.b16 %v469, %v468
        %vm478 = vsmask.f32 7424
        %v480 = vshrl.u32 %v470, 16
        %v482 = vshll.u32 %v470, 16
        %v484 = vrot.slane %v482, 1
        %v485 = vor.u32 %v480, %v484
        %v487 = vshll.u32 %v471, 16
        %v489 = vrot.slane %v487, 1
        %v490 = vsel %vm478, %v485, %v489
        %v491 = vshrl.u32 %v471, 16
        %v493 = vor.u32 %v491, %v489
        %v495 = vshll.u32 %v472, 16
        %v497 = vrot.slane %v495, 1
        %v498 = vsel %vm478, %v493, %v497
        %v499 = vshrl.u32 %v472, 16
        %v501 = vor.u32 %v499, %v497
        %v503 = vshll.u32 %v473, 16
        %v505 = vrot.slane %v503, 1
        %v506 = vsel %vm478, %v501, %v505
        %v507 = vshrl.u32 %v473, 16
        %v509 = vor.u32 %v507, %v505
        %v511 = vshll.u32 %v474, 16
        %v513 = vrot.slane %v511, 1
        %v514 = vsel %vm478, %v509, %v513
        %v515 = vshrl.u32 %v474, 16
        %v517 = vor.u32 %v515, %v513
        %v519 = vshll.u32 %v475, 16
        %v521 = vrot.slane %v519, 1
        %v522 = vsel %vm478, %v517, %v521
        %v523 = vshrl.u32 %v475, 16
        %v525 = vor.u32 %v523, %v521
        %v527 = vshll.u32 %v476, 16
        %v529 = vrot.slane %v527, 1
        %v530 = vsel %vm478, %v525, %v529
        %v531 = vshrl.u32 %v476, 16
        %v533 = vor.u32 %v531, %v529
        %v535 = vshll.u32 %v477, 16
        %v537 = vrot.slane %v535, 1
        %v538 = vsel %vm478, %v533, %v537
        %v539 = vshrl.u32 %v477, 16
        %v541 = vor.u32 %v539, %v537
        %v566 = vunpack.c.l.b16 %v422
        %v567 = vunpack.c.h.b16 %v422
        %v568 = vunpack.c.l.b16 %v423
        %v569 = vunpack.c.h.b16 %v423
        %v570 = vunpack.c.l.b16 %v424
        %v571 = vunpack.c.h.b16 %v424
        %v572 = vunpack.c.l.b16 %v425
        %v573 = vunpack.c.h.b16 %v425
        %v574 = vunpack.c.l.b16 %v426
        %v575 = vunpack.c.h.b16 %v426
        %v576 = vunpack.c.l.b16 %v427
        %v577 = vunpack.c.h.b16 %v427
        %v578 = vunpack.c.l.b16 %v428
        %v579 = vunpack.c.h.b16 %v428
        %v580 = vunpack.c.l.b16 %v429
        %v581 = vunpack.c.h.b16 %v429
        %v582 = vunpack.c.l.b16 %v430
        %v583 = vunpack.c.h.b16 %v430
        %v584 = vunpack.c.l.b16 %v431
        %v585 = vunpack.c.h.b16 %v431
        %v586 = vunpack.c.l.b16 %v432
        %v587 = vunpack.c.h.b16 %v432
        %v588 = vunpack.c.l.b16 %v433
        %v589 = vunpack.c.h.b16 %v433
        %v590 = vunpack.c.l.b16 %v434
        %v591 = vunpack.c.h.b16 %v434
        %v592 = vunpack.c.l.b16 %v435
        %v593 = vunpack.c.h.b16 %v435
        %v594 = vunpack.c.l.b16 %v436
        %v595 = vunpack.c.h.b16 %v436
        %v596 = vunpack.c.l.b16 %v437
        %v597 = vunpack.c.h.b16 %v437
        %v598 = vpack.c.b16 %v568, %v566
        %v599 = vpack.c.b16 %v569, %v567
        %v600 = vpack.c.b16 %v572, %v570
        %v601 = vpack.c.b16 %v573, %v571
        %v602 = vpack.c.b16 %v576, %v574
        %v603 = vpack.c.b16 %v577, %v575
        %v604 = vpack.c.b16 %v580, %v578
        %v605 = vpack.c.b16 %v581, %v579
        %v606 = vpack.c.b16 %v584, %v582
        %v607 = vpack.c.b16 %v585, %v583
        %v608 = vpack.c.b16 %v588, %v586
        %v609 = vpack.c.b16 %v589, %v587
        %v610 = vpack.c.b16 %v592, %v590
        %v611 = vpack.c.b16 %v593, %v591
        %v612 = vpack.c.b16 %v596, %v594
        %v613 = vpack.c.b16 %v597, %v595
        %630 = vmatprep.subr.bf16.mxu0 %v599
        %631 = vmatpush1.bf16.msra.mxu0 %v598
        %632 = vmatprep.subr.bf16.mxu0 %v601
        %633 = vmatpush1.bf16.msra.mxu0 %v600
        %634 = vmatprep.subr.bf16.mxu0 %v603
        %635 = vmatpush1.bf16.msra.mxu0 %v602
        %636 = vmatprep.subr.bf16.mxu0 %v605
        %637 = vmatpush1.bf16.msra.mxu0 %v604
        %638 = vmatprep.subr.bf16.mxu0 %v607
        %639 = vmatpush1.bf16.msra.mxu0 %v606
        %640 = vmatprep.subr.bf16.mxu0 %v609
        %641 = vmatpush1.bf16.msra.mxu0 %v608
        %642 = vmatprep.subr.bf16.mxu0 %v611
        %643 = vmatpush1.bf16.msra.mxu0 %v610
        %644 = vmatprep.subr.bf16.mxu0 %v613
        %645 = vmatpush1.bf16.msra.mxu0 %v612
        %646 = vmatprep.subr.bf16.mxu0 0
        %647 = vmatpush1.bf16.msra.mxu0 0
        %648 = vmatprep.subr.bf16.mxu0 0
        %649 = vmatpush1.bf16.msra.mxu0 0
        %650 = vmatprep.subr.bf16.mxu0 0
        %651 = vmatpush1.bf16.msra.mxu0 0
        %652 = vmatprep.subr.bf16.mxu0 0
        %653 = vmatpush1.bf16.msra.mxu0 0
        %654 = vmatprep.subr.bf16.mxu0 0
        %655 = vmatpush1.bf16.msra.mxu0 0
        %656 = vmatprep.subr.bf16.mxu0 0
        %657 = vmatpush1.bf16.msra.mxu0 0
        %658 = vmatprep.subr.bf16.mxu0 0
        %659 = vmatpush1.bf16.msra.mxu0 0
        %660 = vmatprep.subr.bf16.mxu0 0
        %661 = vmatpush1.bf16.msra.mxu0 0
        %662 = vmatprep.mubr.bf16.mxu0 0
        %663 = vmatmul.mubr.bf16.gmra.mrb[0].mxu0 %v490
        %v664 = vpop.f32.mrb[0].mxu0
        %v665 = vadd.f32 0.0, %v664
        %v666 = vpop.f32.mrb[0].mxu0
        %v667 = vadd.f32 0.0, %v666
        %v668 = vpop.f32.mrb[0].mxu0
        %v669 = vadd.f32 0.0, %v668
        %v670 = vpop.f32.mrb[0].mxu0
        %v671 = vadd.f32 0.0, %v670
        %672 = vmatprep.mubr.bf16.mxu0 0
        %673 = vmatmul.mubr.bf16.gmra.mrb[0].mxu0 %v498
        %v674 = vpop.f32.mrb[0].mxu0
        %v675 = vadd.f32 0.0, %v674
        %v676 = vpop.f32.mrb[0].mxu0
        %v677 = vadd.f32 0.0, %v676
        %v678 = vpop.f32.mrb[0].mxu0
        %v679 = vadd.f32 0.0, %v678
        %v680 = vpop.f32.mrb[0].mxu0
        %v681 = vadd.f32 0.0, %v680
        %682 = vmatprep.mubr.bf16.mxu0 0
        %683 = vmatmul.mubr.bf16.gmra.mrb[0].mxu0 %v506
        %v684 = vpop.f32.mrb[0].mxu0
        %v685 = vadd.f32 0.0, %v684
        %v686 = vpop.f32.mrb[0].mxu0
        %v687 = vadd.f32 0.0, %v686
        %v688 = vpop.f32.mrb[0].mxu0
        %v689 = vadd.f32 0.0, %v688
        %v690 = vpop.f32.mrb[0].mxu0
        %v691 = vadd.f32 0.0, %v690
        %692 = vmatprep.mubr.bf16.mxu0 0
        %693 = vmatmul.mubr.bf16.gmra.mrb[0].mxu0 %v514
        %v694 = vpop.f32.mrb[0].mxu0
        %v695 = vadd.f32 0.0, %v694
        %v696 = vpop.f32.mrb[0].mxu0
        %v697 = vadd.f32 0.0, %v696
        %v698 = vpop.f32.mrb[0].mxu0
        %v699 = vadd.f32 0.0, %v698
        %v700 = vpop.f32.mrb[0].mxu0
        %v701 = vadd.f32 0.0, %v700
        %702 = vmatprep.mubr.bf16.mxu0 0
        %703 = vmatmul.mubr.bf16.gmra.mrb[0].mxu0 %v522
        %v704 = vpop.f32.mrb[0].mxu0
        %v705 = vadd.f32 0.0, %v704
        %v706 = vpop.f32.mrb[0].mxu0
        %v707 = vadd.f32 0.0, %v706
        %v708 = vpop.f32.mrb[0].mxu0
        %v709 = vadd.f32 0.0, %v708
        %v710 = vpop.f32.mrb[0].mxu0
        %v711 = vadd.f32 0.0, %v710
        %712 = vmatprep.mubr.bf16.mxu0 0
        %713 = vmatmul.mubr.bf16.gmra.mrb[0].mxu0 %v530
        %v714 = vpop.f32.mrb[0].mxu0
        %v715 = vadd.f32 0.0, %v714
        %v716 = vpop.f32.mrb[0].mxu0
        %v717 = vadd.f32 0.0, %v716
        %v718 = vpop.f32.mrb[0].mxu0
        %v719 = vadd.f32 0.0, %v718
        %v720 = vpop.f32.mrb[0].mxu0
        %v721 = vadd.f32 0.0, %v720
        %722 = vmatprep.mubr.bf16.mxu0 0
        %723 = vmatmul.mubr.bf16.gmra.mrb[0].mxu0 %v538
        %v724 = vpop.f32.mrb[0].mxu0
        %v725 = vadd.f32 0.0, %v724
        %v726 = vpop.f32.mrb[0].mxu0
        %v727 = vadd.f32 0.0, %v726
        %v728 = vpop.f32.mrb[0].mxu0
        %v729 = vadd.f32 0.0, %v728
        %v730 = vpop.f32.mrb[0].mxu0
        %v731 = vadd.f32 0.0, %v730
        %732 = vmatprep.mubr.bf16.mxu0 0
        %733 = vmatmul.mubr.bf16.gmra.mrb[0].mxu0 %v541
        %v734 = vpop.f32.mrb[0].mxu0
        %v735 = vadd.f32 0.0, %v734
        %v736 = vpop.f32.mrb[0].mxu0
        %v737 = vadd.f32 0.0, %v736
        %v738 = vpop.f32.mrb[0].mxu0
        %v739 = vadd.f32 0.0, %v738
        %v740 = vpop.f32.mrb[0].mxu0
        %v741 = vadd.f32 0.0, %v740
        %742 = vdwg.mxu0
        %v744 = vunpack.c.l.b16 %v403
        %v745 = vpack.c.b16 %v744, %v468
        %v770 = vunpack.c.l.b16 %v404
        %v771 = vunpack.c.h.b16 %v404
        %v772 = vunpack.c.l.b16 %v405
        %v773 = vunpack.c.h.b16 %v405
        %v774 = vunpack.c.l.b16 %v406
        %v775 = vunpack.c.h.b16 %v406
        %v776 = vunpack.c.l.b16 %v407
        %v777 = vunpack.c.h.b16 %v407
        %v778 = vunpack.c.l.b16 %v408
        %v779 = vunpack.c.h.b16 %v408
        %v780 = vunpack.c.l.b16 %v409
        %v781 = vunpack.c.h.b16 %v409
        %v782 = vunpack.c.l.b16 %v410
        %v783 = vunpack.c.h.b16 %v410
        %v784 = vunpack.c.l.b16 %v411
        %v785 = vunpack.c.h.b16 %v411
        %v786 = vunpack.c.l.b16 %v412
        %v787 = vunpack.c.h.b16 %v412
        %v788 = vunpack.c.l.b16 %v413
        %v789 = vunpack.c.h.b16 %v413
        %v790 = vunpack.c.l.b16 %v414
        %v791 = vunpack.c.h.b16 %v414
        %v792 = vunpack.c.l.b16 %v415
        %v793 = vunpack.c.h.b16 %v415
        %v794 = vunpack.c.l.b16 %v416
        %v795 = vunpack.c.h.b16 %v416
        %v796 = vunpack.c.l.b16 %v417
        %v797 = vunpack.c.h.b16 %v417
        %v798 = vunpack.c.l.b16 %v418
        %v799 = vunpack.c.h.b16 %v418
        %v800 = vunpack.c.l.b16 %v419
        %v801 = vunpack.c.h.b16 %v419
        %v802 = vpack.c.b16 %v772, %v770
        %v803 = vpack.c.b16 %v773, %v771
        %v804 = vpack.c.b16 %v776, %v774
        %v805 = vpack.c.b16 %v777, %v775
        %v806 = vpack.c.b16 %v780, %v778
        %v807 = vpack.c.b16 %v781, %v779
        %v808 = vpack.c.b16 %v784, %v782
        %v809 = vpack.c.b16 %v785, %v783
        %v810 = vpack.c.b16 %v788, %v786
        %v811 = vpack.c.b16 %v789, %v787
        %v812 = vpack.c.b16 %v792, %v790
        %v813 = vpack.c.b16 %v793, %v791
        %v814 = vpack.c.b16 %v796, %v794
        %v815 = vpack.c.b16 %v797, %v795
        %v816 = vpack.c.b16 %v800, %v798
        %v817 = vpack.c.b16 %v801, %v799
        %834 = vmatprep.subr.bf16.mxu0 %v803
        %835 = vmatpush1.bf16.msra.mxu0 %v802
        %836 = vmatprep.subr.bf16.mxu0 %v805
        %837 = vmatpush1.bf16.msra.mxu0 %v804
        %838 = vmatprep.subr.bf16.mxu0 %v807
        %839 = vmatpush1.bf16.msra.mxu0 %v806
        %840 = vmatprep.subr.bf16.mxu0 %v809
        %841 = vmatpush1.bf16.msra.mxu0 %v808
        %842 = vmatprep.subr.bf16.mxu0 %v811
        %843 = vmatpush1.bf16.msra.mxu0 %v810
        %844 = vmatprep.subr.bf16.mxu0 %v813
        %845 = vmatpush1.bf16.msra.mxu0 %v812
        %846 = vmatprep.subr.bf16.mxu0 %v815
        %847 = vmatpush1.bf16.msra.mxu0 %v814
        %848 = vmatprep.subr.bf16.mxu0 %v817
        %849 = vmatpush1.bf16.msra.mxu0 %v816
        %850 = vmatprep.subr.bf16.mxu0 0
        %851 = vmatpush1.bf16.msra.mxu0 0
        %852 = vmatprep.subr.bf16.mxu0 0
        %853 = vmatpush1.bf16.msra.mxu0 0
        %854 = vmatprep.subr.bf16.mxu0 0
        %855 = vmatpush1.bf16.msra.mxu0 0
        %856 = vmatprep.subr.bf16.mxu0 0
        %857 = vmatpush1.bf16.msra.mxu0 0
        %858 = vmatprep.subr.bf16.mxu0 0
        %859 = vmatpush1.bf16.msra.mxu0 0
        %860 = vmatprep.subr.bf16.mxu0 0
        %861 = vmatpush1.bf16.msra.mxu0 0
        %862 = vmatprep.subr.bf16.mxu0 0
        %863 = vmatpush1.bf16.msra.mxu0 0
        %864 = vmatprep.subr.bf16.mxu0 0
        %865 = vmatpush1.bf16.msra.mxu0 0
        %866 = vmatprep.mubr.bf16.mxu0 0
        %867 = vmatmul.mubr.bf16.gmra.mrb[0].mxu0 %v470
        %v868 = vpop.f32.mrb[0].mxu0
        %v869 = vadd.f32 %v665, %v868
        %v870 = vpop.f32.mrb[0].mxu0
        %v871 = vadd.f32 %v667, %v870
        %v872 = vpop.f32.mrb[0].mxu0
        %v873 = vadd.f32 %v669, %v872
        %v874 = vpop.f32.mrb[0].mxu0
        %v875 = vadd.f32 %v671, %v874
        %876 = vmatprep.mubr.bf16.mxu0 0
        %877 = vmatmul.mubr.bf16.gmra.mrb[0].mxu0 %v471
        %v878 = vpop.f32.mrb[0].mxu0
        %v879 = vadd.f32 %v675, %v878
        %v880 = vpop.f32.mrb[0].mxu0
        %v881 = vadd.f32 %v677, %v880
        %v882 = vpop.f32.mrb[0].mxu0
        %v883 = vadd.f32 %v679, %v882
        %v884 = vpop.f32.mrb[0].mxu0
        %v885 = vadd.f32 %v681, %v884
        %886 = vmatprep.mubr.bf16.mxu0 0
        %887 = vmatmul.mubr.bf16.gmra.mrb[0].mxu0 %v472
        %v888 = vpop.f32.mrb[0].mxu0
        %v889 = vadd.f32 %v685, %v888
        %v890 = vpop.f32.mrb[0].mxu0
        %v891 = vadd.f32 %v687, %v890
        %v892 = vpop.f32.mrb[0].mxu0
        %v893 = vadd.f32 %v689, %v892
        %v894 = vpop.f32.mrb[0].mxu0
        %v895 = vadd.f32 %v691, %v894
        %896 = vmatprep.mubr.bf16.mxu0 0
        %897 = vmatmul.mubr.bf16.gmra.mrb[0].mxu0 %v473
        %v898 = vpop.f32.mrb[0].mxu0
        %v899 = vadd.f32 %v695, %v898
        %v900 = vpop.f32.mrb[0].mxu0
        %v901 = vadd.f32 %v697, %v900
        %v902 = vpop.f32.mrb[0].mxu0
        %v903 = vadd.f32 %v699, %v902
        %v904 = vpop.f32.mrb[0].mxu0
        %v905 = vadd.f32 %v701, %v904
        %906 = vmatprep.mubr.bf16.mxu0 0
        %907 = vmatmul.mubr.bf16.gmra.mrb[0].mxu0 %v474
        %v908 = vpop.f32.mrb[0].mxu0
        %v909 = vadd.f32 %v705, %v908
        %v910 = vpop.f32.mrb[0].mxu0
        %v911 = vadd.f32 %v707, %v910
        %v912 = vpop.f32.mrb[0].mxu0
        %v913 = vadd.f32 %v709, %v912
        %v914 = vpop.f32.mrb[0].mxu0
        %v915 = vadd.f32 %v711, %v914
        %916 = vmatprep.mubr.bf16.mxu0 0
        %917 = vmatmul.mubr.bf16.gmra.mrb[0].mxu0 %v475
        %v918 = vpop.f32.mrb[0].mxu0
        %v919 = vadd.f32 %v715, %v918
        %v920 = vpop.f32.mrb[0].mxu0
        %v921 = vadd.f32 %v717, %v920
        %v922 = vpop.f32.mrb[0].mxu0
        %v923 = vadd.f32 %v719, %v922
        %v924 = vpop.f32.mrb[0].mxu0
        %v925 = vadd.f32 %v721, %v924
        %926 = vmatprep.mubr.bf16.mxu0 0
        %927 = vmatmul.mubr.bf16.gmra.mrb[0].mxu0 %v476
        %v928 = vpop.f32.mrb[0].mxu0
        %v929 = vadd.f32 %v725, %v928
        %v930 = vpop.f32.mrb[0].mxu0
        %v931 = vadd.f32 %v727, %v930
        %v932 = vpop.f32.mrb[0].mxu0
        %v933 = vadd.f32 %v729, %v932
        %v934 = vpop.f32.mrb[0].mxu0
        %v935 = vadd.f32 %v731, %v934
        %936 = vmatprep.mubr.bf16.mxu0 0
        %937 = vmatmul.mubr.bf16.gmra.mrb[0].mxu0 %v745
        %v938 = vpop.f32.mrb[0].mxu0
        %v939 = vadd.f32 %v735, %v938
        %v940 = vpop.f32.mrb[0].mxu0
        %v941 = vadd.f32 %v737, %v940
        %v942 = vpop.f32.mrb[0].mxu0
        %v943 = vadd.f32 %v739, %v942
        %v944 = vpop.f32.mrb[0].mxu0
        %v945 = vadd.f32 %v741, %v944
        %946 = vdwg.mxu0
        %v947 = vld [vmem:[%s385] sm:$0xe]
        %s948 = scalar_lea.vmem %s1, 256
        %v949 = vld [vmem:[%s948] sm:$0xff]
        %v950 = vld [vmem:[%s948 + $0x8] sm:$0xff]
        %v951 = vld [vmem:[%s948 + $0x10] sm:$0xff]
        %v952 = vld [vmem:[%s948 + $0x18] sm:$0xff]
        %v953 = vld [vmem:[%s948 + $0x20] sm:$0xff]
        %v954 = vld [vmem:[%s948 + $0x28] sm:$0xff]
        %v955 = vld [vmem:[%s948 + $0x30] sm:$0xff]
        %v956 = vld [vmem:[%s948 + $0x38] sm:$0xff]
        %v957 = vld [vmem:[%s948 + $0x40] sm:$0xff]
        %v958 = vld [vmem:[%s948 + $0x48] sm:$0xff]
        %v959 = vld [vmem:[%s948 + $0x50] sm:$0xff]
        %v960 = vld [vmem:[%s948 + $0x58] sm:$0xff]
        %v961 = vld [vmem:[%s948 + $0x60] sm:$0xff]
        %v962 = vld [vmem:[%s948 + $0x68] sm:$0xff]
        %v963 = vld [vmem:[%s948 + $0x70] sm:$0xff]
        %v964 = vld [vmem:[%s948 + $0x78] sm:$0xff]
        %v966 = vunpack.c.l.b16 %v947
        %v967 = vpack.c.b16 %v455, %v966
        %vm968 = vcmask 1046528
        %v969 = vrot.slane %v967, 1
        %v970 = vrot.slane %v471, 1
        %v971 = vsel %vm968, %v969, %v970
        %v972 = vrot.slane %v472, 1
        %v973 = vsel %vm968, %v970, %v972
        %v974 = vrot.slane %v473, 1
        %v975 = vsel %vm968, %v972, %v974
        %v976 = vrot.slane %v474, 1
        %v977 = vsel %vm968, %v974, %v976
        %v978 = vrot.slane %v475, 1
        %v979 = vsel %vm968, %v976, %v978
        %v980 = vrot.slane %v476, 1
        %v981 = vsel %vm968, %v978, %v980
        %v982 = vrot.slane %v477, 1
        %v983 = vsel %vm968, %v980, %v982
        %v1008 = vunpack.c.l.b16 %v949
        %v1009 = vunpack.c.h.b16 %v949
        %v1010 = vunpack.c.l.b16 %v950
        %v1011 = vunpack.c.h.b16 %v950
        %v1012 = vunpack.c.l.b16 %v951
        %v1013 = vunpack.c.h.b16 %v951
        %v1014 = vunpack.c.l.b16 %v952
        %v1015 = vunpack.c.h.b16 %v952
        %v1016 = vunpack.c.l.b16 %v953
        %v1017 = vunpack.c.h.b16 %v953
        %v1018 = vunpack.c.l.b16 %v954
        %v1019 = vunpack.c.h.b16 %v954
        %v1020 = vunpack.c.l.b16 %v955
        %v1021 = vunpack.c.h.b16 %v955
        %v1022 = vunpack.c.l.b16 %v956
        %v1023 = vunpack.c.h.b16 %v956
        %v1024 = vunpack.c.l.b16 %v957
        %v1025 = vunpack.c.h.b16 %v957
        %v1026 = vunpack.c.l.b16 %v958
        %v1027 = vunpack.c.h.b16 %v958
        %v1028 = vunpack.c.l.b16 %v959
        %v1029 = vunpack.c.h.b16 %v959
        %v1030 = vunpack.c.l.b16 %v960
        %v1031 = vunpack.c.h.b16 %v960
        %v1032 = vunpack.c.l.b16 %v961
        %v1033 = vunpack.c.h.b16 %v961
        %v1034 = vunpack.c.l.b16 %v962
        %v1035 = vunpack.c.h.b16 %v962
        %v1036 = vunpack.c.l.b16 %v963
        %v1037 = vunpack.c.h.b16 %v963
        %v1038 = vunpack.c.l.b16 %v964
        %v1039 = vunpack.c.h.b16 %v964
        %v1040 = vpack.c.b16 %v1010, %v1008
        %v1041 = vpack.c.b16 %v1011, %v1009
        %v1042 = vpack.c.b16 %v1014, %v1012
        %v1043 = vpack.c.b16 %v1015, %v1013
        %v1044 = vpack.c.b16 %v1018, %v1016
        %v1045 = vpack.c.b16 %v1019, %v1017
        %v1046 = vpack.c.b16 %v1022, %v1020
        %v1047 = vpack.c.b16 %v1023, %v1021
        %v1048 = vpack.c.b16 %v1026, %v1024
        %v1049 = vpack.c.b16 %v1027, %v1025
        %v1050 = vpack.c.b16 %v1030, %v1028
        %v1051 = vpack.c.b16 %v1031, %v1029
        %v1052 = vpack.c.b16 %v1034, %v1032
        %v1053 = vpack.c.b16 %v1035, %v1033
        %v1054 = vpack.c.b16 %v1038, %v1036
        %v1055 = vpack.c.b16 %v1039, %v1037
        %1072 = vmatprep.subr.bf16.mxu0 %v1041
        %1073 = vmatpush1.bf16.msra.mxu0 %v1040
        %1074 = vmatprep.subr.bf16.mxu0 %v1043
        %1075 = vmatpush1.bf16.msra.mxu0 %v1042
        %1076 = vmatprep.subr.bf16.mxu0 %v1045
        %1077 = vmatpush1.bf16.msra.mxu0 %v1044
        %1078 = vmatprep.subr.bf16.mxu0 %v1047
        %1079 = vmatpush1.bf16.msra.mxu0 %v1046
        %1080 = vmatprep.subr.bf16.mxu0 %v1049
        %1081 = vmatpush1.bf16.msra.mxu0 %v1048
        %1082 = vmatprep.subr.bf16.mxu0 %v1051
        %1083 = vmatpush1.bf16.msra.mxu0 %v1050
        %1084 = vmatprep.subr.bf16.mxu0 %v1053
        %1085 = vmatpush1.bf16.msra.mxu0 %v1052
        %1086 = vmatprep.subr.bf16.mxu0 %v1055
        %1087 = vmatpush1.bf16.msra.mxu0 %v1054
        %1088 = vmatprep.subr.bf16.mxu0 0
        %1089 = vmatpush1.bf16.msra.mxu0 0
        %1090 = vmatprep.subr.bf16.mxu0 0
        %1091 = vmatpush1.bf16.msra.mxu0 0
        %1092 = vmatprep.subr.bf16.mxu0 0
        %1093 = vmatpush1.bf16.msra.mxu0 0
        %1094 = vmatprep.subr.bf16.mxu0 0
        %1095 = vmatpush1.bf16.msra.mxu0 0
        %1096 = vmatprep.subr.bf16.mxu0 0
        %1097 = vmatpush1.bf16.msra.mxu0 0
        %1098 = vmatprep.subr.bf16.mxu0 0
        %1099 = vmatpush1.bf16.msra.mxu0 0
        %1100 = vmatprep.subr.bf16.mxu0 0
        %1101 = vmatpush1.bf16.msra.mxu0 0
        %1102 = vmatprep.subr.bf16.mxu0 0
        %1103 = vmatpush1.bf16.msra.mxu0 0
        %1104 = vmatprep.mubr.bf16.mxu0 0
        %1105 = vmatmul.mubr.bf16.gmra.mrb[0].mxu0 %v971
        %v1106 = vpop.f32.mrb[0].mxu0
        %v1107 = vadd.f32 0.0, %v1106
        %v1108 = vpop.f32.mrb[0].mxu0
        %v1109 = vadd.f32 0.0, %v1108
        %v1110 = vpop.f32.mrb[0].mxu0
        %v1111 = vadd.f32 0.0, %v1110
        %v1112 = vpop.f32.mrb[0].mxu0
        %v1113 = vadd.f32 0.0, %v1112
        %1114 = vmatprep.mubr.bf16.mxu0 0
        %1115 = vmatmul.mubr.bf16.gmra.mrb[0].mxu0 %v973
        %v1116 = vpop.f32.mrb[0].mxu0
        %v1117 = vadd.f32 0.0, %v1116
        %v1118 = vpop.f32.mrb[0].mxu0
        %v1119 = vadd.f32 0.0, %v1118
        %v1120 = vpop.f32.mrb[0].mxu0
        %v1121 = vadd.f32 0.0, %v1120
        %v1122 = vpop.f32.mrb[0].mxu0
        %v1123 = vadd.f32 0.0, %v1122
        %1124 = vmatprep.mubr.bf16.mxu0 0
        %1125 = vmatmul.mubr.bf16.gmra.mrb[0].mxu0 %v975
        %v1126 = vpop.f32.mrb[0].mxu0
        %v1127 = vadd.f32 0.0, %v1126
        %v1128 = vpop.f32.mrb[0].mxu0
        %v1129 = vadd.f32 0.0, %v1128
        %v1130 = vpop.f32.mrb[0].mxu0
        %v1131 = vadd.f32 0.0, %v1130
        %v1132 = vpop.f32.mrb[0].mxu0
        %v1133 = vadd.f32 0.0, %v1132
        %1134 = vmatprep.mubr.bf16.mxu0 0
        %1135 = vmatmul.mubr.bf16.gmra.mrb[0].mxu0 %v977
        %v1136 = vpop.f32.mrb[0].mxu0
        %v1137 = vadd.f32 0.0, %v1136
        %v1138 = vpop.f32.mrb[0].mxu0
        %v1139 = vadd.f32 0.0, %v1138
        %v1140 = vpop.f32.mrb[0].mxu0
        %v1141 = vadd.f32 0.0, %v1140
        %v1142 = vpop.f32.mrb[0].mxu0
        %v1143 = vadd.f32 0.0, %v1142
        %1144 = vmatprep.mubr.bf16.mxu0 0
        %1145 = vmatmul.mubr.bf16.gmra.mrb[0].mxu0 %v979
        %v1146 = vpop.f32.mrb[0].mxu0
        %v1147 = vadd.f32 0.0, %v1146
        %v1148 = vpop.f32.mrb[0].mxu0
        %v1149 = vadd.f32 0.0, %v1148
        %v1150 = vpop.f32.mrb[0].mxu0
        %v1151 = vadd.f32 0.0, %v1150
        %v1152 = vpop.f32.mrb[0].mxu0
        %v1153 = vadd.f32 0.0, %v1152
        %1154 = vmatprep.mubr.bf16.mxu0 0
        %1155 = vmatmul.mubr.bf16.gmra.mrb[0].mxu0 %v981
        %v1156 = vpop.f32.mrb[0].mxu0
        %v1157 = vadd.f32 0.0, %v1156
        %v1158 = vpop.f32.mrb[0].mxu0
        %v1159 = vadd.f32 0.0, %v1158
        %v1160 = vpop.f32.mrb[0].mxu0
        %v1161 = vadd.f32 0.0, %v1160
        %v1162 = vpop.f32.mrb[0].mxu0
        %v1163 = vadd.f32 0.0, %v1162
        %1164 = vmatprep.mubr.bf16.mxu0 0
        %1165 = vmatmul.mubr.bf16.gmra.mrb[0].mxu0 %v983
        %v1166 = vpop.f32.mrb[0].mxu0
        %v1167 = vadd.f32 0.0, %v1166
        %v1168 = vpop.f32.mrb[0].mxu0
        %v1169 = vadd.f32 0.0, %v1168
        %v1170 = vpop.f32.mrb[0].mxu0
        %v1171 = vadd.f32 0.0, %v1170
        %v1172 = vpop.f32.mrb[0].mxu0
        %v1173 = vadd.f32 0.0, %v1172
        %1174 = vmatprep.mubr.bf16.mxu0 0
        %1175 = vmatmul.mubr.bf16.gmra.mrb[0].mxu0 %v982
        %v1176 = vpop.f32.mrb[0].mxu0
        %v1177 = vadd.f32 0.0, %v1176
        %v1178 = vpop.f32.mrb[0].mxu0
        %v1179 = vadd.f32 0.0, %v1178
        %v1180 = vpop.f32.mrb[0].mxu0
        %v1181 = vadd.f32 0.0, %v1180
        %v1182 = vpop.f32.mrb[0].mxu0
        %v1183 = vadd.f32 0.0, %v1182
        %1184 = vdwg.mxu0
        %v1185 = vadd.f32 %v869, %v1107
        %v1186 = vadd.f32 %v871, %v1109
        %v1187 = vadd.f32 %v873, %v1111
        %v1188 = vadd.f32 %v875, %v1113
        %v1189 = vadd.f32 %v879, %v1117
        %v1190 = vadd.f32 %v881, %v1119
        %v1191 = vadd.f32 %v883, %v1121
        %v1192 = vadd.f32 %v885, %v1123
        %v1193 = vadd.f32 %v889, %v1127
        %v1194 = vadd.f32 %v891, %v1129
        %v1195 = vadd.f32 %v893, %v1131
        %v1196 = vadd.f32 %v895, %v1133
        %v1197 = vadd.f32 %v899, %v1137
        %v1198 = vadd.f32 %v901, %v1139
        %v1199 = vadd.f32 %v903, %v1141
        %v1200 = vadd.f32 %v905, %v1143
        %v1201 = vadd.f32 %v909, %v1147
        %v1202 = vadd.f32 %v911, %v1149
        %v1203 = vadd.f32 %v913, %v1151
        %v1204 = vadd.f32 %v915, %v1153
        %v1205 = vadd.f32 %v919, %v1157
        %v1206 = vadd.f32 %v921, %v1159
        %v1207 = vadd.f32 %v923, %v1161
        %v1208 = vadd.f32 %v925, %v1163
        %v1209 = vadd.f32 %v929, %v1167
        %v1210 = vadd.f32 %v931, %v1169
        %v1211 = vadd.f32 %v933, %v1171
        %v1212 = vadd.f32 %v935, %v1173
        %v1213 = vadd.f32 %v939, %v1177
        %v1214 = vadd.f32 %v941, %v1179
        %v1215 = vadd.f32 %v943, %v1181
        %v1216 = vadd.f32 %v945, %v1183
        %v1217 = vld [vmem:[%s385 + $0x3c] sm:$0xf]
        %s1218 = scalar_lea.vmem %s1, 384
        %v1219 = vld [vmem:[%s1218] sm:$0xff]
        %v1220 = vld [vmem:[%s1218 + $0x8] sm:$0xff]
        %v1221 = vld [vmem:[%s1218 + $0x10] sm:$0xff]
        %v1222 = vld [vmem:[%s1218 + $0x18] sm:$0xff]
        %v1223 = vld [vmem:[%s1218 + $0x20] sm:$0xff]
        %v1224 = vld [vmem:[%s1218 + $0x28] sm:$0xff]
        %v1225 = vld [vmem:[%s1218 + $0x30] sm:$0xff]
        %v1226 = vld [vmem:[%s1218 + $0x38] sm:$0xff]
        %v1227 = vld [vmem:[%s1218 + $0x40] sm:$0xff]
        %v1228 = vld [vmem:[%s1218 + $0x48] sm:$0xff]
        %v1229 = vld [vmem:[%s1218 + $0x50] sm:$0xff]
        %v1230 = vld [vmem:[%s1218 + $0x58] sm:$0xff]
        %v1231 = vld [vmem:[%s1218 + $0x60] sm:$0xff]
        %v1232 = vld [vmem:[%s1218 + $0x68] sm:$0xff]
        %v1233 = vld [vmem:[%s1218 + $0x70] sm:$0xff]
        %v1234 = vld [vmem:[%s1218 + $0x78] sm:$0xff]
        %v1236 = vunpack.c.l.b16 %v1217
        %v1237 = vpack.c.b16 %v1236, %v468
        %vm1238 = vsmask.f32 6400
        %v1240 = vshrl.u32 %v967, 16
        %v1242 = vrot.slane %v1240, 1
        %v1243 = vshll.u32 %v967, 16
        %v1245 = vrot.slane %v1243, 2
        %v1246 = vor.u32 %v1242, %v1245
        %v1247 = vrot.slane %v491, 1
        %v1248 = vrot.slane %v487, 2
        %v1249 = vor.u32 %v1247, %v1248
        %v1250 = vsel %vm1238, %v1246, %v1249
        %v1251 = vrot.slane %v499, 1
        %v1252 = vrot.slane %v495, 2
        %v1253 = vor.u32 %v1251, %v1252
        %v1254 = vsel %vm1238, %v1249, %v1253
        %v1255 = vrot.slane %v507, 1
        %v1256 = vrot.slane %v503, 2
        %v1257 = vor.u32 %v1255, %v1256
        %v1258 = vsel %vm1238, %v1253, %v1257
        %v1259 = vrot.slane %v515, 1
        %v1260 = vrot.slane %v511, 2
        %v1261 = vor.u32 %v1259, %v1260
        %v1262 = vsel %vm1238, %v1257, %v1261
        %v1263 = vrot.slane %v523, 1
        %v1264 = vrot.slane %v519, 2
        %v1265 = vor.u32 %v1263, %v1264
        %v1266 = vsel %vm1238, %v1261, %v1265
        %v1267 = vrot.slane %v531, 1
        %v1268 = vrot.slane %v527, 2
        %v1269 = vor.u32 %v1267, %v1268
        %v1270 = vsel %vm1238, %v1265, %v1269
        %v1272 = vshrl.u32 %v1237, 16
        %v1274 = vrot.slane %v1272, 1
        %v1275 = vshll.u32 %v1237, 16
        %v1277 = vrot.slane %v1275, 2
        %v1278 = vor.u32 %v1274, %v1277
        %v1279 = vsel %vm1238, %v1269, %v1278
        %v1304 = vunpack.c.l.b16 %v1219
        %v1305 = vunpack.c.h.b16 %v1219
        %v1306 = vunpack.c.l.b16 %v1220
        %v1307 = vunpack.c.h.b16 %v1220
        %v1308 = vunpack.c.l.b16 %v1221
        %v1309 = vunpack.c.h.b16 %v1221
        %v1310 = vunpack.c.l.b16 %v1222
        %v1311 = vunpack.c.h.b16 %v1222
        %v1312 = vunpack.c.l.b16 %v1223
        %v1313 = vunpack.c.h.b16 %v1223
        %v1314 = vunpack.c.l.b16 %v1224
        %v1315 = vunpack.c.h.b16 %v1224
        %v1316 = vunpack.c.l.b16 %v1225
        %v1317 = vunpack.c.h.b16 %v1225
        %v1318 = vunpack.c.l.b16 %v1226
        %v1319 = vunpack.c.h.b16 %v1226
        %v1320 = vunpack.c.l.b16 %v1227
        %v1321 = vunpack.c.h.b16 %v1227
        %v1322 = vunpack.c.l.b16 %v1228
        %v1323 = vunpack.c.h.b16 %v1228
        %v1324 = vunpack.c.l.b16 %v1229
        %v1325 = vunpack.c.h.b16 %v1229
        %v1326 = vunpack.c.l.b16 %v1230
        %v1327 = vunpack.c.h.b16 %v1230
        %v1328 = vunpack.c.l.b16 %v1231
        %v1329 = vunpack.c.h.b16 %v1231
        %v1330 = vunpack.c.l.b16 %v1232
        %v1331 = vunpack.c.h.b16 %v1232
        %v1332 = vunpack.c.l.b16 %v1233
        %v1333 = vunpack.c.h.b16 %v1233
        %v1334 = vunpack.c.l.b16 %v1234
        %v1335 = vunpack.c.h.b16 %v1234
        %v1336 = vpack.c.b16 %v1306, %v1304
        %v1337 = vpack.c.b16 %v1307, %v1305
        %v1338 = vpack.c.b16 %v1310, %v1308
        %v1339 = vpack.c.b16 %v1311, %v1309
        %v1340 = vpack.c.b16 %v1314, %v1312
        %v1341 = vpack.c.b16 %v1315, %v1313
        %v1342 = vpack.c.b16 %v1318, %v1316
        %v1343 = vpack.c.b16 %v1319, %v1317
        %v1344 = vpack.c.b16 %v1322, %v1320
        %v1345 = vpack.c.b16 %v1323, %v1321
        %v1346 = vpack.c.b16 %v1326, %v1324
        %v1347 = vpack.c.b16 %v1327, %v1325
        %v1348 = vpack.c.b16 %v1330, %v1328
        %v1349 = vpack.c.b16 %v1331, %v1329
        %v1350 = vpack.c.b16 %v1334, %v1332
        %v1351 = vpack.c.b16 %v1335, %v1333
        %1368 = vmatprep.subr.bf16.mxu0 %v1337
        %1369 = vmatpush1.bf16.msra.mxu0 %v1336
        %1370 = vmatprep.subr.bf16.mxu0 %v1339
        %1371 = vmatpush1.bf16.msra.mxu0 %v1338
        %1372 = vmatprep.subr.bf16.mxu0 %v1341
        %1373 = vmatpush1.bf16.msra.mxu0 %v1340
        %1374 = vmatprep.subr.bf16.mxu0 %v1343
        %1375 = vmatpush1.bf16.msra.mxu0 %v1342
        %1376 = vmatprep.subr.bf16.mxu0 %v1345
        %1377 = vmatpush1.bf16.msra.mxu0 %v1344
        %1378 = vmatprep.subr.bf16.mxu0 %v1347
        %1379 = vmatpush1.bf16.msra.mxu0 %v1346
        %1380 = vmatprep.subr.bf16.mxu0 %v1349
        %1381 = vmatpush1.bf16.msra.mxu0 %v1348
        %1382 = vmatprep.subr.bf16.mxu0 %v1351
        %1383 = vmatpush1.bf16.msra.mxu0 %v1350
        %1384 = vmatprep.subr.bf16.mxu0 0
        %1385 = vmatpush1.bf16.msra.mxu0 0
        %1386 = vmatprep.subr.bf16.mxu0 0
        %1387 = vmatpush1.bf16.msra.mxu0 0
        %1388 = vmatprep.subr.bf16.mxu0 0
        %1389 = vmatpush1.bf16.msra.mxu0 0
        %1390 = vmatprep.subr.bf16.mxu0 0
        %1391 = vmatpush1.bf16.msra.mxu0 0
        %1392 = vmatprep.subr.bf16.mxu0 0
        %1393 = vmatpush1.bf16.msra.mxu0 0
        %1394 = vmatprep.subr.bf16.mxu0 0
        %1395 = vmatpush1.bf16.msra.mxu0 0
        %1396 = vmatprep.subr.bf16.mxu0 0
        %1397 = vmatpush1.bf16.msra.mxu0 0
        %1398 = vmatprep.subr.bf16.mxu0 0
        %1399 = vmatpush1.bf16.msra.mxu0 0
        %1400 = vmatprep.mubr.bf16.mxu0 0
        %1401 = vmatmul.mubr.bf16.gmra.mrb[0].mxu0 %v1250
        %v1402 = vpop.f32.mrb[0].mxu0
        %v1403 = vadd.f32 0.0, %v1402
        %v1404 = vpop.f32.mrb[0].mxu0
        %v1405 = vadd.f32 0.0, %v1404
        %v1406 = vpop.f32.mrb[0].mxu0
        %v1407 = vadd.f32 0.0, %v1406
        %v1408 = vpop.f32.mrb[0].mxu0
        %v1409 = vadd.f32 0.0, %v1408
        %1410 = vmatprep.mubr.bf16.mxu0 0
        %1411 = vmatmul.mubr.bf16.gmra.mrb[0].mxu0 %v1254
        %v1412 = vpop.f32.mrb[0].mxu0
        %v1413 = vadd.f32 0.0, %v1412
        %v1414 = vpop.f32.mrb[0].mxu0
        %v1415 = vadd.f32 0.0, %v1414
        %v1416 = vpop.f32.mrb[0].mxu0
        %v1417 = vadd.f32 0.0, %v1416
        %v1418 = vpop.f32.mrb[0].mxu0
        %v1419 = vadd.f32 0.0, %v1418
        %1420 = vmatprep.mubr.bf16.mxu0 0
        %1421 = vmatmul.mubr.bf16.gmra.mrb[0].mxu0 %v1258
        %v1422 = vpop.f32.mrb[0].mxu0
        %v1423 = vadd.f32 0.0, %v1422
        %v1424 = vpop.f32.mrb[0].mxu0
        %v1425 = vadd.f32 0.0, %v1424
        %v1426 = vpop.f32.mrb[0].mxu0
        %v1427 = vadd.f32 0.0, %v1426
        %v1428 = vpop.f32.mrb[0].mxu0
        %v1429 = vadd.f32 0.0, %v1428
        %1430 = vmatprep.mubr.bf16.mxu0 0
        %1431 = vmatmul.mubr.bf16.gmra.mrb[0].mxu0 %v1262
        %v1432 = vpop.f32.mrb[0].mxu0
        %v1433 = vadd.f32 0.0, %v1432
        %v1434 = vpop.f32.mrb[0].mxu0
        %v1435 = vadd.f32 0.0, %v1434
        %v1436 = vpop.f32.mrb[0].mxu0
        %v1437 = vadd.f32 0.0, %v1436
        %v1438 = vpop.f32.mrb[0].mxu0
        %v1439 = vadd.f32 0.0, %v1438
        %1440 = vmatprep.mubr.bf16.mxu0 0
        %1441 = vmatmul.mubr.bf16.gmra.mrb[0].mxu0 %v1266
        %v1442 = vpop.f32.mrb[0].mxu0
        %v1443 = vadd.f32 0.0, %v1442
        %v1444 = vpop.f32.mrb[0].mxu0
        %v1445 = vadd.f32 0.0, %v1444
        %v1446 = vpop.f32.mrb[0].mxu0
        %v1447 = vadd.f32 0.0, %v1446
        %v1448 = vpop.f32.mrb[0].mxu0
        %v1449 = vadd.f32 0.0, %v1448
        %1450 = vmatprep.mubr.bf16.mxu0 0
        %1451 = vmatmul.mubr.bf16.gmra.mrb[0].mxu0 %v1270
        %v1452 = vpop.f32.mrb[0].mxu0
        %v1453 = vadd.f32 0.0, %v1452
        %v1454 = vpop.f32.mrb[0].mxu0
        %v1455 = vadd.f32 0.0, %v1454
        %v1456 = vpop.f32.mrb[0].mxu0
        %v1457 = vadd.f32 0.0, %v1456
        %v1458 = vpop.f32.mrb[0].mxu0
        %v1459 = vadd.f32 0.0, %v1458
        %1460 = vmatprep.mubr.bf16.mxu0 0
        %1461 = vmatmul.mubr.bf16.gmra.mrb[0].mxu0 %v1279
        %v1462 = vpop.f32.mrb[0].mxu0
        %v1463 = vadd.f32 0.0, %v1462
        %v1464 = vpop.f32.mrb[0].mxu0
        %v1465 = vadd.f32 0.0, %v1464
        %v1466 = vpop.f32.mrb[0].mxu0
        %v1467 = vadd.f32 0.0, %v1466
        %v1468 = vpop.f32.mrb[0].mxu0
        %v1469 = vadd.f32 0.0, %v1468
        %1470 = vmatprep.mubr.bf16.mxu0 0
        %1471 = vmatmul.mubr.bf16.gmra.mrb[0].mxu0 %v1278
        %v1472 = vpop.f32.mrb[0].mxu0
        %v1473 = vadd.f32 0.0, %v1472
        %v1474 = vpop.f32.mrb[0].mxu0
        %v1475 = vadd.f32 0.0, %v1474
        %v1476 = vpop.f32.mrb[0].mxu0
        %v1477 = vadd.f32 0.0, %v1476
        %v1478 = vpop.f32.mrb[0].mxu0
        %v1479 = vadd.f32 0.0, %v1478
        %1480 = vdwg.mxu0
        %v1481 = vadd.f32 %v1185, %v1403
        %v1482 = vadd.f32 %v1186, %v1405
        %v1483 = vadd.f32 %v1187, %v1407
        %v1484 = vadd.f32 %v1188, %v1409
        %v1485 = vadd.f32 %v1189, %v1413
        %v1486 = vadd.f32 %v1190, %v1415
        %v1487 = vadd.f32 %v1191, %v1417
        %v1488 = vadd.f32 %v1192, %v1419
        %v1489 = vadd.f32 %v1193, %v1423
        %v1490 = vadd.f32 %v1194, %v1425
        %v1491 = vadd.f32 %v1195, %v1427
        %v1492 = vadd.f32 %v1196, %v1429
        %v1493 = vadd.f32 %v1197, %v1433
        %v1494 = vadd.f32 %v1198, %v1435
        %v1495 = vadd.f32 %v1199, %v1437
        %v1496 = vadd.f32 %v1200, %v1439
        %v1497 = vadd.f32 %v1201, %v1443
        %v1498 = vadd.f32 %v1202, %v1445
        %v1499 = vadd.f32 %v1203, %v1447
        %v1500 = vadd.f32 %v1204, %v1449
        %v1501 = vadd.f32 %v1205, %v1453
        %v1502 = vadd.f32 %v1206, %v1455
        %v1503 = vadd.f32 %v1207, %v1457
        %v1504 = vadd.f32 %v1208, %v1459
        %v1505 = vadd.f32 %v1209, %v1463
        %v1506 = vadd.f32 %v1210, %v1465
        %v1507 = vadd.f32 %v1211, %v1467
        %v1508 = vadd.f32 %v1212, %v1469
        %v1509 = vadd.f32 %v1213, %v1473
        %v1510 = vadd.f32 %v1214, %v1475
        %v1511 = vadd.f32 %v1215, %v1477
        %v1512 = vadd.f32 %v1216, %v1479
        %v1513 = vld [vmem:[%s385] sm:$0xc]
        %s1514 = scalar_lea.vmem %s1, 512
        %v1515 = vld [vmem:[%s1514] sm:$0xff]
        %v1516 = vld [vmem:[%s1514 + $0x8] sm:$0xff]
        %v1517 = vld [vmem:[%s1514 + $0x10] sm:$0xff]
        %v1518 = vld [vmem:[%s1514 + $0x18] sm:$0xff]
        %v1519 = vld [vmem:[%s1514 + $0x20] sm:$0xff]
        %v1520 = vld [vmem:[%s1514 + $0x28] sm:$0xff]
        %v1521 = vld [vmem:[%s1514 + $0x30] sm:$0xff]
        %v1522 = vld [vmem:[%s1514 + $0x38] sm:$0xff]
        %v1523 = vld [vmem:[%s1514 + $0x40] sm:$0xff]
        %v1524 = vld [vmem:[%s1514 + $0x48] sm:$0xff]
        %v1525 = vld [vmem:[%s1514 + $0x50] sm:$0xff]
        %v1526 = vld [vmem:[%s1514 + $0x58] sm:$0xff]
        %v1527 = vld [vmem:[%s1514 + $0x60] sm:$0xff]
        %v1528 = vld [vmem:[%s1514 + $0x68] sm:$0xff]
        %v1529 = vld [vmem:[%s1514 + $0x70] sm:$0xff]
        %v1530 = vld [vmem:[%s1514 + $0x78] sm:$0xff]
        %v1532 = vunpack.c.l.b16 %v1513
        %v1533 = vpack.c.b16 %v455, %v1532
        %vm1534 = vcmask 1045504
        %v1535 = vrot.slane %v1533, 2
        %v1536 = vrot.slane %v471, 2
        %v1537 = vsel %vm1534, %v1535, %v1536
        %v1538 = vrot.slane %v472, 2
        %v1539 = vsel %vm1534, %v1536, %v1538
        %v1540 = vrot.slane %v473, 2
        %v1541 = vsel %vm1534, %v1538, %v1540
        %v1542 = vrot.slane %v474, 2
        %v1543 = vsel %vm1534, %v1540, %v1542
        %v1544 = vrot.slane %v475, 2
        %v1545 = vsel %vm1534, %v1542, %v1544
        %v1546 = vrot.slane %v476, 2
        %v1547 = vsel %vm1534, %v1544, %v1546
        %v1548 = vrot.slane %v1237, 2
        %v1549 = vsel %vm1534, %v1546, %v1548
        %v1574 = vunpack.c.l.b16 %v1515
        %v1575 = vunpack.c.h.b16 %v1515
        %v1576 = vunpack.c.l.b16 %v1516
        %v1577 = vunpack.c.h.b16 %v1516
        %v1578 = vunpack.c.l.b16 %v1517
        %v1579 = vunpack.c.h.b16 %v1517
        %v1580 = vunpack.c.l.b16 %v1518
        %v1581 = vunpack.c.h.b16 %v1518
        %v1582 = vunpack.c.l.b16 %v1519
        %v1583 = vunpack.c.h.b16 %v1519
        %v1584 = vunpack.c.l.b16 %v1520
        %v1585 = vunpack.c.h.b16 %v1520
        %v1586 = vunpack.c.l.b16 %v1521
        %v1587 = vunpack.c.h.b16 %v1521
        %v1588 = vunpack.c.l.b16 %v1522
        %v1589 = vunpack.c.h.b16 %v1522
        %v1590 = vunpack.c.l.b16 %v1523
        %v1591 = vunpack.c.h.b16 %v1523
        %v1592 = vunpack.c.l.b16 %v1524
        %v1593 = vunpack.c.h.b16 %v1524
        %v1594 = vunpack.c.l.b16 %v1525
        %v1595 = vunpack.c.h.b16 %v1525
        %v1596 = vunpack.c.l.b16 %v1526
        %v1597 = vunpack.c.h.b16 %v1526
        %v1598 = vunpack.c.l.b16 %v1527
        %v1599 = vunpack.c.h.b16 %v1527
        %v1600 = vunpack.c.l.b16 %v1528
        %v1601 = vunpack.c.h.b16 %v1528
        %v1602 = vunpack.c.l.b16 %v1529
        %v1603 = vunpack.c.h.b16 %v1529
        %v1604 = vunpack.c.l.b16 %v1530
        %v1605 = vunpack.c.h.b16 %v1530
        %v1606 = vpack.c.b16 %v1576, %v1574
        %v1607 = vpack.c.b16 %v1577, %v1575
        %v1608 = vpack.c.b16 %v1580, %v1578
        %v1609 = vpack.c.b16 %v1581, %v1579
        %v1610 = vpack.c.b16 %v1584, %v1582
        %v1611 = vpack.c.b16 %v1585, %v1583
        %v1612 = vpack.c.b16 %v1588, %v1586
        %v1613 = vpack.c.b16 %v1589, %v1587
        %v1614 = vpack.c.b16 %v1592, %v1590
        %v1615 = vpack.c.b16 %v1593, %v1591
        %v1616 = vpack.c.b16 %v1596, %v1594
        %v1617 = vpack.c.b16 %v1597, %v1595
        %v1618 = vpack.c.b16 %v1600, %v1598
        %v1619 = vpack.c.b16 %v1601, %v1599
        %v1620 = vpack.c.b16 %v1604, %v1602
        %v1621 = vpack.c.b16 %v1605, %v1603
        %1638 = vmatprep.subr.bf16.mxu0 %v1607
        %1639 = vmatpush1.bf16.msra.mxu0 %v1606
        %1640 = vmatprep.subr.bf16.mxu0 %v1609
        %1641 = vmatpush1.bf16.msra.mxu0 %v1608
        %1642 = vmatprep.subr.bf16.mxu0 %v1611
        %1643 = vmatpush1.bf16.msra.mxu0 %v1610
        %1644 = vmatprep.subr.bf16.mxu0 %v1613
        %1645 = vmatpush1.bf16.msra.mxu0 %v1612
        %1646 = vmatprep.subr.bf16.mxu0 %v1615
        %1647 = vmatpush1.bf16.msra.mxu0 %v1614
        %1648 = vmatprep.subr.bf16.mxu0 %v1617
        %1649 = vmatpush1.bf16.msra.mxu0 %v1616
        %1650 = vmatprep.subr.bf16.mxu0 %v1619
        %1651 = vmatpush1.bf16.msra.mxu0 %v1618
        %1652 = vmatprep.subr.bf16.mxu0 %v1621
        %1653 = vmatpush1.bf16.msra.mxu0 %v1620
        %1654 = vmatprep.subr.bf16.mxu0 0
        %1655 = vmatpush1.bf16.msra.mxu0 0
        %1656 = vmatprep.subr.bf16.mxu0 0
        %1657 = vmatpush1.bf16.msra.mxu0 0
        %1658 = vmatprep.subr.bf16.mxu0 0
        %1659 = vmatpush1.bf16.msra.mxu0 0
        %1660 = vmatprep.subr.bf16.mxu0 0
        %1661 = vmatpush1.bf16.msra.mxu0 0
        %1662 = vmatprep.subr.bf16.mxu0 0
        %1663 = vmatpush1.bf16.msra.mxu0 0
        %1664 = vmatprep.subr.bf16.mxu0 0
        %1665 = vmatpush1.bf16.msra.mxu0 0
        %1666 = vmatprep.subr.bf16.mxu0 0
        %1667 = vmatpush1.bf16.msra.mxu0 0
        %1668 = vmatprep.subr.bf16.mxu0 0
        %1669 = vmatpush1.bf16.msra.mxu0 0
        %1670 = vmatprep.mubr.bf16.mxu0 0
        %1671 = vmatmul.mubr.bf16.gmra.mrb[0].mxu0 %v1537
        %v1672 = vpop.f32.mrb[0].mxu0
        %v1673 = vadd.f32 0.0, %v1672
        %v1674 = vpop.f32.mrb[0].mxu0
        %v1675 = vadd.f32 0.0, %v1674
        %v1676 = vpop.f32.mrb[0].mxu0
        %v1677 = vadd.f32 0.0, %v1676
        %v1678 = vpop.f32.mrb[0].mxu0
        %v1679 = vadd.f32 0.0, %v1678
        %1680 = vmatprep.mubr.bf16.mxu0 0
        %1681 = vmatmul.mubr.bf16.gmra.mrb[0].mxu0 %v1539
        %v1682 = vpop.f32.mrb[0].mxu0
        %v1683 = vadd.f32 0.0, %v1682
        %v1684 = vpop.f32.mrb[0].mxu0
        %v1685 = vadd.f32 0.0, %v1684
        %v1686 = vpop.f32.mrb[0].mxu0
        %v1687 = vadd.f32 0.0, %v1686
        %v1688 = vpop.f32.mrb[0].mxu0
        %v1689 = vadd.f32 0.0, %v1688
        %1690 = vmatprep.mubr.bf16.mxu0 0
        %1691 = vmatmul.mubr.bf16.gmra.mrb[0].mxu0 %v1541
        %v1692 = vpop.f32.mrb[0].mxu0
        %v1693 = vadd.f32 0.0, %v1692
        %v1694 = vpop.f32.mrb[0].mxu0
        %v1695 = vadd.f32 0.0, %v1694
        %v1696 = vpop.f32.mrb[0].mxu0
        %v1697 = vadd.f32 0.0, %v1696
        %v1698 = vpop.f32.mrb[0].mxu0
        %v1699 = vadd.f32 0.0, %v1698
        %1700 = vmatprep.mubr.bf16.mxu0 0
        %1701 = vmatmul.mubr.bf16.gmra.mrb[0].mxu0 %v1543
        %v1702 = vpop.f32.mrb[0].mxu0
        %v1703 = vadd.f32 0.0, %v1702
        %v1704 = vpop.f32.mrb[0].mxu0
        %v1705 = vadd.f32 0.0, %v1704
        %v1706 = vpop.f32.mrb[0].mxu0
        %v1707 = vadd.f32 0.0, %v1706
        %v1708 = vpop.f32.mrb[0].mxu0
        %v1709 = vadd.f32 0.0, %v1708
        %1710 = vmatprep.mubr.bf16.mxu0 0
        %1711 = vmatmul.mubr.bf16.gmra.mrb[0].mxu0 %v1545
        %v1712 = vpop.f32.mrb[0].mxu0
        %v1713 = vadd.f32 0.0, %v1712
        %v1714 = vpop.f32.mrb[0].mxu0
        %v1715 = vadd.f32 0.0, %v1714
        %v1716 = vpop.f32.mrb[0].mxu0
        %v1717 = vadd.f32 0.0, %v1716
        %v1718 = vpop.f32.mrb[0].mxu0
        %v1719 = vadd.f32 0.0, %v1718
        %1720 = vmatprep.mubr.bf16.mxu0 0
        %1721 = vmatmul.mubr.bf16.gmra.mrb[0].mxu0 %v1547
        %v1722 = vpop.f32.mrb[0].mxu0
        %v1723 = vadd.f32 0.0, %v1722
        %v1724 = vpop.f32.mrb[0].mxu0
        %v1725 = vadd.f32 0.0, %v1724
        %v1726 = vpop.f32.mrb[0].mxu0
        %v1727 = vadd.f32 0.0, %v1726
        %v1728 = vpop.f32.mrb[0].mxu0
        %v1729 = vadd.f32 0.0, %v1728
        %1730 = vmatprep.mubr.bf16.mxu0 0
        %1731 = vmatmul.mubr.bf16.gmra.mrb[0].mxu0 %v1549
        %v1732 = vpop.f32.mrb[0].mxu0
        %v1733 = vadd.f32 0.0, %v1732
        %v1734 = vpop.f32.mrb[0].mxu0
        %v1735 = vadd.f32 0.0, %v1734
        %v1736 = vpop.f32.mrb[0].mxu0
        %v1737 = vadd.f32 0.0, %v1736
        %v1738 = vpop.f32.mrb[0].mxu0
        %v1739 = vadd.f32 0.0, %v1738
        %1740 = vmatprep.mubr.bf16.mxu0 0
        %1741 = vmatmul.mubr.bf16.gmra.mrb[0].mxu0 %v1548
        %v1742 = vpop.f32.mrb[0].mxu0
        %v1743 = vadd.f32 0.0, %v1742
        %v1744 = vpop.f32.mrb[0].mxu0
        %v1745 = vadd.f32 0.0, %v1744
        %v1746 = vpop.f32.mrb[0].mxu0
        %v1747 = vadd.f32 0.0, %v1746
        %v1748 = vpop.f32.mrb[0].mxu0
        %v1749 = vadd.f32 0.0, %v1748
        %1750 = vdwg.mxu0
        %v1751 = vadd.f32 %v1481, %v1673
        %v1752 = vadd.f32 %v1482, %v1675
        %v1753 = vadd.f32 %v1483, %v1677
        %v1754 = vadd.f32 %v1484, %v1679
        %v1755 = vadd.f32 %v1485, %v1683
        %v1756 = vadd.f32 %v1486, %v1685
        %v1757 = vadd.f32 %v1487, %v1687
        %v1758 = vadd.f32 %v1488, %v1689
        %v1759 = vadd.f32 %v1489, %v1693
        %v1760 = vadd.f32 %v1490, %v1695
        %v1761 = vadd.f32 %v1491, %v1697
        %v1762 = vadd.f32 %v1492, %v1699
        %v1763 = vadd.f32 %v1493, %v1703
        %v1764 = vadd.f32 %v1494, %v1705
        %v1765 = vadd.f32 %v1495, %v1707
        %v1766 = vadd.f32 %v1496, %v1709
        %v1767 = vadd.f32 %v1497, %v1713
        %v1768 = vadd.f32 %v1498, %v1715
        %v1769 = vadd.f32 %v1499, %v1717
        %v1770 = vadd.f32 %v1500, %v1719
        %v1771 = vadd.f32 %v1501, %v1723
        %v1772 = vadd.f32 %v1502, %v1725
        %v1773 = vadd.f32 %v1503, %v1727
        %v1774 = vadd.f32 %v1504, %v1729
        %v1775 = vadd.f32 %v1505, %v1733
        %v1776 = vadd.f32 %v1506, %v1735
        %v1777 = vadd.f32 %v1507, %v1737
        %v1778 = vadd.f32 %v1508, %v1739
        %v1779 = vadd.f32 %v1509, %v1743
        %v1780 = vadd.f32 %v1510, %v1745
        %v1781 = vadd.f32 %v1511, %v1747
        %v1782 = vadd.f32 %v1512, %v1749
        %v1783 = vld [vmem:[%s2] sm:$0x3]
        %v1785 = vlaneseq
        %v1786 = vshrl.u32 %v1785, 7
        %v1787 = vsub.s32 0, %v1786
        %v1788 = vrot.slane %v1783, %v1787
        %v1789 = vlaneseq
        %v1790 = vshrl.u32 %v1789, 7
        %v1791 = vsub.s32 1, %v1790
        %v1792 = vrot.slane %v1783, %v1791
        %v1795 = vadd.f32 %v1751, %v1788
        %v1796 = vadd.f32 %v1752, %v1792
        %v1797 = vadd.f32 %v1753, %v1788
        %v1798 = vadd.f32 %v1754, %v1792
        %v1799 = vadd.f32 %v1755, %v1788
        %v1800 = vadd.f32 %v1756, %v1792
        %v1801 = vadd.f32 %v1757, %v1788
        %v1802 = vadd.f32 %v1758, %v1792
        %v1803 = vadd.f32 %v1759, %v1788
        %v1804 = vadd.f32 %v1760, %v1792
        %v1805 = vadd.f32 %v1761, %v1788
        %v1806 = vadd.f32 %v1762, %v1792
        %v1807 = vadd.f32 %v1763, %v1788
        %v1808 = vadd.f32 %v1764, %v1792
        %v1809 = vadd.f32 %v1765, %v1788
        %v1810 = vadd.f32 %v1766, %v1792
        %v1811 = vadd.f32 %v1767, %v1788
        %v1812 = vadd.f32 %v1768, %v1792
        %v1813 = vadd.f32 %v1769, %v1788
        %v1814 = vadd.f32 %v1770, %v1792
        %v1815 = vadd.f32 %v1771, %v1788
        %v1816 = vadd.f32 %v1772, %v1792
        %v1817 = vadd.f32 %v1773, %v1788
        %v1818 = vadd.f32 %v1774, %v1792
        %v1819 = vadd.f32 %v1775, %v1788
        %v1820 = vadd.f32 %v1776, %v1792
        %v1821 = vadd.f32 %v1777, %v1788
        %v1822 = vadd.f32 %v1778, %v1792
        %v1823 = vadd.f32 %v1779, %v1788
        %v1824 = vadd.f32 %v1780, %v1792
        %v1825 = vadd.f32 %v1781, %v1788
        %v1826 = vadd.f32 %v1782, %v1792
        %v1827 = vmax.f32 %v1795, 0.0
        %v1828 = vmax.f32 %v1796, 0.0
        %v1829 = vmax.f32 %v1797, 0.0
        %v1830 = vmax.f32 %v1798, 0.0
        %v1831 = vmax.f32 %v1799, 0.0
        %v1832 = vmax.f32 %v1800, 0.0
        %v1833 = vmax.f32 %v1801, 0.0
        %v1834 = vmax.f32 %v1802, 0.0
        %v1835 = vmax.f32 %v1803, 0.0
        %v1836 = vmax.f32 %v1804, 0.0
        %v1837 = vmax.f32 %v1805, 0.0
        %v1838 = vmax.f32 %v1806, 0.0
        %v1839 = vmax.f32 %v1807, 0.0
        %v1840 = vmax.f32 %v1808, 0.0
        %v1841 = vmax.f32 %v1809, 0.0
        %v1842 = vmax.f32 %v1810, 0.0
        %v1843 = vmax.f32 %v1811, 0.0
        %v1844 = vmax.f32 %v1812, 0.0
        %v1845 = vmax.f32 %v1813, 0.0
        %v1846 = vmax.f32 %v1814, 0.0
        %v1847 = vmax.f32 %v1815, 0.0
        %v1848 = vmax.f32 %v1816, 0.0
        %v1849 = vmax.f32 %v1817, 0.0
        %v1850 = vmax.f32 %v1818, 0.0
        %v1851 = vmax.f32 %v1819, 0.0
        %v1852 = vmax.f32 %v1820, 0.0
        %v1853 = vmax.f32 %v1821, 0.0
        %v1854 = vmax.f32 %v1822, 0.0
        %v1855 = vmax.f32 %v1823, 0.0
        %v1856 = vmax.f32 %v1824, 0.0
        %v1857 = vmax.f32 %v1825, 0.0
        %v1858 = vmax.f32 %v1826, 0.0
        %v1859 = vmax.f32 %v1827, %v1828
        %v1860 = vmax.f32 %v1829, %v1830
        %v1861 = vmax.f32 %v1831, %v1832
        %v1862 = vmax.f32 %v1833, %v1834
        %v1863 = vmax.f32 %v1835, %v1836
        %v1864 = vmax.f32 %v1837, %v1838
        %v1865 = vmax.f32 %v1839, %v1840
        %v1866 = vmax.f32 %v1841, %v1842
        %v1867 = vmax.f32 %v1843, %v1844
        %v1868 = vmax.f32 %v1845, %v1846
        %v1869 = vmax.f32 %v1847, %v1848
        %v1870 = vmax.f32 %v1849, %v1850
        %v1871 = vmax.f32 %v1851, %v1852
        %v1872 = vmax.f32 %v1853, %v1854
        %v1873 = vmax.f32 %v1855, %v1856
        %v1874 = vmax.f32 %v1857, %v1858
        %1875 = vst [vmem:[#allocation2] sm:$0xff] %v1859
        %1876 = vst [vmem:[#allocation2 + $0x8] sm:$0xff] %v1860
        %1877 = vst [vmem:[#allocation2 + $0x10] sm:$0xff] %v1861
        %1878 = vst [vmem:[#allocation2 + $0x18] sm:$0xff] %v1862
        %1879 = vst [vmem:[#allocation2 + $0x20] sm:$0xff] %v1863
        %1880 = vst [vmem:[#allocation2 + $0x28] sm:$0xff] %v1864
        %1881 = vst [vmem:[#allocation2 + $0x30] sm:$0xff] %v1865
        %1882 = vst [vmem:[#allocation2 + $0x38] sm:$0xff] %v1866
        %1883 = vst [vmem:[#allocation2 + $0x40] sm:$0xff] %v1867
        %1884 = vst [vmem:[#allocation2 + $0x48] sm:$0xff] %v1868
        %1885 = vst [vmem:[#allocation2 + $0x50] sm:$0xff] %v1869
        %1886 = vst [vmem:[#allocation2 + $0x58] sm:$0xff] %v1870
        %1887 = vst [vmem:[#allocation2 + $0x60] sm:$0xff] %v1871
        %1888 = vst [vmem:[#allocation2 + $0x68] sm:$0xff] %v1872
        %1889 = vst [vmem:[#allocation2 + $0x70] sm:$0xff] %v1873
        %1890 = vst [vmem:[#allocation2 + $0x78] sm:$0xf] %v1874
        %1891 = vst [vmem:[#allocation2 + $0x7c] sm:$0xf] 0.0
        %v1892 = vld [vmem:[#allocation2] ss:$2 sm:$0xff]
        %s1893 = scalar_lea.vmem [#allocation2], 16
        %v1894 = vld [vmem:[%s1893] ss:$2 sm:$0xff]
        %s1895 = scalar_lea.vmem [#allocation2], 32
        %v1896 = vld [vmem:[%s1895] ss:$2 sm:$0xff]
        %s1897 = scalar_lea.vmem [#allocation2], 48
        %v1898 = vld [vmem:[%s1897] ss:$2 sm:$0xff]
        %s1899 = scalar_lea.vmem [#allocation2], 64
        %v1900 = vld [vmem:[%s1899] ss:$2 sm:$0xff]
        %s1901 = scalar_lea.vmem [#allocation2], 80
        %v1902 = vld [vmem:[%s1901] ss:$2 sm:$0xff]
        %s1903 = scalar_lea.vmem [#allocation2], 96
        %v1904 = vld [vmem:[%s1903] ss:$2 sm:$0xff]
        %s1905 = scalar_lea.vmem [#allocation2], 112
        %v1906 = vld [vmem:[%s1905] ss:$2 sm:$0xff]
        %s1907 = scalar_lea.vmem [#allocation2], 1
        %v1908 = vld [vmem:[%s1907] ss:$2 sm:$0xff]
        %s1909 = scalar_lea.vmem [#allocation2], 17
        %v1910 = vld [vmem:[%s1909] ss:$2 sm:$0xff]
        %s1911 = scalar_lea.vmem [#allocation2], 33
        %v1912 = vld [vmem:[%s1911] ss:$2 sm:$0xff]
        %s1913 = scalar_lea.vmem [#allocation2], 49
        %v1914 = vld [vmem:[%s1913] ss:$2 sm:$0xff]
        %s1915 = scalar_lea.vmem [#allocation2], 65
        %v1916 = vld [vmem:[%s1915] ss:$2 sm:$0xff]
        %s1917 = scalar_lea.vmem [#allocation2], 81
        %v1918 = vld [vmem:[%s1917] ss:$2 sm:$0xff]
        %s1919 = scalar_lea.vmem [#allocation2], 97
        %v1920 = vld [vmem:[%s1919] ss:$2 sm:$0xff]
        %s1921 = scalar_lea.vmem [#allocation2], 113
        %v1922 = vld [vmem:[%s1921] ss:$2 sm:$0xff]
        %v1923 = vmax.f32 %v1892, %v1908
        %v1924 = vmax.f32 %v1894, %v1910
        %v1925 = vmax.f32 %v1896, %v1912
        %v1926 = vmax.f32 %v1898, %v1914
        %v1927 = vmax.f32 %v1900, %v1916
        %v1928 = vmax.f32 %v1902, %v1918
        %v1929 = vmax.f32 %v1904, %v1920
        %v1930 = vmax.f32 %v1906, %v1922
        %v1931 = vpack.c.bf16 %v1924, %v1923
        %v1932 = vpack.c.bf16 %v1926, %v1925
        %v1933 = vpack.c.bf16 %v1928, %v1927
        %v1934 = vpack.c.bf16 %v1930, %v1929
        %1935 = vst [vmem:[#allocation3] sm:$0xff] %v1931
        %1936 = vst [vmem:[#allocation3 + $0x8] sm:$0xff] %v1932
        %1937 = vst [vmem:[#allocation3 + $0x10] sm:$0xff] %v1933
        %1938 = vst [vmem:[#allocation3 + $0x18] sm:$0xff] %v1934
        %v1939 = vld [vmem:[#allocation3] sm:$0xff]
        %v1940 = vld [vmem:[#allocation3 + $0x8] sm:$0xff]
        %v1941 = vld [vmem:[#allocation3 + $0x10] sm:$0xff]
        %v1942 = vld [vmem:[#allocation3 + $0x18] sm:$0x3f]
        %v1943 = vld [vmem:[%s3] sm:$0xff]
        %v1944 = vld [vmem:[%s3 + $0x8] sm:$0xff]
        %v1945 = vld [vmem:[%s3 + $0x10] sm:$0xff]
        %v1946 = vld [vmem:[%s3 + $0x18] sm:$0xff]
        %v1947 = vld [vmem:[%s3 + $0x20] sm:$0xff]
        %v1948 = vld [vmem:[%s3 + $0x28] sm:$0xff]
        %v1949 = vld [vmem:[%s3 + $0x30] sm:$0xff]
        %v1950 = vld [vmem:[%s3 + $0x38] sm:$0xff]
        %v1951 = vld [vmem:[%s3 + $0x40] sm:$0xff]
        %v1952 = vld [vmem:[%s3 + $0x48] sm:$0xff]
        %v1953 = vld [vmem:[%s3 + $0x50] sm:$0xff]
        %v1954 = vld [vmem:[%s3 + $0x58] sm:$0xff]
        %v1955 = vld [vmem:[%s3 + $0x60] sm:$0xff]
        %v1956 = vld [vmem:[%s3 + $0x68] sm:$0xff]
        %v1957 = vld [vmem:[%s3 + $0x70] sm:$0xff]
        %v1958 = vld [vmem:[%s3 + $0x78] sm:$0xff]
        %v1959 = vld [vmem:[#allocation3 + $0x18] sm:$0x7f]
        %s1960 = scalar_lea.vmem %s3, 128
        %v1961 = vld [vmem:[%s1960] sm:$0xff]
        %v1962 = vld [vmem:[%s1960 + $0x8] sm:$0xff]
        %v1963 = vld [vmem:[%s1960 + $0x10] sm:$0xff]
        %v1964 = vld [vmem:[%s1960 + $0x18] sm:$0xff]
        %v1965 = vld [vmem:[%s1960 + $0x20] sm:$0xff]
        %v1966 = vld [vmem:[%s1960 + $0x28] sm:$0xff]
        %v1967 = vld [vmem:[%s1960 + $0x30] sm:$0xff]
        %v1968 = vld [vmem:[%s1960 + $0x38] sm:$0xff]
        %v1969 = vld [vmem:[%s1960 + $0x40] sm:$0xff]
        %v1970 = vld [vmem:[%s1960 + $0x48] sm:$0xff]
        %v1971 = vld [vmem:[%s1960 + $0x50] sm:$0xff]
        %v1972 = vld [vmem:[%s1960 + $0x58] sm:$0xff]
        %v1973 = vld [vmem:[%s1960 + $0x60] sm:$0xff]
        %v1974 = vld [vmem:[%s1960 + $0x68] sm:$0xff]
        %v1975 = vld [vmem:[%s1960 + $0x70] sm:$0xff]
        %v1976 = vld [vmem:[%s1960 + $0x78] sm:$0xff]
        %v1978 = vshrl.u32 %v1939, 16
        %v1980 = vshll.u32 %v1939, 16
        %v1982 = vrot.slane %v1980, 1
        %v1983 = vor.u32 %v1978, %v1982
        %v1985 = vshll.u32 %v1940, 16
        %v1987 = vrot.slane %v1985, 1
        %v1988 = vsel %vm478, %v1983, %v1987
        %v1989 = vshrl.u32 %v1940, 16
        %v1991 = vor.u32 %v1989, %v1987
        %v1993 = vshll.u32 %v1941, 16
        %v1995 = vrot.slane %v1993, 1
        %v1996 = vsel %vm478, %v1991, %v1995
        %v1997 = vshrl.u32 %v1941, 16
        %v1999 = vor.u32 %v1997, %v1995
        %v2001 = vshll.u32 %v1959, 16
        %v2003 = vrot.slane %v2001, 1
        %v2004 = vsel %vm478, %v1999, %v2003
        %v2005 = vshrl.u32 %v1959, 16
        %v2007 = vor.u32 %v2005, %v2003
        %v2028 = vunpack.c.l.b16 %v1961
        %v2029 = vunpack.c.h.b16 %v1961
        %v2030 = vunpack.c.l.b16 %v1962
        %v2031 = vunpack.c.h.b16 %v1962
        %v2032 = vunpack.c.l.b16 %v1963
        %v2033 = vunpack.c.h.b16 %v1963
        %v2034 = vunpack.c.l.b16 %v1964
        %v2035 = vunpack.c.h.b16 %v1964
        %v2036 = vunpack.c.l.b16 %v1965
        %v2037 = vunpack.c.h.b16 %v1965
        %v2038 = vunpack.c.l.b16 %v1966
        %v2039 = vunpack.c.h.b16 %v1966
        %v2040 = vunpack.c.l.b16 %v1967
        %v2041 = vunpack.c.h.b16 %v1967
        %v2042 = vunpack.c.l.b16 %v1968
        %v2043 = vunpack.c.h.b16 %v1968
        %v2044 = vunpack.c.l.b16 %v1969
        %v2045 = vunpack.c.h.b16 %v1969
        %v2046 = vunpack.c.l.b16 %v1970
        %v2047 = vunpack.c.h.b16 %v1970
        %v2048 = vunpack.c.l.b16 %v1971
        %v2049 = vunpack.c.h.b16 %v1971
        %v2050 = vunpack.c.l.b16 %v1972
        %v2051 = vunpack.c.h.b16 %v1972
        %v2052 = vunpack.c.l.b16 %v1973
        %v2053 = vunpack.c.h.b16 %v1973
        %v2054 = vunpack.c.l.b16 %v1974
        %v2055 = vunpack.c.h.b16 %v1974
        %v2056 = vunpack.c.l.b16 %v1975
        %v2057 = vunpack.c.h.b16 %v1975
        %v2058 = vunpack.c.l.b16 %v1976
        %v2059 = vunpack.c.h.b16 %v1976
        %v2060 = vpack.c.b16 %v2030, %v2028
        %v2061 = vpack.c.b16 %v2031, %v2029
        %v2062 = vpack.c.b16 %v2034, %v2032
        %v2063 = vpack.c.b16 %v2035, %v2033
        %v2064 = vpack.c.b16 %v2038, %v2036
        %v2065 = vpack.c.b16 %v2039, %v2037
        %v2066 = vpack.c.b16 %v2042, %v2040
        %v2067 = vpack.c.b16 %v2043, %v2041
        %v2068 = vpack.c.b16 %v2046, %v2044
        %v2069 = vpack.c.b16 %v2047, %v2045
        %v2070 = vpack.c.b16 %v2050, %v2048
        %v2071 = vpack.c.b16 %v2051, %v2049
        %v2072 = vpack.c.b16 %v2054, %v2052
        %v2073 = vpack.c.b16 %v2055, %v2053
        %v2074 = vpack.c.b16 %v2058, %v2056
        %v2075 = vpack.c.b16 %v2059, %v2057
        %2092 = vmatprep.subr.bf16.mxu0 %v2061
        %2093 = vmatpush1.bf16.msra.mxu0 %v2060
        %2094 = vmatprep.subr.bf16.mxu0 %v2063
        %2095 = vmatpush1.bf16.msra.mxu0 %v2062
        %2096 = vmatprep.subr.bf16.mxu0 %v2065
        %2097 = vmatpush1.bf16.msra.mxu0 %v2064
        %2098 = vmatprep.subr.bf16.mxu0 %v2067
        %2099 = vmatpush1.bf16.msra.mxu0 %v2066
        %2100 = vmatprep.subr.bf16.mxu0 %v2069
        %2101 = vmatpush1.bf16.msra.mxu0 %v2068
        %2102 = vmatprep.subr.bf16.mxu0 %v2071
        %2103 = vmatpush1.bf16.msra.mxu0 %v2070
        %2104 = vmatprep.subr.bf16.mxu0 %v2073
        %2105 = vmatpush1.bf16.msra.mxu0 %v2072
        %2106 = vmatprep.subr.bf16.mxu0 %v2075
        %2107 = vmatpush1.bf16.msra.mxu0 %v2074
        %2108 = vmatprep.subr.bf16.mxu0 0
        %2109 = vmatpush1.bf16.msra.mxu0 0
        %2110 = vmatprep.subr.bf16.mxu0 0
        %2111 = vmatpush1.bf16.msra.mxu0 0
        %2112 = vmatprep.subr.bf16.mxu0 0
        %2113 = vmatpush1.bf16.msra.mxu0 0
        %2114 = vmatprep.subr.bf16.mxu0 0
        %2115 = vmatpush1.bf16.msra.mxu0 0
        %2116 = vmatprep.subr.bf16.mxu0 0
        %2117 = vmatpush1.bf16.msra.mxu0 0
        %2118 = vmatprep.subr.bf16.mxu0 0
        %2119 = vmatpush1.bf16.msra.mxu0 0
        %2120 = vmatprep.subr.bf16.mxu0 0
        %2121 = vmatpush1.bf16.msra.mxu0 0
        %2122 = vmatprep.subr.bf16.mxu0 0
        %2123 = vmatpush1.bf16.msra.mxu0 0
        %2124 = vmatprep.mubr.bf16.mxu0 0
        %2125 = vmatmul.mubr.bf16.gmra.mrb[0].mxu0 %v1988
        %v2126 = vpop.f32.mrb[0].mxu0
        %v2127 = vadd.f32 0.0, %v2126
        %v2128 = vpop.f32.mrb[0].mxu0
        %v2129 = vadd.f32 0.0, %v2128
        %v2130 = vpop.f32.mrb[0].mxu0
        %v2131 = vadd.f32 0.0, %v2130
        %v2132 = vpop.f32.mrb[0].mxu0
        %v2133 = vadd.f32 0.0, %v2132
        %2134 = vmatprep.mubr.bf16.mxu0 0
        %2135 = vmatmul.mubr.bf16.gmra.mrb[0].mxu0 %v1996
        %v2136 = vpop.f32.mrb[0].mxu0
        %v2137 = vadd.f32 0.0, %v2136
        %v2138 = vpop.f32.mrb[0].mxu0
        %v2139 = vadd.f32 0.0, %v2138
        %v2140 = vpop.f32.mrb[0].mxu0
        %v2141 = vadd.f32 0.0, %v2140
        %v2142 = vpop.f32.mrb[0].mxu0
        %v2143 = vadd.f32 0.0, %v2142
        %2144 = vmatprep.mubr.bf16.mxu0 0
        %2145 = vmatmul.mubr.bf16.gmra.mrb[0].mxu0 %v2004
        %v2146 = vpop.f32.mrb[0].mxu0
        %v2147 = vadd.f32 0.0, %v2146
        %v2148 = vpop.f32.mrb[0].mxu0
        %v2149 = vadd.f32 0.0, %v2148
        %v2150 = vpop.f32.mrb[0].mxu0
        %v2151 = vadd.f32 0.0, %v2150
        %v2152 = vpop.f32.mrb[0].mxu0
        %v2153 = vadd.f32 0.0, %v2152
        %2154 = vmatprep.mubr.bf16.mxu0 0
        %2155 = vmatmul.mubr.bf16.gmra.mrb[0].mxu0 %v2007
        %v2156 = vpop.f32.mrb[0].mxu0
        %v2157 = vadd.f32 0.0, %v2156
        %v2158 = vpop.f32.mrb[0].mxu0
        %v2159 = vadd.f32 0.0, %v2158
        %v2160 = vpop.f32.mrb[0].mxu0
        %v2161 = vadd.f32 0.0, %v2160
        %v2162 = vpop.f32.mrb[0].mxu0
        %v2163 = vadd.f32 0.0, %v2162
        %2164 = vdwg.mxu0
        %v2181 = vunpack.c.l.b16 %v1943
        %v2182 = vunpack.c.h.b16 %v1943
        %v2183 = vunpack.c.l.b16 %v1944
        %v2184 = vunpack.c.h.b16 %v1944
        %v2185 = vunpack.c.l.b16 %v1945
        %v2186 = vunpack.c.h.b16 %v1945
        %v2187 = vunpack.c.l.b16 %v1946
        %v2188 = vunpack.c.h.b16 %v1946
        %v2189 = vunpack.c.l.b16 %v1947
        %v2190 = vunpack.c.h.b16 %v1947
        %v2191 = vunpack.c.l.b16 %v1948
        %v2192 = vunpack.c.h.b16 %v1948
        %v2193 = vunpack.c.l.b16 %v1949
        %v2194 = vunpack.c.h.b16 %v1949
        %v2195 = vunpack.c.l.b16 %v1950
        %v2196 = vunpack.c.h.b16 %v1950
        %v2197 = vunpack.c.l.b16 %v1951
        %v2198 = vunpack.c.h.b16 %v1951
        %v2199 = vunpack.c.l.b16 %v1952
        %v2200 = vunpack.c.h.b16 %v1952
        %v2201 = vunpack.c.l.b16 %v1953
        %v2202 = vunpack.c.h.b16 %v1953
        %v2203 = vunpack.c.l.b16 %v1954
        %v2204 = vunpack.c.h.b16 %v1954
        %v2205 = vunpack.c.l.b16 %v1955
        %v2206 = vunpack.c.h.b16 %v1955
        %v2207 = vunpack.c.l.b16 %v1956
        %v2208 = vunpack.c.h.b16 %v1956
        %v2209 = vunpack.c.l.b16 %v1957
        %v2210 = vunpack.c.h.b16 %v1957
        %v2211 = vunpack.c.l.b16 %v1958
        %v2212 = vunpack.c.h.b16 %v1958
        %v2213 = vpack.c.b16 %v2183, %v2181
        %v2214 = vpack.c.b16 %v2184, %v2182
        %v2215 = vpack.c.b16 %v2187, %v2185
        %v2216 = vpack.c.b16 %v2188, %v2186
        %v2217 = vpack.c.b16 %v2191, %v2189
        %v2218 = vpack.c.b16 %v2192, %v2190
        %v2219 = vpack.c.b16 %v2195, %v2193
        %v2220 = vpack.c.b16 %v2196, %v2194
        %v2221 = vpack.c.b16 %v2199, %v2197
        %v2222 = vpack.c.b16 %v2200, %v2198
        %v2223 = vpack.c.b16 %v2203, %v2201
        %v2224 = vpack.c.b16 %v2204, %v2202
        %v2225 = vpack.c.b16 %v2207, %v2205
        %v2226 = vpack.c.b16 %v2208, %v2206
        %v2227 = vpack.c.b16 %v2211, %v2209
        %v2228 = vpack.c.b16 %v2212, %v2210
        %2245 = vmatprep.subr.bf16.mxu0 %v2214
        %2246 = vmatpush1.bf16.msra.mxu0 %v2213
        %2247 = vmatprep.subr.bf16.mxu0 %v2216
        %2248 = vmatpush1.bf16.msra.mxu0 %v2215
        %2249 = vmatprep.subr.bf16.mxu0 %v2218
        %2250 = vmatpush1.bf16.msra.mxu0 %v2217
        %2251 = vmatprep.subr.bf16.mxu0 %v2220
        %2252 = vmatpush1.bf16.msra.mxu0 %v2219
        %2253 = vmatprep.subr.bf16.mxu0 %v2222
        %2254 = vmatpush1.bf16.msra.mxu0 %v2221
        %2255 = vmatprep.subr.bf16.mxu0 %v2224
        %2256 = vmatpush1.bf16.msra.mxu0 %v2223
        %2257 = vmatprep.subr.bf16.mxu0 %v2226
        %2258 = vmatpush1.bf16.msra.mxu0 %v2225
        %2259 = vmatprep.subr.bf16.mxu0 %v2228
        %2260 = vmatpush1.bf16.msra.mxu0 %v2227
        %2261 = vmatprep.subr.bf16.mxu0 0
        %2262 = vmatpush1.bf16.msra.mxu0 0
        %2263 = vmatprep.subr.bf16.mxu0 0
        %2264 = vmatpush1.bf16.msra.mxu0 0
        %2265 = vmatprep.subr.bf16.mxu0 0
        %2266 = vmatpush1.bf16.msra.mxu0 0
        %2267 = vmatprep.subr.bf16.mxu0 0
        %2268 = vmatpush1.bf16.msra.mxu0 0
        %2269 = vmatprep.subr.bf16.mxu0 0
        %2270 = vmatpush1.bf16.msra.mxu0 0
        %2271 = vmatprep.subr.bf16.mxu0 0
        %2272 = vmatpush1.bf16.msra.mxu0 0
        %2273 = vmatprep.subr.bf16.mxu0 0
        %2274 = vmatpush1.bf16.msra.mxu0 0
        %2275 = vmatprep.subr.bf16.mxu0 0
        %2276 = vmatpush1.bf16.msra.mxu0 0
        %2277 = vmatprep.mubr.bf16.mxu0 0
        %2278 = vmatmul.mubr.bf16.gmra.mrb[0].mxu0 %v1939
        %v2279 = vpop.f32.mrb[0].mxu0
        %v2280 = vadd.f32 %v2127, %v2279
        %v2281 = vpop.f32.mrb[0].mxu0
        %v2282 = vadd.f32 %v2129, %v2281
        %v2283 = vpop.f32.mrb[0].mxu0
        %v2284 = vadd.f32 %v2131, %v2283
        %v2285 = vpop.f32.mrb[0].mxu0
        %v2286 = vadd.f32 %v2133, %v2285
        %2287 = vmatprep.mubr.bf16.mxu0 0
        %2288 = vmatmul.mubr.bf16.gmra.mrb[0].mxu0 %v1940
        %v2289 = vpop.f32.mrb[0].mxu0
        %v2290 = vadd.f32 %v2137, %v2289
        %v2291 = vpop.f32.mrb[0].mxu0
        %v2292 = vadd.f32 %v2139, %v2291
        %v2293 = vpop.f32.mrb[0].mxu0
        %v2294 = vadd.f32 %v2141, %v2293
        %v2295 = vpop.f32.mrb[0].mxu0
        %v2296 = vadd.f32 %v2143, %v2295
        %2297 = vmatprep.mubr.bf16.mxu0 0
        %2298 = vmatmul.mubr.bf16.gmra.mrb[0].mxu0 %v1941
        %v2299 = vpop.f32.mrb[0].mxu0
        %v2300 = vadd.f32 %v2147, %v2299
        %v2301 = vpop.f32.mrb[0].mxu0
        %v2302 = vadd.f32 %v2149, %v2301
        %v2303 = vpop.f32.mrb[0].mxu0
        %v2304 = vadd.f32 %v2151, %v2303
        %v2305 = vpop.f32.mrb[0].mxu0
        %v2306 = vadd.f32 %v2153, %v2305
        %2307 = vmatprep.mubr.bf16.mxu0 0
        %2308 = vmatmul.mubr.bf16.gmra.mrb[0].mxu0 %v1942
        %v2309 = vpop.f32.mrb[0].mxu0
        %v2310 = vadd.f32 %v2157, %v2309
        %v2311 = vpop.f32.mrb[0].mxu0
        %v2312 = vadd.f32 %v2159, %v2311
        %v2313 = vpop.f32.mrb[0].mxu0
        %v2314 = vadd.f32 %v2161, %v2313
        %v2315 = vpop.f32.mrb[0].mxu0
        %v2316 = vadd.f32 %v2163, %v2315
        %2317 = vdwg.mxu0
        %v2318 = vld [vmem:[#allocation3] sm:$0xfe]
        %s2319 = scalar_lea.vmem %s3, 256
        %v2320 = vld [vmem:[%s2319] sm:$0xff]
        %v2321 = vld [vmem:[%s2319 + $0x8] sm:$0xff]
        %v2322 = vld [vmem:[%s2319 + $0x10] sm:$0xff]
        %v2323 = vld [vmem:[%s2319 + $0x18] sm:$0xff]
        %v2324 = vld [vmem:[%s2319 + $0x20] sm:$0xff]
        %v2325 = vld [vmem:[%s2319 + $0x28] sm:$0xff]
        %v2326 = vld [vmem:[%s2319 + $0x30] sm:$0xff]
        %v2327 = vld [vmem:[%s2319 + $0x38] sm:$0xff]
        %v2328 = vld [vmem:[%s2319 + $0x40] sm:$0xff]
        %v2329 = vld [vmem:[%s2319 + $0x48] sm:$0xff]
        %v2330 = vld [vmem:[%s2319 + $0x50] sm:$0xff]
        %v2331 = vld [vmem:[%s2319 + $0x58] sm:$0xff]
        %v2332 = vld [vmem:[%s2319 + $0x60] sm:$0xff]
        %v2333 = vld [vmem:[%s2319 + $0x68] sm:$0xff]
        %v2334 = vld [vmem:[%s2319 + $0x70] sm:$0xff]
        %v2335 = vld [vmem:[%s2319 + $0x78] sm:$0xff]
        %v2340 = vrot.slane %v2318, 1
        %v2341 = vrot.slane %v1940, 1
        %v2342 = vsel %vm968, %v2340, %v2341
        %v2343 = vrot.slane %v1941, 1
        %v2344 = vsel %vm968, %v2341, %v2343
        %v2345 = vrot.slane %v1959, 1
        %v2346 = vsel %vm968, %v2343, %v2345
        %v2367 = vunpack.c.l.b16 %v2320
        %v2368 = vunpack.c.h.b16 %v2320
        %v2369 = vunpack.c.l.b16 %v2321
        %v2370 = vunpack.c.h.b16 %v2321
        %v2371 = vunpack.c.l.b16 %v2322
        %v2372 = vunpack.c.h.b16 %v2322
        %v2373 = vunpack.c.l.b16 %v2323
        %v2374 = vunpack.c.h.b16 %v2323
        %v2375 = vunpack.c.l.b16 %v2324
        %v2376 = vunpack.c.h.b16 %v2324
        %v2377 = vunpack.c.l.b16 %v2325
        %v2378 = vunpack.c.h.b16 %v2325
        %v2379 = vunpack.c.l.b16 %v2326
        %v2380 = vunpack.c.h.b16 %v2326
        %v2381 = vunpack.c.l.b16 %v2327
        %v2382 = vunpack.c.h.b16 %v2327
        %v2383 = vunpack.c.l.b16 %v2328
        %v2384 = vunpack.c.h.b16 %v2328
        %v2385 = vunpack.c.l.b16 %v2329
        %v2386 = vunpack.c.h.b16 %v2329
        %v2387 = vunpack.c.l.b16 %v2330
        %v2388 = vunpack.c.h.b16 %v2330
        %v2389 = vunpack.c.l.b16 %v2331
        %v2390 = vunpack.c.h.b16 %v2331
        %v2391 = vunpack.c.l.b16 %v2332
        %v2392 = vunpack.c.h.b16 %v2332
        %v2393 = vunpack.c.l.b16 %v2333
        %v2394 = vunpack.c.h.b16 %v2333
        %v2395 = vunpack.c.l.b16 %v2334
        %v2396 = vunpack.c.h.b16 %v2334
        %v2397 = vunpack.c.l.b16 %v2335
        %v2398 = vunpack.c.h.b16 %v2335
        %v2399 = vpack.c.b16 %v2369, %v2367
        %v2400 = vpack.c.b16 %v2370, %v2368
        %v2401 = vpack.c.b16 %v2373, %v2371
        %v2402 = vpack.c.b16 %v2374, %v2372
        %v2403 = vpack.c.b16 %v2377, %v2375
        %v2404 = vpack.c.b16 %v2378, %v2376
        %v2405 = vpack.c.b16 %v2381, %v2379
        %v2406 = vpack.c.b16 %v2382, %v2380
        %v2407 = vpack.c.b16 %v2385, %v2383
        %v2408 = vpack.c.b16 %v2386, %v2384
        %v2409 = vpack.c.b16 %v2389, %v2387
        %v2410 = vpack.c.b16 %v2390, %v2388
        %v2411 = vpack.c.b16 %v2393, %v2391
        %v2412 = vpack.c.b16 %v2394, %v2392
        %v2413 = vpack.c.b16 %v2397, %v2395
        %v2414 = vpack.c.b16 %v2398, %v2396
        %2431 = vmatprep.subr.bf16.mxu0 %v2400
        %2432 = vmatpush1.bf16.msra.mxu0 %v2399
        %2433 = vmatprep.subr.bf16.mxu0 %v2402
        %2434 = vmatpush1.bf16.msra.mxu0 %v2401
        %2435 = vmatprep.subr.bf16.mxu0 %v2404
        %2436 = vmatpush1.bf16.msra.mxu0 %v2403
        %2437 = vmatprep.subr.bf16.mxu0 %v2406
        %2438 = vmatpush1.bf16.msra.mxu0 %v2405
        %2439 = vmatprep.subr.bf16.mxu0 %v2408
        %2440 = vmatpush1.bf16.msra.mxu0 %v2407
        %2441 = vmatprep.subr.bf16.mxu0 %v2410
        %2442 = vmatpush1.bf16.msra.mxu0 %v2409
        %2443 = vmatprep.subr.bf16.mxu0 %v2412
        %2444 = vmatpush1.bf16.msra.mxu0 %v2411
        %2445 = vmatprep.subr.bf16.mxu0 %v2414
        %2446 = vmatpush1.bf16.msra.mxu0 %v2413
        %2447 = vmatprep.subr.bf16.mxu0 0
        %2448 = vmatpush1.bf16.msra.mxu0 0
        %2449 = vmatprep.subr.bf16.mxu0 0
        %2450 = vmatpush1.bf16.msra.mxu0 0
        %2451 = vmatprep.subr.bf16.mxu0 0
        %2452 = vmatpush1.bf16.msra.mxu0 0
        %2453 = vmatprep.subr.bf16.mxu0 0
        %2454 = vmatpush1.bf16.msra.mxu0 0
        %2455 = vmatprep.subr.bf16.mxu0 0
        %2456 = vmatpush1.bf16.msra.mxu0 0
        %2457 = vmatprep.subr.bf16.mxu0 0
        %2458 = vmatpush1.bf16.msra.mxu0 0
        %2459 = vmatprep.subr.bf16.mxu0 0
        %2460 = vmatpush1.bf16.msra.mxu0 0
        %2461 = vmatprep.subr.bf16.mxu0 0
        %2462 = vmatpush1.bf16.msra.mxu0 0
        %2463 = vmatprep.mubr.bf16.mxu0 0
        %2464 = vmatmul.mubr.bf16.gmra.mrb[0].mxu0 %v2342
        %v2465 = vpop.f32.mrb[0].mxu0
        %v2466 = vadd.f32 0.0, %v2465
        %v2467 = vpop.f32.mrb[0].mxu0
        %v2468 = vadd.f32 0.0, %v2467
        %v2469 = vpop.f32.mrb[0].mxu0
        %v2470 = vadd.f32 0.0, %v2469
        %v2471 = vpop.f32.mrb[0].mxu0
        %v2472 = vadd.f32 0.0, %v2471
        %2473 = vmatprep.mubr.bf16.mxu0 0
        %2474 = vmatmul.mubr.bf16.gmra.mrb[0].mxu0 %v2344
        %v2475 = vpop.f32.mrb[0].mxu0
        %v2476 = vadd.f32 0.0, %v2475
        %v2477 = vpop.f32.mrb[0].mxu0
        %v2478 = vadd.f32 0.0, %v2477
        %v2479 = vpop.f32.mrb[0].mxu0
        %v2480 = vadd.f32 0.0, %v2479
        %v2481 = vpop.f32.mrb[0].mxu0
        %v2482 = vadd.f32 0.0, %v2481
        %2483 = vmatprep.mubr.bf16.mxu0 0
        %2484 = vmatmul.mubr.bf16.gmra.mrb[0].mxu0 %v2346
        %v2485 = vpop.f32.mrb[0].mxu0
        %v2486 = vadd.f32 0.0, %v2485
        %v2487 = vpop.f32.mrb[0].mxu0
        %v2488 = vadd.f32 0.0, %v2487
        %v2489 = vpop.f32.mrb[0].mxu0
        %v2490 = vadd.f32 0.0, %v2489
        %v2491 = vpop.f32.mrb[0].mxu0
        %v2492 = vadd.f32 0.0, %v2491
        %2493 = vmatprep.mubr.bf16.mxu0 0
        %2494 = vmatmul.mubr.bf16.gmra.mrb[0].mxu0 %v2345
        %v2495 = vpop.f32.mrb[0].mxu0
        %v2496 = vadd.f32 0.0, %v2495
        %v2497 = vpop.f32.mrb[0].mxu0
        %v2498 = vadd.f32 0.0, %v2497
        %v2499 = vpop.f32.mrb[0].mxu0
        %v2500 = vadd.f32 0.0, %v2499
        %v2501 = vpop.f32.mrb[0].mxu0
        %v2502 = vadd.f32 0.0, %v2501
        %2503 = vdwg.mxu0
        %v2504 = vadd.f32 %v2280, %v2466
        %v2505 = vadd.f32 %v2282, %v2468
        %v2506 = vadd.f32 %v2284, %v2470
        %v2507 = vadd.f32 %v2286, %v2472
        %v2508 = vadd.f32 %v2290, %v2476
        %v2509 = vadd.f32 %v2292, %v2478
        %v2510 = vadd.f32 %v2294, %v2480
        %v2511 = vadd.f32 %v2296, %v2482
        %v2512 = vadd.f32 %v2300, %v2486
        %v2513 = vadd.f32 %v2302, %v2488
        %v2514 = vadd.f32 %v2304, %v2490
        %v2515 = vadd.f32 %v2306, %v2492
        %v2516 = vadd.f32 %v2310, %v2496
        %v2517 = vadd.f32 %v2312, %v2498
        %v2518 = vadd.f32 %v2314, %v2500
        %v2519 = vadd.f32 %v2316, %v2502
        %v2520 = vld [vmem:[#allocation3 + $0x18] sm:$0xff]
        %s2521 = scalar_lea.vmem %s3, 384
        %v2522 = vld [vmem:[%s2521] sm:$0xff]
        %v2523 = vld [vmem:[%s2521 + $0x8] sm:$0xff]
        %v2524 = vld [vmem:[%s2521 + $0x10] sm:$0xff]
        %v2525 = vld [vmem:[%s2521 + $0x18] sm:$0xff]
        %v2526 = vld [vmem:[%s2521 + $0x20] sm:$0xff]
        %v2527 = vld [vmem:[%s2521 + $0x28] sm:$0xff]
        %v2528 = vld [vmem:[%s2521 + $0x30] sm:$0xff]
        %v2529 = vld [vmem:[%s2521 + $0x38] sm:$0xff]
        %v2530 = vld [vmem:[%s2521 + $0x40] sm:$0xff]
        %v2531 = vld [vmem:[%s2521 + $0x48] sm:$0xff]
        %v2532 = vld [vmem:[%s2521 + $0x50] sm:$0xff]
        %v2533 = vld [vmem:[%s2521 + $0x58] sm:$0xff]
        %v2534 = vld [vmem:[%s2521 + $0x60] sm:$0xff]
        %v2535 = vld [vmem:[%s2521 + $0x68] sm:$0xff]
        %v2536 = vld [vmem:[%s2521 + $0x70] sm:$0xff]
        %v2537 = vld [vmem:[%s2521 + $0x78] sm:$0xff]
        %v2539 = vshrl.u32 %v2318, 16
        %v2541 = vrot.slane %v2539, 1
        %v2542 = vshll.u32 %v2318, 16
        %v2544 = vrot.slane %v2542, 2
        %v2545 = vor.u32 %v2541, %v2544
        %v2546 = vrot.slane %v1989, 1
        %v2547 = vrot.slane %v1985, 2
        %v2548 = vor.u32 %v2546, %v2547
        %v2549 = vsel %vm1238, %v2545, %v2548
        %v2550 = vrot.slane %v1997, 1
        %v2551 = vrot.slane %v1993, 2
        %v2552 = vor.u32 %v2550, %v2551
        %v2553 = vsel %vm1238, %v2548, %v2552
        %v2555 = vshrl.u32 %v2520, 16
        %v2557 = vrot.slane %v2555, 1
        %v2558 = vshll.u32 %v2520, 16
        %v2560 = vrot.slane %v2558, 2
        %v2561 = vor.u32 %v2557, %v2560
        %v2562 = vsel %vm1238, %v2552, %v2561
        %v2583 = vunpack.c.l.b16 %v2522
        %v2584 = vunpack.c.h.b16 %v2522
        %v2585 = vunpack.c.l.b16 %v2523
        %v2586 = vunpack.c.h.b16 %v2523
        %v2587 = vunpack.c.l.b16 %v2524
        %v2588 = vunpack.c.h.b16 %v2524
        %v2589 = vunpack.c.l.b16 %v2525
        %v2590 = vunpack.c.h.b16 %v2525
        %v2591 = vunpack.c.l.b16 %v2526
        %v2592 = vunpack.c.h.b16 %v2526
        %v2593 = vunpack.c.l.b16 %v2527
        %v2594 = vunpack.c.h.b16 %v2527
        %v2595 = vunpack.c.l.b16 %v2528
        %v2596 = vunpack.c.h.b16 %v2528
        %v2597 = vunpack.c.l.b16 %v2529
        %v2598 = vunpack.c.h.b16 %v2529
        %v2599 = vunpack.c.l.b16 %v2530
        %v2600 = vunpack.c.h.b16 %v2530
        %v2601 = vunpack.c.l.b16 %v2531
        %v2602 = vunpack.c.h.b16 %v2531
        %v2603 = vunpack.c.l.b16 %v2532
        %v2604 = vunpack.c.h.b16 %v2532
        %v2605 = vunpack.c.l.b16 %v2533
        %v2606 = vunpack.c.h.b16 %v2533
        %v2607 = vunpack.c.l.b16 %v2534
        %v2608 = vunpack.c.h.b16 %v2534
        %v2609 = vunpack.c.l.b16 %v2535
        %v2610 = vunpack.c.h.b16 %v2535
        %v2611 = vunpack.c.l.b16 %v2536
        %v2612 = vunpack.c.h.b16 %v2536
        %v2613 = vunpack.c.l.b16 %v2537
        %v2614 = vunpack.c.h.b16 %v2537
        %v2615 = vpack.c.b16 %v2585, %v2583
        %v2616 = vpack.c.b16 %v2586, %v2584
        %v2617 = vpack.c.b16 %v2589, %v2587
        %v2618 = vpack.c.b16 %v2590, %v2588
        %v2619 = vpack.c.b16 %v2593, %v2591
        %v2620 = vpack.c.b16 %v2594, %v2592
        %v2621 = vpack.c.b16 %v2597, %v2595
        %v2622 = vpack.c.b16 %v2598, %v2596
        %v2623 = vpack.c.b16 %v2601, %v2599
        %v2624 = vpack.c.b16 %v2602, %v2600
        %v2625 = vpack.c.b16 %v2605, %v2603
        %v2626 = vpack.c.b16 %v2606, %v2604
        %v2627 = vpack.c.b16 %v2609, %v2607
        %v2628 = vpack.c.b16 %v2610, %v2608
        %v2629 = vpack.c.b16 %v2613, %v2611
        %v2630 = vpack.c.b16 %v2614, %v2612
        %2647 = vmatprep.subr.bf16.mxu0 %v2616
        %2648 = vmatpush1.bf16.msra.mxu0 %v2615
        %2649 = vmatprep.subr.bf16.mxu0 %v2618
        %2650 = vmatpush1.bf16.msra.mxu0 %v2617
        %2651 = vmatprep.subr.bf16.mxu0 %v2620
        %2652 = vmatpush1.bf16.msra.mxu0 %v2619
        %2653 = vmatprep.subr.bf16.mxu0 %v2622
        %2654 = vmatpush1.bf16.msra.mxu0 %v2621
        %2655 = vmatprep.subr.bf16.mxu0 %v2624
        %2656 = vmatpush1.bf16.msra.mxu0 %v2623
        %2657 = vmatprep.subr.bf16.mxu0 %v2626
        %2658 = vmatpush1.bf16.msra.mxu0 %v2625
        %2659 = vmatprep.subr.bf16.mxu0 %v2628
        %2660 = vmatpush1.bf16.msra.mxu0 %v2627
        %2661 = vmatprep.subr.bf16.mxu0 %v2630
        %2662 = vmatpush1.bf16.msra.mxu0 %v2629
        %2663 = vmatprep.subr.bf16.mxu0 0
        %2664 = vmatpush1.bf16.msra.mxu0 0
        %2665 = vmatprep.subr.bf16.mxu0 0
        %2666 = vmatpush1.bf16.msra.mxu0 0
        %2667 = vmatprep.subr.bf16.mxu0 0
        %2668 = vmatpush1.bf16.msra.mxu0 0
        %2669 = vmatprep.subr.bf16.mxu0 0
        %2670 = vmatpush1.bf16.msra.mxu0 0
        %2671 = vmatprep.subr.bf16.mxu0 0
        %2672 = vmatpush1.bf16.msra.mxu0 0
        %2673 = vmatprep.subr.bf16.mxu0 0
        %2674 = vmatpush1.bf16.msra.mxu0 0
        %2675 = vmatprep.subr.bf16.mxu0 0
        %2676 = vmatpush1.bf16.msra.mxu0 0
        %2677 = vmatprep.subr.bf16.mxu0 0
        %2678 = vmatpush1.bf16.msra.mxu0 0
        %2679 = vmatprep.mubr.bf16.mxu0 0
        %2680 = vmatmul.mubr.bf16.gmra.mrb[0].mxu0 %v2549
        %v2681 = vpop.f32.mrb[0].mxu0
        %v2682 = vadd.f32 0.0, %v2681
        %v2683 = vpop.f32.mrb[0].mxu0
        %v2684 = vadd.f32 0.0, %v2683
        %v2685 = vpop.f32.mrb[0].mxu0
        %v2686 = vadd.f32 0.0, %v2685
        %v2687 = vpop.f32.mrb[0].mxu0
        %v2688 = vadd.f32 0.0, %v2687
        %2689 = vmatprep.mubr.bf16.mxu0 0
        %2690 = vmatmul.mubr.bf16.gmra.mrb[0].mxu0 %v2553
        %v2691 = vpop.f32.mrb[0].mxu0
        %v2692 = vadd.f32 0.0, %v2691
        %v2693 = vpop.f32.mrb[0].mxu0
        %v2694 = vadd.f32 0.0, %v2693
        %v2695 = vpop.f32.mrb[0].mxu0
        %v2696 = vadd.f32 0.0, %v2695
        %v2697 = vpop.f32.mrb[0].mxu0
        %v2698 = vadd.f32 0.0, %v2697
        %2699 = vmatprep.mubr.bf16.mxu0 0
        %2700 = vmatmul.mubr.bf16.gmra.mrb[0].mxu0 %v2562
        %v2701 = vpop.f32.mrb[0].mxu0
        %v2702 = vadd.f32 0.0, %v2701
        %v2703 = vpop.f32.mrb[0].mxu0
        %v2704 = vadd.f32 0.0, %v2703
        %v2705 = vpop.f32.mrb[0].mxu0
        %v2706 = vadd.f32 0.0, %v2705
        %v2707 = vpop.f32.mrb[0].mxu0
        %v2708 = vadd.f32 0.0, %v2707
        %2709 = vmatprep.mubr.bf16.mxu0 0
        %2710 = vmatmul.mubr.bf16.gmra.mrb[0].mxu0 %v2561
        %v2711 = vpop.f32.mrb[0].mxu0
        %v2712 = vadd.f32 0.0, %v2711
        %v2713 = vpop.f32.mrb[0].mxu0
        %v2714 = vadd.f32 0.0, %v2713
        %v2715 = vpop.f32.mrb[0].mxu0
        %v2716 = vadd.f32 0.0, %v2715
        %v2717 = vpop.f32.mrb[0].mxu0
        %v2718 = vadd.f32 0.0, %v2717
        %2719 = vdwg.mxu0
        %v2720 = vadd.f32 %v2504, %v2682
        %v2721 = vadd.f32 %v2505, %v2684
        %v2722 = vadd.f32 %v2506, %v2686
        %v2723 = vadd.f32 %v2507, %v2688
        %v2724 = vadd.f32 %v2508, %v2692
        %v2725 = vadd.f32 %v2509, %v2694
        %v2726 = vadd.f32 %v2510, %v2696
        %v2727 = vadd.f32 %v2511, %v2698
        %v2728 = vadd.f32 %v2512, %v2702
        %v2729 = vadd.f32 %v2513, %v2704
        %v2730 = vadd.f32 %v2514, %v2706
        %v2731 = vadd.f32 %v2515, %v2708
        %v2732 = vadd.f32 %v2516, %v2712
        %v2733 = vadd.f32 %v2517, %v2714
        %v2734 = vadd.f32 %v2518, %v2716
        %v2735 = vadd.f32 %v2519, %v2718
        %v2736 = vld [vmem:[#allocation3] sm:$0xfc]
        %s2737 = scalar_lea.vmem %s3, 512
        %v2738 = vld [vmem:[%s2737] sm:$0xff]
        %v2739 = vld [vmem:[%s2737 + $0x8] sm:$0xff]
        %v2740 = vld [vmem:[%s2737 + $0x10] sm:$0xff]
        %v2741 = vld [vmem:[%s2737 + $0x18] sm:$0xff]
        %v2742 = vld [vmem:[%s2737 + $0x20] sm:$0xff]
        %v2743 = vld [vmem:[%s2737 + $0x28] sm:$0xff]
        %v2744 = vld [vmem:[%s2737 + $0x30] sm:$0xff]
        %v2745 = vld [vmem:[%s2737 + $0x38] sm:$0xff]
        %v2746 = vld [vmem:[%s2737 + $0x40] sm:$0xff]
        %v2747 = vld [vmem:[%s2737 + $0x48] sm:$0xff]
        %v2748 = vld [vmem:[%s2737 + $0x50] sm:$0xff]
        %v2749 = vld [vmem:[%s2737 + $0x58] sm:$0xff]
        %v2750 = vld [vmem:[%s2737 + $0x60] sm:$0xff]
        %v2751 = vld [vmem:[%s2737 + $0x68] sm:$0xff]
        %v2752 = vld [vmem:[%s2737 + $0x70] sm:$0xff]
        %v2753 = vld [vmem:[%s2737 + $0x78] sm:$0xff]
        %v2756 = vrot.slane %v2736, 2
        %v2757 = vrot.slane %v1940, 2
        %v2758 = vsel %vm1534, %v2756, %v2757
        %v2759 = vrot.slane %v1941, 2
        %v2760 = vsel %vm1534, %v2757, %v2759
        %v2761 = vrot.slane %v2520, 2
        %v2762 = vsel %vm1534, %v2759, %v2761
        %v2783 = vunpack.c.l.b16 %v2738
        %v2784 = vunpack.c.h.b16 %v2738
        %v2785 = vunpack.c.l.b16 %v2739
        %v2786 = vunpack.c.h.b16 %v2739
        %v2787 = vunpack.c.l.b16 %v2740
        %v2788 = vunpack.c.h.b16 %v2740
        %v2789 = vunpack.c.l.b16 %v2741
        %v2790 = vunpack.c.h.b16 %v2741
        %v2791 = vunpack.c.l.b16 %v2742
        %v2792 = vunpack.c.h.b16 %v2742
        %v2793 = vunpack.c.l.b16 %v2743
        %v2794 = vunpack.c.h.b16 %v2743
        %v2795 = vunpack.c.l.b16 %v2744
        %v2796 = vunpack.c.h.b16 %v2744
        %v2797 = vunpack.c.l.b16 %v2745
        %v2798 = vunpack.c.h.b16 %v2745
        %v2799 = vunpack.c.l.b16 %v2746
        %v2800 = vunpack.c.h.b16 %v2746
        %v2801 = vunpack.c.l.b16 %v2747
        %v2802 = vunpack.c.h.b16 %v2747
        %v2803 = vunpack.c.l.b16 %v2748
        %v2804 = vunpack.c.h.b16 %v2748
        %v2805 = vunpack.c.l.b16 %v2749
        %v2806 = vunpack.c.h.b16 %v2749
        %v2807 = vunpack.c.l.b16 %v2750
        %v2808 = vunpack.c.h.b16 %v2750
        %v2809 = vunpack.c.l.b16 %v2751
        %v2810 = vunpack.c.h.b16 %v2751
        %v2811 = vunpack.c.l.b16 %v2752
        %v2812 = vunpack.c.h.b16 %v2752
        %v2813 = vunpack.c.l.b16 %v2753
        %v2814 = vunpack.c.h.b16 %v2753
        %v2815 = vpack.c.b16 %v2785, %v2783
        %v2816 = vpack.c.b16 %v2786, %v2784
        %v2817 = vpack.c.b16 %v2789, %v2787
        %v2818 = vpack.c.b16 %v2790, %v2788
        %v2819 = vpack.c.b16 %v2793, %v2791
        %v2820 = vpack.c.b16 %v2794, %v2792
        %v2821 = vpack.c.b16 %v2797, %v2795
        %v2822 = vpack.c.b16 %v2798, %v2796
        %v2823 = vpack.c.b16 %v2801, %v2799
        %v2824 = vpack.c.b16 %v2802, %v2800
        %v2825 = vpack.c.b16 %v2805, %v2803
        %v2826 = vpack.c.b16 %v2806, %v2804
        %v2827 = vpack.c.b16 %v2809, %v2807
        %v2828 = vpack.c.b16 %v2810, %v2808
        %v2829 = vpack.c.b16 %v2813, %v2811
        %v2830 = vpack.c.b16 %v2814, %v2812
        %2847 = vmatprep.subr.bf16.mxu0 %v2816
        %2848 = vmatpush1.bf16.msra.mxu0 %v2815
        %2849 = vmatprep.subr.bf16.mxu0 %v2818
        %2850 = vmatpush1.bf16.msra.mxu0 %v2817
        %2851 = vmatprep.subr.bf16.mxu0 %v2820
        %2852 = vmatpush1.bf16.msra.mxu0 %v2819
        %2853 = vmatprep.subr.bf16.mxu0 %v2822
        %2854 = vmatpush1.bf16.msra.mxu0 %v2821
        %2855 = vmatprep.subr.bf16.mxu0 %v2824
        %2856 = vmatpush1.bf16.msra.mxu0 %v2823
        %2857 = vmatprep.subr.bf16.mxu0 %v2826
        %2858 = vmatpush1.bf16.msra.mxu0 %v2825
        %2859 = vmatprep.subr.bf16.mxu0 %v2828
        %2860 = vmatpush1.bf16.msra.mxu0 %v2827
        %2861 = vmatprep.subr.bf16.mxu0 %v2830
        %2862 = vmatpush1.bf16.msra.mxu0 %v2829
        %2863 = vmatprep.subr.bf16.mxu0 0
        %2864 = vmatpush1.bf16.msra.mxu0 0
        %2865 = vmatprep.subr.bf16.mxu0 0
        %2866 = vmatpush1.bf16.msra.mxu0 0
        %2867 = vmatprep.subr.bf16.mxu0 0
        %2868 = vmatpush1.bf16.msra.mxu0 0
        %2869 = vmatprep.subr.bf16.mxu0 0
        %2870 = vmatpush1.bf16.msra.mxu0 0
        %2871 = vmatprep.subr.bf16.mxu0 0
        %2872 = vmatpush1.bf16.msra.mxu0 0
        %2873 = vmatprep.subr.bf16.mxu0 0
        %2874 = vmatpush1.bf16.msra.mxu0 0
        %2875 = vmatprep.subr.bf16.mxu0 0
        %2876 = vmatpush1.bf16.msra.mxu0 0
        %2877 = vmatprep.subr.bf16.mxu0 0
        %2878 = vmatpush1.bf16.msra.mxu0 0
        %2879 = vmatprep.mubr.bf16.mxu0 0
        %2880 = vmatmul.mubr.bf16.gmra.mrb[0].mxu0 %v2758
        %v2881 = vpop.f32.mrb[0].mxu0
        %v2882 = vadd.f32 0.0, %v2881
        %v2883 = vpop.f32.mrb[0].mxu0
        %v2884 = vadd.f32 0.0, %v2883
        %v2885 = vpop.f32.mrb[0].mxu0
        %v2886 = vadd.f32 0.0, %v2885
        %v2887 = vpop.f32.mrb[0].mxu0
        %v2888 = vadd.f32 0.0, %v2887
        %2889 = vmatprep.mubr.bf16.mxu0 0
        %2890 = vmatmul.mubr.bf16.gmra.mrb[0].mxu0 %v2760
        %v2891 = vpop.f32.mrb[0].mxu0
        %v2892 = vadd.f32 0.0, %v2891
        %v2893 = vpop.f32.mrb[0].mxu0
        %v2894 = vadd.f32 0.0, %v2893
        %v2895 = vpop.f32.mrb[0].mxu0
        %v2896 = vadd.f32 0.0, %v2895
        %v2897 = vpop.f32.mrb[0].mxu0
        %v2898 = vadd.f32 0.0, %v2897
        %2899 = vmatprep.mubr.bf16.mxu0 0
        %2900 = vmatmul.mubr.bf16.gmra.mrb[0].mxu0 %v2762
        %v2901 = vpop.f32.mrb[0].mxu0
        %v2902 = vadd.f32 0.0, %v2901
        %v2903 = vpop.f32.mrb[0].mxu0
        %v2904 = vadd.f32 0.0, %v2903
        %v2905 = vpop.f32.mrb[0].mxu0
        %v2906 = vadd.f32 0.0, %v2905
        %v2907 = vpop.f32.mrb[0].mxu0
        %v2908 = vadd.f32 0.0, %v2907
        %2909 = vmatprep.mubr.bf16.mxu0 0
        %2910 = vmatmul.mubr.bf16.gmra.mrb[0].mxu0 %v2761
        %v2911 = vpop.f32.mrb[0].mxu0
        %v2912 = vadd.f32 0.0, %v2911
        %v2913 = vpop.f32.mrb[0].mxu0
        %v2914 = vadd.f32 0.0, %v2913
        %v2915 = vpop.f32.mrb[0].mxu0
        %v2916 = vadd.f32 0.0, %v2915
        %v2917 = vpop.f32.mrb[0].mxu0
        %v2918 = vadd.f32 0.0, %v2917
        %2919 = vdwg.mxu0
        %v2920 = vadd.f32 %v2720, %v2882
        %v2921 = vadd.f32 %v2721, %v2884
        %v2922 = vadd.f32 %v2722, %v2886
        %v2923 = vadd.f32 %v2723, %v2888
        %v2924 = vadd.f32 %v2724, %v2892
        %v2925 = vadd.f32 %v2725, %v2894
        %v2926 = vadd.f32 %v2726, %v2896
        %v2927 = vadd.f32 %v2727, %v2898
        %v2928 = vadd.f32 %v2728, %v2902
        %v2929 = vadd.f32 %v2729, %v2904
        %v2930 = vadd.f32 %v2730, %v2906
        %v2931 = vadd.f32 %v2731, %v2908
        %v2932 = vadd.f32 %v2732, %v2912
        %v2933 = vadd.f32 %v2733, %v2914
        %v2934 = vadd.f32 %v2734, %v2916
        %v2935 = vadd.f32 %v2735, %v2918
        %v2936 = vld [vmem:[%s4] sm:$0x3]
        %v2938 = vlaneseq
        %v2939 = vshrl.u32 %v2938, 7
        %v2940 = vsub.s32 0, %v2939
        %v2941 = vrot.slane %v2936, %v2940
        %v2942 = vlaneseq
        %v2943 = vshrl.u32 %v2942, 7
        %v2944 = vsub.s32 1, %v2943
        %v2945 = vrot.slane %v2936, %v2944
        %v2948 = vadd.f32 %v2920, %v2941
        %v2949 = vadd.f32 %v2921, %v2945
        %v2950 = vadd.f32 %v2922, %v2941
        %v2951 = vadd.f32 %v2923, %v2945
        %v2952 = vadd.f32 %v2924, %v2941
        %v2953 = vadd.f32 %v2925, %v2945
        %v2954 = vadd.f32 %v2926, %v2941
        %v2955 = vadd.f32 %v2927, %v2945
        %v2956 = vadd.f32 %v2928, %v2941
        %v2957 = vadd.f32 %v2929, %v2945
        %v2958 = vadd.f32 %v2930, %v2941
        %v2959 = vadd.f32 %v2931, %v2945
        %v2960 = vadd.f32 %v2932, %v2941
        %v2961 = vadd.f32 %v2933, %v2945
        %v2962 = vadd.f32 %v2934, %v2941
        %v2963 = vadd.f32 %v2935, %v2945
        %v2964 = vmax.f32 %v2948, 0.0
        %v2965 = vmax.f32 %v2949, 0.0
        %v2966 = vmax.f32 %v2950, 0.0
        %v2967 = vmax.f32 %v2951, 0.0
        %v2968 = vmax.f32 %v2952, 0.0
        %v2969 = vmax.f32 %v2953, 0.0
        %v2970 = vmax.f32 %v2954, 0.0
        %v2971 = vmax.f32 %v2955, 0.0
        %v2972 = vmax.f32 %v2956, 0.0
        %v2973 = vmax.f32 %v2957, 0.0
        %v2974 = vmax.f32 %v2958, 0.0
        %v2975 = vmax.f32 %v2959, 0.0
        %v2976 = vmax.f32 %v2960, 0.0
        %v2977 = vmax.f32 %v2961, 0.0
        %v2978 = vmax.f32 %v2962, 0.0
        %v2979 = vmax.f32 %v2963, 0.0
        %v2980 = vmax.f32 %v2964, %v2965
        %v2981 = vmax.f32 %v2966, %v2967
        %v2982 = vmax.f32 %v2968, %v2969
        %v2983 = vmax.f32 %v2970, %v2971
        %v2984 = vmax.f32 %v2972, %v2973
        %v2985 = vmax.f32 %v2974, %v2975
        %v2986 = vmax.f32 %v2976, %v2977
        %v2987 = vmax.f32 %v2978, %v2979
        %2988 = vst [vmem:[#allocation4] sm:$0xff] %v2980
        %2989 = vst [vmem:[#allocation4 + $0x8] sm:$0xff] %v2981
        %2990 = vst [vmem:[#allocation4 + $0x10] sm:$0xff] %v2982
        %2991 = vst [vmem:[#allocation4 + $0x18] sm:$0xff] %v2983
        %2992 = vst [vmem:[#allocation4 + $0x20] sm:$0xff] %v2984
        %2993 = vst [vmem:[#allocation4 + $0x28] sm:$0xff] %v2985
        %2994 = vst [vmem:[#allocation4 + $0x30] sm:$0xff] %v2986
        %2995 = vst [vmem:[#allocation4 + $0x38] sm:$0xf] %v2987
        %2996 = vst [vmem:[#allocation4 + $0x3c] sm:$0xf] 0.0
        %v2997 = vld [vmem:[#allocation4] ss:$16 sm:$0x3]
        %v2998 = vld [vmem:[#allocation4] ss:$16 sm:$0xc]
        %v2999 = vor.u32 %v2997, %v2998
        %s3000 = scalar_lea.vmem [#allocation4], 1
        %v3001 = vld [vmem:[%s3000] ss:$16 sm:$0x3]
        %v3002 = vld [vmem:[%s3000] ss:$16 sm:$0xc]
        %v3003 = vor.u32 %v3001, %v3002
        %v3004 = vmax.f32 %v2999, %v3003
        %v3005 = vpack.c.bf16 %v3004, %v3004
        %v3006 = vld [vmem:[%s5] sm:$0xf]
        %v3007 = vld [vmem:[%s5 + $0x4] sm:$0xf]
        %v3008 = vld [vmem:[%s5 + $0x8] sm:$0xf]
        %v3009 = vld [vmem:[%s5 + $0xc] sm:$0xf]
        %v3010 = vld [vmem:[%s5 + $0x10] sm:$0xf]
        %v3011 = vld [vmem:[%s5 + $0x14] sm:$0xf]
        %v3012 = vld [vmem:[%s5 + $0x18] sm:$0xf]
        %v3013 = vld [vmem:[%s5 + $0x1c] sm:$0xf]
        %v3014 = vld [vmem:[%s5 + $0x20] sm:$0xf]
        %v3015 = vld [vmem:[%s5 + $0x24] sm:$0xf]
        %v3016 = vld [vmem:[%s5 + $0x28] sm:$0xf]
        %v3017 = vld [vmem:[%s5 + $0x2c] sm:$0xf]
        %v3018 = vld [vmem:[%s5 + $0x30] sm:$0xf]
        %v3019 = vld [vmem:[%s5 + $0x34] sm:$0xf]
        %v3020 = vld [vmem:[%s5 + $0x38] sm:$0xf]
        %v3021 = vld [vmem:[%s5 + $0x3c] sm:$0xf]
        %s3022 = scalar_lea.vmem [#allocation4], 2
        %v3023 = vld [vmem:[%s3022] ss:$16 sm:$0x3]
        %v3024 = vld [vmem:[%s3022] ss:$16 sm:$0xc]
        %v3025 = vor.u32 %v3023, %v3024
        %s3026 = scalar_lea.vmem [#allocation4], 3
        %v3027 = vld [vmem:[%s3026] ss:$16 sm:$0x3]
        %v3028 = vld [vmem:[%s3026] ss:$16 sm:$0xc]
        %v3029 = vor.u32 %v3027, %v3028
        %v3030 = vmax.f32 %v3025, %v3029
        %v3031 = vpack.c.bf16 %v3030, %v3030
        %s3032 = scalar_lea.vmem %s5, 64
        %v3033 = vld [vmem:[%s3032] sm:$0xf]
        %v3034 = vld [vmem:[%s3032 + $0x4] sm:$0xf]
        %v3035 = vld [vmem:[%s3032 + $0x8] sm:$0xf]
        %v3036 = vld [vmem:[%s3032 + $0xc] sm:$0xf]
        %v3037 = vld [vmem:[%s3032 + $0x10] sm:$0xf]
        %v3038 = vld [vmem:[%s3032 + $0x14] sm:$0xf]
        %v3039 = vld [vmem:[%s3032 + $0x18] sm:$0xf]
        %v3040 = vld [vmem:[%s3032 + $0x1c] sm:$0xf]
        %v3041 = vld [vmem:[%s3032 + $0x20] sm:$0xf]
        %v3042 = vld [vmem:[%s3032 + $0x24] sm:$0xf]
        %v3043 = vld [vmem:[%s3032 + $0x28] sm:$0xf]
        %v3044 = vld [vmem:[%s3032 + $0x2c] sm:$0xf]
        %v3045 = vld [vmem:[%s3032 + $0x30] sm:$0xf]
        %v3046 = vld [vmem:[%s3032 + $0x34] sm:$0xf]
        %v3047 = vld [vmem:[%s3032 + $0x38] sm:$0xf]
        %v3048 = vld [vmem:[%s3032 + $0x3c] sm:$0xf]
        %v3065 = vunpack.c.l.b16 %v3033
        %v3066 = vunpack.c.l.b16 %v3034
        %v3067 = vunpack.c.l.b16 %v3035
        %v3068 = vunpack.c.l.b16 %v3036
        %v3069 = vunpack.c.l.b16 %v3037
        %v3070 = vunpack.c.l.b16 %v3038
        %v3071 = vunpack.c.l.b16 %v3039
        %v3072 = vunpack.c.l.b16 %v3040
        %v3073 = vunpack.c.l.b16 %v3041
        %v3074 = vunpack.c.l.b16 %v3042
        %v3075 = vunpack.c.l.b16 %v3043
        %v3076 = vunpack.c.l.b16 %v3044
        %v3077 = vunpack.c.l.b16 %v3045
        %v3078 = vunpack.c.l.b16 %v3046
        %v3079 = vunpack.c.l.b16 %v3047
        %v3080 = vunpack.c.l.b16 %v3048
        %v3081 = vpack.c.b16 %v3066, %v3065
        %v3082 = vpack.c.b16 %v3068, %v3067
        %v3083 = vpack.c.b16 %v3070, %v3069
        %v3084 = vpack.c.b16 %v3072, %v3071
        %v3085 = vpack.c.b16 %v3074, %v3073
        %v3086 = vpack.c.b16 %v3076, %v3075
        %v3087 = vpack.c.b16 %v3078, %v3077
        %v3088 = vpack.c.b16 %v3080, %v3079
        %3097 = vmatprep.subr.bf16.mxu0 0
        %3098 = vmatpush1.bf16.msra.mxu0 %v3081
        %3099 = vmatprep.subr.bf16.mxu0 0
        %3100 = vmatpush1.bf16.msra.mxu0 %v3082
        %3101 = vmatprep.subr.bf16.mxu0 0
        %3102 = vmatpush1.bf16.msra.mxu0 %v3083
        %3103 = vmatprep.subr.bf16.mxu0 0
        %3104 = vmatpush1.bf16.msra.mxu0 %v3084
        %3105 = vmatprep.subr.bf16.mxu0 0
        %3106 = vmatpush1.bf16.msra.mxu0 %v3085
        %3107 = vmatprep.subr.bf16.mxu0 0
        %3108 = vmatpush1.bf16.msra.mxu0 %v3086
        %3109 = vmatprep.subr.bf16.mxu0 0
        %3110 = vmatpush1.bf16.msra.mxu0 %v3087
        %3111 = vmatprep.subr.bf16.mxu0 0
        %3112 = vmatpush1.bf16.msra.mxu0 %v3088
        %3113 = vmatprep.subr.bf16.mxu0 0
        %3114 = vmatpush1.bf16.msra.mxu0 0
        %3115 = vmatprep.subr.bf16.mxu0 0
        %3116 = vmatpush1.bf16.msra.mxu0 0
        %3117 = vmatprep.subr.bf16.mxu0 0
        %3118 = vmatpush1.bf16.msra.mxu0 0
        %3119 = vmatprep.subr.bf16.mxu0 0
        %3120 = vmatpush1.bf16.msra.mxu0 0
        %3121 = vmatprep.subr.bf16.mxu0 0
        %3122 = vmatpush1.bf16.msra.mxu0 0
        %3123 = vmatprep.subr.bf16.mxu0 0
        %3124 = vmatpush1.bf16.msra.mxu0 0
        %3125 = vmatprep.subr.bf16.mxu0 0
        %3126 = vmatpush1.bf16.msra.mxu0 0
        %3127 = vmatprep.subr.bf16.mxu0 0
        %3128 = vmatpush1.bf16.msra.mxu0 0
        %3129 = vmatprep.mubr.bf16.mxu0 0
        %3130 = vmatmul.mubr.bf16.gmra.mrb[0].mxu0 %v3031
        %v3131 = vpop.f32.mrb[0].mxu0
        %v3132 = vadd.f32 0.0, %v3131
        %v3133 = vpop.f32.mrb[0].mxu0
        %v3134 = vpop.f32.mrb[0].mxu0
        %v3135 = vpop.f32.mrb[0].mxu0
        %3136 = vdwg.mxu0
        %v3153 = vunpack.c.l.b16 %v3006
        %v3154 = vunpack.c.l.b16 %v3007
        %v3155 = vunpack.c.l.b16 %v3008
        %v3156 = vunpack.c.l.b16 %v3009
        %v3157 = vunpack.c.l.b16 %v3010
        %v3158 = vunpack.c.l.b16 %v3011
        %v3159 = vunpack.c.l.b16 %v3012
        %v3160 = vunpack.c.l.b16 %v3013
        %v3161 = vunpack.c.l.b16 %v3014
        %v3162 = vunpack.c.l.b16 %v3015
        %v3163 = vunpack.c.l.b16 %v3016
        %v3164 = vunpack.c.l.b16 %v3017
        %v3165 = vunpack.c.l.b16 %v3018
        %v3166 = vunpack.c.l.b16 %v3019
        %v3167 = vunpack.c.l.b16 %v3020
        %v3168 = vunpack.c.l.b16 %v3021
        %v3169 = vpack.c.b16 %v3154, %v3153
        %v3170 = vpack.c.b16 %v3156, %v3155
        %v3171 = vpack.c.b16 %v3158, %v3157
        %v3172 = vpack.c.b16 %v3160, %v3159
        %v3173 = vpack.c.b16 %v3162, %v3161
        %v3174 = vpack.c.b16 %v3164, %v3163
        %v3175 = vpack.c.b16 %v3166, %v3165
        %v3176 = vpack.c.b16 %v3168, %v3167
        %3185 = vmatprep.subr.bf16.mxu0 0
        %3186 = vmatpush1.bf16.msra.mxu0 %v3169
        %3187 = vmatprep.subr.bf16.mxu0 0
        %3188 = vmatpush1.bf16.msra.mxu0 %v3170
        %3189 = vmatprep.subr.bf16.mxu0 0
        %3190 = vmatpush1.bf16.msra.mxu0 %v3171
        %3191 = vmatprep.subr.bf16.mxu0 0
        %3192 = vmatpush1.bf16.msra.mxu0 %v3172
        %3193 = vmatprep.subr.bf16.mxu0 0
        %3194 = vmatpush1.bf16.msra.mxu0 %v3173
        %3195 = vmatprep.subr.bf16.mxu0 0
        %3196 = vmatpush1.bf16.msra.mxu0 %v3174
        %3197 = vmatprep.subr.bf16.mxu0 0
        %3198 = vmatpush1.bf16.msra.mxu0 %v3175
        %3199 = vmatprep.subr.bf16.mxu0 0
        %3200 = vmatpush1.bf16.msra.mxu0 %v3176
        %3201 = vmatprep.subr.bf16.mxu0 0
        %3202 = vmatpush1.bf16.msra.mxu0 0
        %3203 = vmatprep.subr.bf16.mxu0 0
        %3204 = vmatpush1.bf16.msra.mxu0 0
        %3205 = vmatprep.subr.bf16.mxu0 0
        %3206 = vmatpush1.bf16.msra.mxu0 0
        %3207 = vmatprep.subr.bf16.mxu0 0
        %3208 = vmatpush1.bf16.msra.mxu0 0
        %3209 = vmatprep.subr.bf16.mxu0 0
        %3210 = vmatpush1.bf16.msra.mxu0 0
        %3211 = vmatprep.subr.bf16.mxu0 0
        %3212 = vmatpush1.bf16.msra.mxu0 0
        %3213 = vmatprep.subr.bf16.mxu0 0
        %3214 = vmatpush1.bf16.msra.mxu0 0
        %3215 = vmatprep.subr.bf16.mxu0 0
        %3216 = vmatpush1.bf16.msra.mxu0 0
        %3217 = vmatprep.mubr.bf16.mxu0 0
        %3218 = vmatmul.mubr.bf16.gmra.mrb[0].mxu0 %v3005
        %v3219 = vpop.f32.mrb[0].mxu0
        %v3220 = vadd.f32 %v3132, %v3219
        %v3221 = vpop.f32.mrb[0].mxu0
        %v3222 = vpop.f32.mrb[0].mxu0
        %v3223 = vpop.f32.mrb[0].mxu0
        %3224 = vdwg.mxu0
        %s3225 = scalar_lea.vmem [#allocation4], 4
        %v3226 = vld [vmem:[%s3225] ss:$16 sm:$0x3]
        %v3227 = vld [vmem:[%s3225] ss:$16 sm:$0xc]
        %v3228 = vor.u32 %v3226, %v3227
        %s3229 = scalar_lea.vmem [#allocation4], 5
        %v3230 = vld [vmem:[%s3229] ss:$16 sm:$0x3]
        %v3231 = vld [vmem:[%s3229] ss:$16 sm:$0xc]
        %v3232 = vor.u32 %v3230, %v3231
        %v3233 = vmax.f32 %v3228, %v3232
        %v3234 = vpack.c.bf16 %v3233, %v3233
        %s3235 = scalar_lea.vmem %s5, 128
        %v3236 = vld [vmem:[%s3235] sm:$0xf]
        %v3237 = vld [vmem:[%s3235 + $0x4] sm:$0xf]
        %v3238 = vld [vmem:[%s3235 + $0x8] sm:$0xf]
        %v3239 = vld [vmem:[%s3235 + $0xc] sm:$0xf]
        %v3240 = vld [vmem:[%s3235 + $0x10] sm:$0xf]
        %v3241 = vld [vmem:[%s3235 + $0x14] sm:$0xf]
        %v3242 = vld [vmem:[%s3235 + $0x18] sm:$0xf]
        %v3243 = vld [vmem:[%s3235 + $0x1c] sm:$0xf]
        %v3244 = vld [vmem:[%s3235 + $0x20] sm:$0xf]
        %v3245 = vld [vmem:[%s3235 + $0x24] sm:$0xf]
        %v3246 = vld [vmem:[%s3235 + $0x28] sm:$0xf]
        %v3247 = vld [vmem:[%s3235 + $0x2c] sm:$0xf]
        %v3248 = vld [vmem:[%s3235 + $0x30] sm:$0xf]
        %v3249 = vld [vmem:[%s3235 + $0x34] sm:$0xf]
        %v3250 = vld [vmem:[%s3235 + $0x38] sm:$0xf]
        %v3251 = vld [vmem:[%s3235 + $0x3c] sm:$0xf]
        %v3268 = vunpack.c.l.b16 %v3236
        %v3269 = vunpack.c.l.b16 %v3237
        %v3270 = vunpack.c.l.b16 %v3238
        %v3271 = vunpack.c.l.b16 %v3239
        %v3272 = vunpack.c.l.b16 %v3240
        %v3273 = vunpack.c.l.b16 %v3241
        %v3274 = vunpack.c.l.b16 %v3242
        %v3275 = vunpack.c.l.b16 %v3243
        %v3276 = vunpack.c.l.b16 %v3244
        %v3277 = vunpack.c.l.b16 %v3245
        %v3278 = vunpack.c.l.b16 %v3246
        %v3279 = vunpack.c.l.b16 %v3247
        %v3280 = vunpack.c.l.b16 %v3248
        %v3281 = vunpack.c.l.b16 %v3249
        %v3282 = vunpack.c.l.b16 %v3250
        %v3283 = vunpack.c.l.b16 %v3251
        %v3284 = vpack.c.b16 %v3269, %v3268
        %v3285 = vpack.c.b16 %v3271, %v3270
        %v3286 = vpack.c.b16 %v3273, %v3272
        %v3287 = vpack.c.b16 %v3275, %v3274
        %v3288 = vpack.c.b16 %v3277, %v3276
        %v3289 = vpack.c.b16 %v3279, %v3278
        %v3290 = vpack.c.b16 %v3281, %v3280
        %v3291 = vpack.c.b16 %v3283, %v3282
        %3300 = vmatprep.subr.bf16.mxu0 0
        %3301 = vmatpush1.bf16.msra.mxu0 %v3284
        %3302 = vmatprep.subr.bf16.mxu0 0
        %3303 = vmatpush1.bf16.msra.mxu0 %v3285
        %3304 = vmatprep.subr.bf16.mxu0 0
        %3305 = vmatpush1.bf16.msra.mxu0 %v3286
        %3306 = vmatprep.subr.bf16.mxu0 0
        %3307 = vmatpush1.bf16.msra.mxu0 %v3287
        %3308 = vmatprep.subr.bf16.mxu0 0
        %3309 = vmatpush1.bf16.msra.mxu0 %v3288
        %3310 = vmatprep.subr.bf16.mxu0 0
        %3311 = vmatpush1.bf16.msra.mxu0 %v3289
        %3312 = vmatprep.subr.bf16.mxu0 0
        %3313 = vmatpush1.bf16.msra.mxu0 %v3290
        %3314 = vmatprep.subr.bf16.mxu0 0
        %3315 = vmatpush1.bf16.msra.mxu0 %v3291
        %3316 = vmatprep.subr.bf16.mxu0 0
        %3317 = vmatpush1.bf16.msra.mxu0 0
        %3318 = vmatprep.subr.bf16.mxu0 0
        %3319 = vmatpush1.bf16.msra.mxu0 0
        %3320 = vmatprep.subr.bf16.mxu0 0
        %3321 = vmatpush1.bf16.msra.mxu0 0
        %3322 = vmatprep.subr.bf16.mxu0 0
        %3323 = vmatpush1.bf16.msra.mxu0 0
        %3324 = vmatprep.subr.bf16.mxu0 0
        %3325 = vmatpush1.bf16.msra.mxu0 0
        %3326 = vmatprep.subr.bf16.mxu0 0
        %3327 = vmatpush1.bf16.msra.mxu0 0
        %3328 = vmatprep.subr.bf16.mxu0 0
        %3329 = vmatpush1.bf16.msra.mxu0 0
        %3330 = vmatprep.subr.bf16.mxu0 0
        %3331 = vmatpush1.bf16.msra.mxu0 0
        %3332 = vmatprep.mubr.bf16.mxu0 0
        %3333 = vmatmul.mubr.bf16.gmra.mrb[0].mxu0 %v3234
        %v3334 = vpop.f32.mrb[0].mxu0
        %v3335 = vadd.f32 0.0, %v3334
        %v3336 = vpop.f32.mrb[0].mxu0
        %v3337 = vpop.f32.mrb[0].mxu0
        %v3338 = vpop.f32.mrb[0].mxu0
        %3339 = vdwg.mxu0
        %v3340 = vadd.f32 %v3220, %v3335
        %s3341 = scalar_lea.vmem [#allocation4], 6
        %v3342 = vld [vmem:[%s3341] ss:$16 sm:$0x3]
        %v3343 = vld [vmem:[%s3341] ss:$16 sm:$0xc]
        %v3344 = vor.u32 %v3342, %v3343
        %s3345 = scalar_lea.vmem [#allocation4], 7
        %v3346 = vld [vmem:[%s3345] ss:$16 sm:$0x3]
        %v3347 = vld [vmem:[%s3345] ss:$16 sm:$0xc]
        %v3348 = vor.u32 %v3346, %v3347
        %v3349 = vmax.f32 %v3344, %v3348
        %v3350 = vpack.c.bf16 %v3349, %v3349
        %s3351 = scalar_lea.vmem %s5, 192
        %v3352 = vld [vmem:[%s3351] sm:$0xf]
        %v3353 = vld [vmem:[%s3351 + $0x4] sm:$0xf]
        %v3354 = vld [vmem:[%s3351 + $0x8] sm:$0xf]
        %v3355 = vld [vmem:[%s3351 + $0xc] sm:$0xf]
        %v3356 = vld [vmem:[%s3351 + $0x10] sm:$0xf]
        %v3357 = vld [vmem:[%s3351 + $0x14] sm:$0xf]
        %v3358 = vld [vmem:[%s3351 + $0x18] sm:$0xf]
        %v3359 = vld [vmem:[%s3351 + $0x1c] sm:$0xf]
        %v3360 = vld [vmem:[%s3351 + $0x20] sm:$0xf]
        %v3361 = vld [vmem:[%s3351 + $0x24] sm:$0xf]
        %v3362 = vld [vmem:[%s3351 + $0x28] sm:$0xf]
        %v3363 = vld [vmem:[%s3351 + $0x2c] sm:$0xf]
        %v3364 = vld [vmem:[%s3351 + $0x30] sm:$0xf]
        %v3365 = vld [vmem:[%s3351 + $0x34] sm:$0xf]
        %v3366 = vld [vmem:[%s3351 + $0x38] sm:$0xf]
        %v3367 = vld [vmem:[%s3351 + $0x3c] sm:$0xf]
        %v3384 = vunpack.c.l.b16 %v3352
        %v3385 = vunpack.c.l.b16 %v3353
        %v3386 = vunpack.c.l.b16 %v3354
        %v3387 = vunpack.c.l.b16 %v3355
        %v3388 = vunpack.c.l.b16 %v3356
        %v3389 = vunpack.c.l.b16 %v3357
        %v3390 = vunpack.c.l.b16 %v3358
        %v3391 = vunpack.c.l.b16 %v3359
        %v3392 = vunpack.c.l.b16 %v3360
        %v3393 = vunpack.c.l.b16 %v3361
        %v3394 = vunpack.c.l.b16 %v3362
        %v3395 = vunpack.c.l.b16 %v3363
        %v3396 = vunpack.c.l.b16 %v3364
        %v3397 = vunpack.c.l.b16 %v3365
        %v3398 = vunpack.c.l.b16 %v3366
        %v3399 = vunpack.c.l.b16 %v3367
        %v3400 = vpack.c.b16 %v3385, %v3384
        %v3401 = vpack.c.b16 %v3387, %v3386
        %v3402 = vpack.c.b16 %v3389, %v3388
        %v3403 = vpack.c.b16 %v3391, %v3390
        %v3404 = vpack.c.b16 %v3393, %v3392
        %v3405 = vpack.c.b16 %v3395, %v3394
        %v3406 = vpack.c.b16 %v3397, %v3396
        %v3407 = vpack.c.b16 %v3399, %v3398
        %3416 = vmatprep.subr.bf16.mxu0 0
        %3417 = vmatpush1.bf16.msra.mxu0 %v3400
        %3418 = vmatprep.subr.bf16.mxu0 0
        %3419 = vmatpush1.bf16.msra.mxu0 %v3401
        %3420 = vmatprep.subr.bf16.mxu0 0
        %3421 = vmatpush1.bf16.msra.mxu0 %v3402
        %3422 = vmatprep.subr.bf16.mxu0 0
        %3423 = vmatpush1.bf16.msra.mxu0 %v3403
        %3424 = vmatprep.subr.bf16.mxu0 0
        %3425 = vmatpush1.bf16.msra.mxu0 %v3404
        %3426 = vmatprep.subr.bf16.mxu0 0
        %3427 = vmatpush1.bf16.msra.mxu0 %v3405
        %3428 = vmatprep.subr.bf16.mxu0 0
        %3429 = vmatpush1.bf16.msra.mxu0 %v3406
        %3430 = vmatprep.subr.bf16.mxu0 0
        %3431 = vmatpush1.bf16.msra.mxu0 %v3407
        %3432 = vmatprep.subr.bf16.mxu0 0
        %3433 = vmatpush1.bf16.msra.mxu0 0
        %3434 = vmatprep.subr.bf16.mxu0 0
        %3435 = vmatpush1.bf16.msra.mxu0 0
        %3436 = vmatprep.subr.bf16.mxu0 0
        %3437 = vmatpush1.bf16.msra.mxu0 0
        %3438 = vmatprep.subr.bf16.mxu0 0
        %3439 = vmatpush1.bf16.msra.mxu0 0
        %3440 = vmatprep.subr.bf16.mxu0 0
        %3441 = vmatpush1.bf16.msra.mxu0 0
        %3442 = vmatprep.subr.bf16.mxu0 0
        %3443 = vmatpush1.bf16.msra.mxu0 0
        %3444 = vmatprep.subr.bf16.mxu0 0
        %3445 = vmatpush1.bf16.msra.mxu0 0
        %3446 = vmatprep.subr.bf16.mxu0 0
        %3447 = vmatpush1.bf16.msra.mxu0 0
        %3448 = vmatprep.mubr.bf16.mxu0 0
        %3449 = vmatmul.mubr.bf16.gmra.mrb[0].mxu0 %v3350
        %v3450 = vpop.f32.mrb[0].mxu0
        %v3451 = vadd.f32 0.0, %v3450
        %v3452 = vpop.f32.mrb[0].mxu0
        %v3453 = vpop.f32.mrb[0].mxu0
        %v3454 = vpop.f32.mrb[0].mxu0
        %3455 = vdwg.mxu0
        %v3456 = vadd.f32 %v3340, %v3451
        %s3457 = scalar_lea.vmem [#allocation4], 8
        %v3458 = vld [vmem:[%s3457] ss:$16 sm:$0x3]
        %v3459 = vld [vmem:[%s3457] ss:$16 sm:$0xc]
        %v3460 = vor.u32 %v3458, %v3459
        %s3461 = scalar_lea.vmem [#allocation4], 9
        %v3462 = vld [vmem:[%s3461] ss:$16 sm:$0x3]
        %v3463 = vld [vmem:[%s3461] ss:$16 sm:$0xc]
        %v3464 = vor.u32 %v3462, %v3463
        %v3465 = vmax.f32 %v3460, %v3464
        %v3466 = vpack.c.bf16 %v3465, %v3465
        %s3467 = scalar_lea.vmem %s5, 256
        %v3468 = vld [vmem:[%s3467] sm:$0xf]
        %v3469 = vld [vmem:[%s3467 + $0x4] sm:$0xf]
        %v3470 = vld [vmem:[%s3467 + $0x8] sm:$0xf]
        %v3471 = vld [vmem:[%s3467 + $0xc] sm:$0xf]
        %v3472 = vld [vmem:[%s3467 + $0x10] sm:$0xf]
        %v3473 = vld [vmem:[%s3467 + $0x14] sm:$0xf]
        %v3474 = vld [vmem:[%s3467 + $0x18] sm:$0xf]
        %v3475 = vld [vmem:[%s3467 + $0x1c] sm:$0xf]
        %v3476 = vld [vmem:[%s3467 + $0x20] sm:$0xf]
        %v3477 = vld [vmem:[%s3467 + $0x24] sm:$0xf]
        %v3478 = vld [vmem:[%s3467 + $0x28] sm:$0xf]
        %v3479 = vld [vmem:[%s3467 + $0x2c] sm:$0xf]
        %v3480 = vld [vmem:[%s3467 + $0x30] sm:$0xf]
        %v3481 = vld [vmem:[%s3467 + $0x34] sm:$0xf]
        %v3482 = vld [vmem:[%s3467 + $0x38] sm:$0xf]
        %v3483 = vld [vmem:[%s3467 + $0x3c] sm:$0xf]
        %v3500 = vunpack.c.l.b16 %v3468
        %v3501 = vunpack.c.l.b16 %v3469
        %v3502 = vunpack.c.l.b16 %v3470
        %v3503 = vunpack.c.l.b16 %v3471
        %v3504 = vunpack.c.l.b16 %v3472
        %v3505 = vunpack.c.l.b16 %v3473
        %v3506 = vunpack.c.l.b16 %v3474
        %v3507 = vunpack.c.l.b16 %v3475
        %v3508 = vunpack.c.l.b16 %v3476
        %v3509 = vunpack.c.l.b16 %v3477
        %v3510 = vunpack.c.l.b16 %v3478
        %v3511 = vunpack.c.l.b16 %v3479
        %v3512 = vunpack.c.l.b16 %v3480
        %v3513 = vunpack.c.l.b16 %v3481
        %v3514 = vunpack.c.l.b16 %v3482
        %v3515 = vunpack.c.l.b16 %v3483
        %v3516 = vpack.c.b16 %v3501, %v3500
        %v3517 = vpack.c.b16 %v3503, %v3502
        %v3518 = vpack.c.b16 %v3505, %v3504
        %v3519 = vpack.c.b16 %v3507, %v3506
        %v3520 = vpack.c.b16 %v3509, %v3508
        %v3521 = vpack.c.b16 %v3511, %v3510
        %v3522 = vpack.c.b16 %v3513, %v3512
        %v3523 = vpack.c.b16 %v3515, %v3514
        %3532 = vmatprep.subr.bf16.mxu0 0
        %3533 = vmatpush1.bf16.msra.mxu0 %v3516
        %3534 = vmatprep.subr.bf16.mxu0 0
        %3535 = vmatpush1.bf16.msra.mxu0 %v3517
        %3536 = vmatprep.subr.bf16.mxu0 0
        %3537 = vmatpush1.bf16.msra.mxu0 %v3518
        %3538 = vmatprep.subr.bf16.mxu0 0
        %3539 = vmatpush1.bf16.msra.mxu0 %v3519
        %3540 = vmatprep.subr.bf16.mxu0 0
        %3541 = vmatpush1.bf16.msra.mxu0 %v3520
        %3542 = vmatprep.subr.bf16.mxu0 0
        %3543 = vmatpush1.bf16.msra.mxu0 %v3521
        %3544 = vmatprep.subr.bf16.mxu0 0
        %3545 = vmatpush1.bf16.msra.mxu0 %v3522
        %3546 = vmatprep.subr.bf16.mxu0 0
        %3547 = vmatpush1.bf16.msra.mxu0 %v3523
        %3548 = vmatprep.subr.bf16.mxu0 0
        %3549 = vmatpush1.bf16.msra.mxu0 0
        %3550 = vmatprep.subr.bf16.mxu0 0
        %3551 = vmatpush1.bf16.msra.mxu0 0
        %3552 = vmatprep.subr.bf16.mxu0 0
        %3553 = vmatpush1.bf16.msra.mxu0 0
        %3554 = vmatprep.subr.bf16.mxu0 0
        %3555 = vmatpush1.bf16.msra.mxu0 0
        %3556 = vmatprep.subr.bf16.mxu0 0
        %3557 = vmatpush1.bf16.msra.mxu0 0
        %3558 = vmatprep.subr.bf16.mxu0 0
        %3559 = vmatpush1.bf16.msra.mxu0 0
        %3560 = vmatprep.subr.bf16.mxu0 0
        %3561 = vmatpush1.bf16.msra.mxu0 0
        %3562 = vmatprep.subr.bf16.mxu0 0
        %3563 = vmatpush1.bf16.msra.mxu0 0
        %3564 = vmatprep.mubr.bf16.mxu0 0
        %3565 = vmatmul.mubr.bf16.gmra.mrb[0].mxu0 %v3466
        %v3566 = vpop.f32.mrb[0].mxu0
        %v3567 = vadd.f32 0.0, %v3566
        %v3568 = vpop.f32.mrb[0].mxu0
        %v3569 = vpop.f32.mrb[0].mxu0
        %v3570 = vpop.f32.mrb[0].mxu0
        %3571 = vdwg.mxu0
        %v3572 = vadd.f32 %v3456, %v3567
        %v3573 = vld [vmem:[%s6] sm:$0x1]
        %v3575 = vlaneseq
        %v3576 = vshrl.u32 %v3575, 7
        %v3577 = vsub.s32 0, %v3576
        %v3578 = vrot.slane %v3573, %v3577
        %v3580 = vadd.f32 %v3572, %v3578
        %v3581 = vmax.f32 %v3580, 0.0
        %v3582 = vpack.c.bf16 %v3581, %v3581
        %v3583 = vld [vmem:[%s7] sm:$0xf]
        %v3584 = vld [vmem:[%s7 + $0x4] sm:$0xf]
        %v3585 = vld [vmem:[%s7 + $0x8] sm:$0xf]
        %v3586 = vld [vmem:[%s7 + $0xc] sm:$0xf]
        %v3587 = vld [vmem:[%s7 + $0x10] sm:$0xf]
        %v3588 = vld [vmem:[%s7 + $0x14] sm:$0xf]
        %v3589 = vld [vmem:[%s7 + $0x18] sm:$0xf]
        %v3590 = vld [vmem:[%s7 + $0x1c] sm:$0xf]
        %v3591 = vld [vmem:[%s7 + $0x20] sm:$0xf]
        %v3592 = vld [vmem:[%s7 + $0x24] sm:$0xf]
        %v3593 = vld [vmem:[%s7 + $0x28] sm:$0xf]
        %v3594 = vld [vmem:[%s7 + $0x2c] sm:$0xf]
        %v3595 = vld [vmem:[%s7 + $0x30] sm:$0xf]
        %v3596 = vld [vmem:[%s7 + $0x34] sm:$0xf]
        %v3597 = vld [vmem:[%s7 + $0x38] sm:$0xf]
        %v3598 = vld [vmem:[%s8] sm:$0x1]
        %v3600 = vlaneseq
        %v3601 = vshrl.u32 %v3600, 7
        %v3602 = vsub.s32 0, %v3601
        %v3603 = vrot.slane %v3598, %v3602
        %v3620 = vunpack.c.l.b16 %v3583
        %v3621 = vunpack.c.l.b16 %v3584
        %v3622 = vunpack.c.l.b16 %v3585
        %v3623 = vunpack.c.l.b16 %v3586
        %v3624 = vunpack.c.l.b16 %v3587
        %v3625 = vunpack.c.l.b16 %v3588
        %v3626 = vunpack.c.l.b16 %v3589
        %v3627 = vunpack.c.l.b16 %v3590
        %v3628 = vunpack.c.l.b16 %v3591
        %v3629 = vunpack.c.l.b16 %v3592
        %v3630 = vunpack.c.l.b16 %v3593
        %v3631 = vunpack.c.l.b16 %v3594
        %v3632 = vunpack.c.l.b16 %v3595
        %v3633 = vunpack.c.l.b16 %v3596
        %v3634 = vunpack.c.l.b16 %v3597
        %v3635 = vpack.c.b16 %v3621, %v3620
        %v3636 = vpack.c.b16 %v3623, %v3622
        %v3637 = vpack.c.b16 %v3625, %v3624
        %v3638 = vpack.c.b16 %v3627, %v3626
        %v3639 = vpack.c.b16 %v3629, %v3628
        %v3640 = vpack.c.b16 %v3631, %v3630
        %v3641 = vpack.c.b16 %v3633, %v3632
        %v3642 = vpack.c.b16 %v3634, %v3634
        %vm3650 = vcmask 982016
        %v3652 = vsel %vm3650, %v3582, 0
        %vm3654 = vcmask 1043456
        %v3656 = vsel %vm3654, %v3642, 0
        %3658 = vmatprep.subr.bf16.mxu0 0
        %3659 = vmatpush1.bf16.msra.mxu0 %v3635
        %3660 = vmatprep.subr.bf16.mxu0 0
        %3661 = vmatpush1.bf16.msra.mxu0 %v3636
        %3662 = vmatprep.subr.bf16.mxu0 0
        %3663 = vmatpush1.bf16.msra.mxu0 %v3637
        %3664 = vmatprep.subr.bf16.mxu0 0
        %3665 = vmatpush1.bf16.msra.mxu0 %v3638
        %3666 = vmatprep.subr.bf16.mxu0 0
        %3667 = vmatpush1.bf16.msra.mxu0 %v3639
        %3668 = vmatprep.subr.bf16.mxu0 0
        %3669 = vmatpush1.bf16.msra.mxu0 %v3640
        %3670 = vmatprep.subr.bf16.mxu0 0
        %3671 = vmatpush1.bf16.msra.mxu0 %v3641
        %3672 = vmatprep.subr.bf16.mxu0 0
        %3673 = vmatpush1.bf16.msra.mxu0 %v3656
        %3674 = vmatprep.subr.bf16.mxu0 0
        %3675 = vmatpush1.bf16.msra.mxu0 0
        %3676 = vmatprep.subr.bf16.mxu0 0
        %3677 = vmatpush1.bf16.msra.mxu0 0
        %3678 = vmatprep.subr.bf16.mxu0 0
        %3679 = vmatpush1.bf16.msra.mxu0 0
        %3680 = vmatprep.subr.bf16.mxu0 0
        %3681 = vmatpush1.bf16.msra.mxu0 0
        %3682 = vmatprep.subr.bf16.mxu0 0
        %3683 = vmatpush1.bf16.msra.mxu0 0
        %3684 = vmatprep.subr.bf16.mxu0 0
        %3685 = vmatpush1.bf16.msra.mxu0 0
        %3686 = vmatprep.subr.bf16.mxu0 0
        %3687 = vmatpush1.bf16.msra.mxu0 0
        %3688 = vmatprep.subr.bf16.mxu0 0
        %3689 = vmatpush1.bf16.msra.mxu0 0
        %3690 = vmatprep.mubr.bf16.mxu0 0
        %3691 = vmatmul.mubr.bf16.gmra.mrb[0].mxu0 %v3652
        %v3692 = vpop.f32.mrb[0].mxu0
        %v3693 = vadd.f32 %v3603, %v3692
        %v3694 = vpop.f32.mrb[0].mxu0
        %v3695 = vpop.f32.mrb[0].mxu0
        %v3696 = vpop.f32.mrb[0].mxu0
        %3697 = vdwg.mxu0
        %v3698 = vmax.f32 %v3693, 0.0
        %v3699 = vpack.c.bf16 %v3698, %v3698
        %v3700 = vld [vmem:[%s9] sm:$0xf]
        %v3701 = vld [vmem:[%s9 + $0x4] sm:$0xf]
        %v3702 = vld [vmem:[%s9 + $0x8] sm:$0xf]
        %v3703 = vld [vmem:[%s9 + $0xc] sm:$0xf]
        %v3704 = vld [vmem:[%s9 + $0x10] sm:$0xf]
        %v3705 = vld [vmem:[%s9 + $0x14] sm:$0xf]
        %v3706 = vld [vmem:[%s9 + $0x18] sm:$0xf]
        %v3707 = vld [vmem:[%s9 + $0x1c] sm:$0xf]
        %v3708 = vld [vmem:[%s9 + $0x20] sm:$0xf]
        %v3709 = vld [vmem:[%s9 + $0x24] sm:$0xf]
        %v3710 = vld [vmem:[%s9 + $0x28] sm:$0x3]
        %v3711 = vld [vmem:[%s10] sm:$0x1]
        %v3713 = vlaneseq
        %v3714 = vshrl.u32 %v3713, 7
        %v3715 = vsub.s32 0, %v3714
        %v3716 = vrot.slane %v3711, %v3715
        %v3729 = vunpack.c.l.b16 %v3700
        %v3730 = vunpack.c.l.b16 %v3701
        %v3731 = vunpack.c.l.b16 %v3702
        %v3732 = vunpack.c.l.b16 %v3703
        %v3733 = vunpack.c.l.b16 %v3704
        %v3734 = vunpack.c.l.b16 %v3705
        %v3735 = vunpack.c.l.b16 %v3706
        %v3736 = vunpack.c.l.b16 %v3707
        %v3737 = vunpack.c.l.b16 %v3708
        %v3738 = vunpack.c.l.b16 %v3709
        %v3739 = vunpack.c.l.b16 %v3710
        %v3740 = vpack.c.b16 %v3730, %v3729
        %v3741 = vpack.c.b16 %v3732, %v3731
        %v3742 = vpack.c.b16 %v3734, %v3733
        %v3743 = vpack.c.b16 %v3736, %v3735
        %v3744 = vpack.c.b16 %v3738, %v3737
        %v3745 = vpack.c.b16 %v3739, %v3739
        %vm3751 = vcmask 687104
        %v3753 = vsel %vm3751, %v3699, 0
        %vm3755 = vcmask 1041408
        %v3757 = vsel %vm3755, %v3745, 0
        %3759 = vmatprep.subr.bf16.mxu0 0
        %3760 = vmatpush1.bf16.msra.mxu0 %v3740
        %3761 = vmatprep.subr.bf16.mxu0 0
        %3762 = vmatpush1.bf16.msra.mxu0 %v3741
        %3763 = vmatprep.subr.bf16.mxu0 0
        %3764 = vmatpush1.bf16.msra.mxu0 %v3742
        %3765 = vmatprep.subr.bf16.mxu0 0
        %3766 = vmatpush1.bf16.msra.mxu0 %v3743
        %3767 = vmatprep.subr.bf16.mxu0 0
        %3768 = vmatpush1.bf16.msra.mxu0 %v3744
        %3769 = vmatprep.subr.bf16.mxu0 0
        %3770 = vmatpush1.bf16.msra.mxu0 %v3757
        %3771 = vmatprep.subr.bf16.mxu0 0
        %3772 = vmatpush1.bf16.msra.mxu0 0
        %3773 = vmatprep.subr.bf16.mxu0 0
        %3774 = vmatpush1.bf16.msra.mxu0 0
        %3775 = vmatprep.subr.bf16.mxu0 0
        %3776 = vmatpush1.bf16.msra.mxu0 0
        %3777 = vmatprep.subr.bf16.mxu0 0
        %3778 = vmatpush1.bf16.msra.mxu0 0
        %3779 = vmatprep.subr.bf16.mxu0 0
        %3780 = vmatpush1.bf16.msra.mxu0 0
        %3781 = vmatprep.subr.bf16.mxu0 0
        %3782 = vmatpush1.bf16.msra.mxu0 0
        %3783 = vmatprep.subr.bf16.mxu0 0
        %3784 = vmatpush1.bf16.msra.mxu0 0
        %3785 = vmatprep.subr.bf16.mxu0 0
        %3786 = vmatpush1.bf16.msra.mxu0 0
        %3787 = vmatprep.subr.bf16.mxu0 0
        %3788 = vmatpush1.bf16.msra.mxu0 0
        %3789 = vmatprep.subr.bf16.mxu0 0
        %3790 = vmatpush1.bf16.msra.mxu0 0
        %3791 = vmatprep.mubr.bf16.mxu0 0
        %3792 = vmatmul.mubr.bf16.gmra.mrb[0].mxu0 %v3753
        %v3793 = vpop.f32.mrb[0].mxu0
        %v3794 = vadd.f32 %v3716, %v3793
        %v3795 = vpop.f32.mrb[0].mxu0
        %v3796 = vpop.f32.mrb[0].mxu0
        %v3797 = vpop.f32.mrb[0].mxu0
        %3798 = vdwg.mxu0
        %3799 = vst [vmem:[%s380] sm:$0xf] %v3794
        %s3800 = sand.u32 %s269, 1
        %s3801 = scalar_lea.sflag [#allocation6], %s3800
        %s3802 = sand.u32 %s269, 1
        %s3803 = smul.addr %s3802, 4
        %s3804 = scalar_lea.vmem [#allocation5], %s3803
        // Predicated region
        $region65: #{net_forward.1} parent=63 // pred_check
          %p3805 = pneg %p279
        $region66: #{net_forward.1} parent=63 // pred_check_branch
          %3807 = sbr.rel (%p3805) target = $region68
        $region67: #{net_forward.1} parent=63 // pred_region
          %s3809 = ssub.s32 64, 64
          %3810 = vsyncadd %s3801, %s3809
          %s3811 = smul.addr %s25, 64
          %s3812 = scalar_lea.hbm %s11, %s3811
          %s3814 = sshll.u32 %s3804, 4
          %s3815 = int_to_ptr.vmem [resolvable:$true] %s3814
          %3817 = dma.vmem_to_hbm [thread:$0]  %s3815, 64, %s3812, %s3801
        $region68: #{net_forward.1} parent=63 // pred_fallthru
          _
      $region64: #{net_forward.1} parent=5 // pred_fallthru
        _
      %p3818 = scmp.le.s32.totalorder 2, %s20
      // Predicated region
      $region69: #{net_forward.1} parent=5 // pred_check
        %p3819 = pneg %p3818
      $region70: #{net_forward.1} parent=5 // pred_check_branch
        %3821 = sbr.rel (%p3819) target = $region72
      $region71: #{net_forward.1} parent=5 // pred_region
        %s3822 = ssub.s32 %s20, 2
        // Predicated region
        $region73: #{net_forward.1} parent=71 // pred_check
          %p3823 = pneg %p285
        $region74: #{net_forward.1} parent=71 // pred_check_branch
          %3825 = sbr.rel (%p3823) target = $region76
        $region75: #{net_forward.1} parent=71 // pred_region
          %s3826 = sand.u32 %s270, 1
          %s3827 = scalar_lea.sflag [#allocation6], %s3826
          %s3828 = sand.u32 %s270, 1
          %s3829 = smul.addr %s3828, 4
          %s3830 = scalar_lea.vmem [#allocation5], %s3829
          %3831 = dma.done %s3827, 64
        $region76: #{net_forward.1} parent=71 // pred_fallthru
          _
      $region72: #{net_forward.1} parent=5 // pred_fallthru
        _
    $region6: #{net_forward.1} parent=1 // loop_footer
      %s24 = sadd.s32 1, %s20
    $region7: #{net_forward.1} parent=1 // loop_footer_branch
      %19 = sbr.rel target = $region3
    $region8: #{net_forward.1} parent=1 // loop_exit
      _
    %3832 = vsyncpa [#allocation6], 1
    %s3833 = scalar_lea.sflag [#allocation6], 1
    %3834 = vsyncpa %s3833, 1

</llo_original>
